<compile_context>
chip_gen: v7x
topology: tpu7x:2x2x1
jax: 0.10.0
libtpu: 0.0.40
codegen_flags: <defaults>
</compile_context>

<pallas_src>
import math
import functools

import jax
import jax.numpy as jnp
from jax.experimental import pallas as pl
from jax.experimental.pallas import tpu as pltpu


# ---------------------------------------------------------------------------
# Fused (fwd+bwd) LSTM recurrence: only the recurrent matmul lives in the loop.
# ---------------------------------------------------------------------------
def _fused_recurrence(a_scr, b_scr, whh, y_scr, *, T, B, H):
    """One fused forward+backward LSTM recurrence.

    Per-step gate preactivation:
        gates[s] = a_scr[s] + b_scr[T-1-s] + h @ whh
    a_scr[(T,B,8H)] holds the forward-direction input projection (+ full bias) at its own
    time index; b_scr holds the backward-direction projection at its own time index, so
    indexing b_scr at T-1-s pairs fwd time s with bwd time T-1-s with zero in-loop scatter.
    whh is (2H, 8H), block-diagonal over the packed hidden [h_f | h_b].
    y_scr (optional, (T,B,2H)) receives the packed hidden per step (leading-axis store).
    Returns the final packed hidden (B, 2H) = [h_fwd_final | h_bwd_final].
    """
    H2 = 2 * H
    h = jnp.zeros((B, H2), jnp.float32)
    c = jnp.zeros((B, H2), jnp.float32)
    # T is small (8): static unroll.  TODO(synk): switch to lax.fori_loop(..., unroll=True)
    # if H or the batch tile grows enough that the unrolled live ranges spill.
    for s in range(T):
        gates = a_scr[s] + b_scr[T - 1 - s] + jnp.dot(
            h, whh, preferred_element_type=jnp.float32)            # (B, 8H)
        sg = jax.nn.sigmoid(gates)            # one full-width sigmoid; g cols pre-scaled by 2
        i = sg[:, 0 * H2:1 * H2]
        f = sg[:, 1 * H2:2 * H2]
        g = 2.0 * sg[:, 2 * H2:3 * H2] - 1.0                        # tanh(x) = 2*sigmoid(2x)-1
        o = sg[:, 3 * H2:4 * H2]
        c = f * c + i * g
        h = o * jnp.tanh(c)
        if y_scr is not None:
            y_scr[s] = h                                            # leading-axis full-block store
    return h


# ---------------------------------------------------------------------------
# Pallas kernel: full forward pass (2 fused bi-layers + fc + softmax)
# ---------------------------------------------------------------------------
def bilstm_kernel(x_ref,
                  w0f_ref, w0b_ref, whh0_ref, b0_ref,    # layer 0 (fused fwd+bwd, packed)
                  w1a_ref, w1b_ref, whh1_ref, b1_ref,    # layer 1 (fused fwd+bwd, packed)
                  wfc_ref, bfc_ref,
                  out_ref,
                  a_scr, b_scr, y0_scr,
                  *, T, B, H):
    H2, G = 2 * H, 8 * H
    K = x_ref.shape[-1]

    # ---- layer 0: hoisted input projections (all T steps, both directions).
    x = x_ref[...].reshape(T * B, K)                                # (T*B, K), x shipped once
    a_scr[...] = (jnp.dot(x, w0f_ref[...], preferred_element_type=jnp.float32)
                  + b0_ref[...]).reshape(T, B, G)
    b_scr[...] = jnp.dot(x, w0b_ref[...],
                         preferred_element_type=jnp.float32).reshape(T, B, G)

    _fused_recurrence(a_scr, b_scr, whh0_ref[...], y0_scr, T=T, B=B, H=H)

    # ---- layer 1: hoisted projections over the layer-0 output slab.
    # Full-coverage invariant: y0_scr[0..T-1] are all written by the layer-0 loop above
    # (uninitialized VMEM scratch must be fully overwritten before this read).
    y0 = y0_scr[...].reshape(T * B, H2)
    a_scr[...] = (jnp.dot(y0, w1a_ref[...], preferred_element_type=jnp.float32)
                  + b1_ref[...]).reshape(T, B, G)
    b_scr[...] = jnp.dot(y0, w1b_ref[...],
                         preferred_element_type=jnp.float32).reshape(T, B, G)

    h_final = _fused_recurrence(a_scr, b_scr, whh1_ref[...], None, T=T, B=B, H=H)

    # ---- fc + softmax on 128-lane-padded classes (padded logits are -1e30 -> exp == 0);
    # unmasked full-vreg store, wrapper slices [:, :2].
    logits = jnp.dot(h_final, wfc_ref[...],
                     preferred_element_type=jnp.float32) + bfc_ref[...]
    m = jnp.max(logits, axis=1, keepdims=True)
    e = jnp.exp(logits - m)
    se = jnp.sum(e, axis=1, keepdims=True)
    out_ref[...] = e * pl.reciprocal(se, approx=False)


# ---------------------------------------------------------------------------
# Glue (plain JAX): reshape_data, raw params (PyTorch layout), packing, wrapper
# ---------------------------------------------------------------------------
def reshape_data(x, k):
    B, n = x.shape
    pad = (-n) % k
    xp = jnp.pad(x, ((0, 0), (0, pad)))
    return xp.reshape(B, xp.shape[1] // k, k)


def init_raw_params(key, *, k, hidden_size, num_layers=2):
    """Raw parameters in PyTorch nn.LSTM / nn.Linear layout (deterministic)."""
    assert num_layers == 2, "kernel is specialized to num_layers=2 (module default)"
    H = hidden_size
    std = 1.0 / math.sqrt(H)
    raw = {}
    for layer in range(num_layers):
        in_size = k if layer == 0 else 2 * H
        for suffix in ("", "_reverse"):
            key, k1, k2, k3, k4 = jax.random.split(key, 5)
            raw[f"w_ih_l{layer}{suffix}"] = jax.random.uniform(
                k1, (4 * H, in_size), jnp.float32, -std, std)
            raw[f"w_hh_l{layer}{suffix}"] = jax.random.uniform(
                k2, (4 * H, H), jnp.float32, -std, std)
            raw[f"b_ih_l{layer}{suffix}"] = jax.random.uniform(
                k3, (4 * H,), jnp.float32, -std, std)
            raw[f"b_hh_l{layer}{suffix}"] = jax.random.uniform(
                k4, (4 * H,), jnp.float32, -std, std)
    key, k1, k2 = jax.random.split(key, 3)
    std_fc = 1.0 / math.sqrt(2 * H)
    raw["fc_w"] = jax.random.uniform(k1, (2, 2 * H), jnp.float32, -std_fc, std_fc)
    raw["fc_b"] = jax.random.uniform(k2, (2,), jnp.float32, -std_fc, std_fc)
    return raw


def pack_params(raw, *, k, hidden_size, n_cls=2, lanes=128):
    """Pack PyTorch-layout params into the fused kernel layout.

    Gate columns are gate-major across directions: [i_f i_b | f_f f_b | g_f g_b | o_f o_b].
    The g-gate columns (weights AND bias) are pre-scaled by 2 so the kernel uses
    tanh(x) = 2*sigmoid(2x) - 1 with a single full-width sigmoid.
    """
    H = hidden_size
    K = k
    H2, H8 = 2 * H, 8 * H
    scale = (1.0, 1.0, 2.0, 1.0)   # i, f, g(x2), o

    def scatter_w(dst, w_t, row0, half):
        """Scatter w_t (n_in, 4H) into gate-major columns of `half` at rows [row0, row0+n_in)."""
        n_in = w_t.shape[0]
        for g in range(4):
            c0 = g * H2 + half * H
            dst = dst.at[row0:row0 + n_in, c0:c0 + H].set(scale[g] * w_t[:, g * H:(g + 1) * H])
        return dst

    def scatter_b(dst, b, half):
        for g in range(4):
            c0 = g * H2 + half * H
            dst = dst.at[0, c0:c0 + H].set(scale[g] * b[g * H:(g + 1) * H])
        return dst

    # ----- layer 0: split input weights into forward / backward halves (x shipped once).
    w0f = scatter_w(jnp.zeros((K, H8), jnp.float32), raw["w_ih_l0"].T, 0, 0)
    w0b = scatter_w(jnp.zeros((K, H8), jnp.float32), raw["w_ih_l0_reverse"].T, 0, 1)
    whh0 = jnp.zeros((H2, H8), jnp.float32)
    whh0 = scatter_w(whh0, raw["w_hh_l0"].T, 0, 0)
    whh0 = scatter_w(whh0, raw["w_hh_l0_reverse"].T, H, 1)
    b0 = jnp.zeros((1, H8), jnp.float32)
    b0 = scatter_b(b0, raw["b_ih_l0"] + raw["b_hh_l0"], 0)
    b0 = scatter_b(b0, raw["b_ih_l0_reverse"] + raw["b_hh_l0_reverse"], 1)

    # ----- layer 1: A-half multiplies y0[s] = [yf0[s] | yb0[T-1-s]],
    #               B-half multiplies y0[T-1-s] = [yf0[T-1-s] | yb0[s]].
    w1a = jnp.zeros((H2, H8), jnp.float32)
    w1a = scatter_w(w1a, raw["w_ih_l1"][:, 0:H].T, 0, 0)             # yf0[s]     -> fwd gates
    w1a = scatter_w(w1a, raw["w_ih_l1_reverse"][:, H:H2].T, H, 1)    # yb0[T-1-s] -> bwd gates
    w1b = jnp.zeros((H2, H8), jnp.float32)
    w1b = scatter_w(w1b, raw["w_ih_l1_reverse"][:, 0:H].T, 0, 1)     # yf0[T-1-s] -> bwd gates
    w1b = scatter_w(w1b, raw["w_ih_l1"][:, H:H2].T, H, 0)            # yb0[s]     -> fwd gates
    whh1 = jnp.zeros((H2, H8), jnp.float32)
    whh1 = scatter_w(whh1, raw["w_hh_l1"].T, 0, 0)
    whh1 = scatter_w(whh1, raw["w_hh_l1_reverse"].T, H, 1)
    b1 = jnp.zeros((1, H8), jnp.float32)
    b1 = scatter_b(b1, raw["b_ih_l1"] + raw["b_hh_l1"], 0)
    b1 = scatter_b(b1, raw["b_ih_l1_reverse"] + raw["b_hh_l1_reverse"], 1)

    # ----- fc: kernel hidden is [hf1 | hb1]; PyTorch feat is [hb1 | hf1] -> permute rows.
    # Pad to 128 output lanes; padded bias = -1e30 so padded logits vanish under softmax.
    fc_w = raw["fc_w"]                                               # (2, 2H)
    wfc2 = jnp.concatenate([fc_w[:, H:H2].T, fc_w[:, 0:H].T], axis=0)  # (2H, 2)
    wfc = jnp.zeros((H2, lanes), jnp.float32).at[:, :n_cls].set(wfc2)
    bfc = jnp.full((1, lanes), -1e30, jnp.float32).at[0, :n_cls].set(raw["fc_b"])

    return [w0f, w0b, whh0, b0, w1a, w1b, whh1, b1, wfc, bfc]


def bilstm_net_forward(x, packed, *, k, hidden_size):
    x3 = reshape_data(x.astype(jnp.float32), k)                      # (B, T, K)
    B, T, K = x3.shape
    H = hidden_size
    B_pad = ((B + 7) // 8) * 8                                       # full f32 sublane tiles
    x3p = jnp.pad(x3, ((0, B_pad - B), (0, 0), (0, 0)))
    x_tbk = jnp.transpose(x3p, (1, 0, 2))                            # (T, B_pad, K), time-major

    kernel = functools.partial(bilstm_kernel, T=T, B=B_pad, H=H)
    n_in = 1 + len(packed)
    # TODO(synk): for production batch sizes add a batch-tile grid
    #   (grid=(cdiv(B_pad, TB),), dimension_semantics=("parallel",), weight index_maps -> 0)
    #   to engage v7x's second TensorCore and bound VMEM against its 64 MiB.
    out = pl.pallas_call(
        kernel,
        out_shape=jax.ShapeDtypeStruct((B_pad, 128), jnp.float32),
        in_specs=[pl.BlockSpec(memory_space=pltpu.MemorySpace.VMEM)] * n_in,
        out_specs=pl.BlockSpec(memory_space=pltpu.MemorySpace.VMEM),
        scratch_shapes=[
            pltpu.VMEM((T, B_pad, 8 * H), jnp.float32),   # fwd-direction projections (+bias)
            pltpu.VMEM((T, B_pad, 8 * H), jnp.float32),   # bwd-direction projections
            pltpu.VMEM((T, B_pad, 2 * H), jnp.float32),   # layer-0 packed hiddens
        ],
    )(x_tbk, *packed)
    return out[:B, :2]


# ---------------------------------------------------------------------------
# Pure-JAX reference (standard LSTM math on the RAW PyTorch-layout parameters)
# ---------------------------------------------------------------------------
def _ref_cell(xt, h, c, w_ih, w_hh, b_ih, b_hh, H):
    gates = xt @ w_ih.T + h @ w_hh.T + b_ih + b_hh
    i = jax.nn.sigmoid(gates[:, 0 * H:1 * H])
    f = jax.nn.sigmoid(gates[:, 1 * H:2 * H])
    g = jnp.tanh(gates[:, 2 * H:3 * H])
    o = jax.nn.sigmoid(gates[:, 3 * H:4 * H])
    c_new = f * c + i * g
    return o * jnp.tanh(c_new), c_new


def _ref_direction(xs, w_ih, w_hh, b_ih, b_hh, H, B, reverse):
    h = jnp.zeros((B, H), jnp.float32)
    c = jnp.zeros((B, H), jnp.float32)
    T = len(xs)
    outs = [None] * T
    order = range(T - 1, -1, -1) if reverse else range(T)
    for t in order:
        h, c = _ref_cell(xs[t], h, c, w_ih, w_hh, b_ih, b_hh, H)
        outs[t] = h
    return outs, h


def reference_forward(x, raw, *, k, hidden_size):
    x3 = reshape_data(x.astype(jnp.float32), k)
    B, T, _K = x3.shape
    H = hidden_size
    xs0 = [x3[:, t, :] for t in range(T)]
    yf0, _ = _ref_direction(xs0, raw["w_ih_l0"], raw["w_hh_l0"],
                            raw["b_ih_l0"], raw["b_hh_l0"], H, B, False)
    yb0, _ = _ref_direction(xs0, raw["w_ih_l0_reverse"], raw["w_hh_l0_reverse"],
                            raw["b_ih_l0_reverse"], raw["b_hh_l0_reverse"], H, B, True)
    xs1 = [jnp.concatenate([yf0[t], yb0[t]], axis=-1) for t in range(T)]
    _, hf1 = _ref_direction(xs1, raw["w_ih_l1"], raw["w_hh_l1"],
                            raw["b_ih_l1"], raw["b_hh_l1"], H, B, False)
    _, hb1 = _ref_direction(xs1, raw["w_ih_l1_reverse"], raw["w_hh_l1_reverse"],
                            raw["b_ih_l1_reverse"], raw["b_hh_l1_reverse"], H, B, True)
    feat = jnp.concatenate([hb1, hf1], axis=-1)
    logits = feat @ raw["fc_w"].T + raw["fc_b"]
    return jax.nn.softmax(logits, axis=1)


if __name__ == "__main__":
    B, total_size, k, hidden_size = 2, 120, 16, 32    # pads 120 -> 128, so T = 8
    key = jax.random.PRNGKey(0)
    kx, kp = jax.random.split(key)
    x = jax.random.normal(kx, (B, total_size), jnp.float32)

    raw = init_raw_params(kp, k=k, hidden_size=hidden_size, num_layers=2)
    packed = pack_params(raw, k=k, hidden_size=hidden_size)

    out = bilstm_net_forward(x, packed, k=k, hidden_size=hidden_size)
    out = jax.block_until_ready(out)

    ref = reference_forward(x, raw, k=k, hidden_size=hidden_size)
    assert out.shape == (B, 2)
    assert bool(jnp.allclose(out, ref, atol=5e-5, rtol=5e-5)), (out, ref)
    print("KERNEL_OK")
</pallas_src>

<mosaic_0001>
module attributes {stable_mosaic.version = 11 : i64} {
  func.func @bilstm_kernel(%arg0: memref<8x8x16xf32, #tpu.memory_space<vmem>>, %arg1: memref<16x256xf32, #tpu.memory_space<vmem>>, %arg2: memref<16x256xf32, #tpu.memory_space<vmem>>, %arg3: memref<64x256xf32, #tpu.memory_space<vmem>>, %arg4: memref<1x256xf32, #tpu.memory_space<vmem>>, %arg5: memref<64x256xf32, #tpu.memory_space<vmem>>, %arg6: memref<64x256xf32, #tpu.memory_space<vmem>>, %arg7: memref<64x256xf32, #tpu.memory_space<vmem>>, %arg8: memref<1x256xf32, #tpu.memory_space<vmem>>, %arg9: memref<64x128xf32, #tpu.memory_space<vmem>>, %arg10: memref<1x128xf32, #tpu.memory_space<vmem>>, %arg11: memref<8x128xf32, #tpu.memory_space<vmem>>, %arg12: memref<8x8x256xf32, #tpu.memory_space<vmem>>, %arg13: memref<8x8x256xf32, #tpu.memory_space<vmem>>, %arg14: memref<8x8x64xf32, #tpu.memory_space<vmem>>) attributes {dimension_semantics = [], scalar_prefetch = 0 : i64, scratch_operands = 3 : i64, tpu.core_type = #tpu.core_type<tc>} {
    %c0 = arith.constant 0 : index
    %c0_0 = arith.constant 0 : index
    %c0_1 = arith.constant 0 : index
    %0 = vector.load %arg0[%c0, %c0_0, %c0_1] : memref<8x8x16xf32, #tpu.memory_space<vmem>>, vector<8x8x16xf32>
    %1 = vector.shape_cast %0 : vector<8x8x16xf32> to vector<64x16xf32>
    %c0_2 = arith.constant 0 : index
    %c0_3 = arith.constant 0 : index
    %2 = vector.load %arg1[%c0_2, %c0_3] : memref<16x256xf32, #tpu.memory_space<vmem>>, vector<16x256xf32>
    %cst = arith.constant dense<0.000000e+00> : vector<64x256xf32>
    %3 = tpu.matmul %1, %2, %cst {dimension_numbers = #tpu.dot_dimension_numbers<[1], [0], [0], [1], [0, 0, 1, 1], [], []>} : vector<64x16xf32>, vector<16x256xf32>, vector<64x256xf32> -> vector<64x256xf32>
    %c0_4 = arith.constant 0 : index
    %c0_5 = arith.constant 0 : index
    %4 = vector.load %arg4[%c0_4, %c0_5] : memref<1x256xf32, #tpu.memory_space<vmem>>, vector<1x256xf32>
    %5 = vector.broadcast %4 : vector<1x256xf32> to vector<64x256xf32>
    %6 = arith.addf %3, %5 : vector<64x256xf32>
    %7 = vector.shape_cast %6 : vector<64x256xf32> to vector<8x8x256xf32>
    %c0_6 = arith.constant 0 : index
    %c0_7 = arith.constant 0 : index
    %c0_8 = arith.constant 0 : index
    %8 = vector.load %arg12[%c0_6, %c0_7, %c0_8] : memref<8x8x256xf32, #tpu.memory_space<vmem>>, vector<8x8x256xf32>
    tpu.vector_store %arg12[%c0_6, %c0_7, %c0_8], %7 {strides = array<i32>} : memref<8x8x256xf32, #tpu.memory_space<vmem>>, vector<8x8x256xf32>,
    %c0_9 = arith.constant 0 : index
    %c0_10 = arith.constant 0 : index
    %9 = vector.load %arg2[%c0_9, %c0_10] : memref<16x256xf32, #tpu.memory_space<vmem>>, vector<16x256xf32>
    %cst_11 = arith.constant dense<0.000000e+00> : vector<64x256xf32>
    %10 = tpu.matmul %1, %9, %cst_11 {dimension_numbers = #tpu.dot_dimension_numbers<[1], [0], [0], [1], [0, 0, 1, 1], [], []>} : vector<64x16xf32>, vector<16x256xf32>, vector<64x256xf32> -> vector<64x256xf32>
    %11 = vector.shape_cast %10 : vector<64x256xf32> to vector<8x8x256xf32>
    %c0_12 = arith.constant 0 : index
    %c0_13 = arith.constant 0 : index
    %c0_14 = arith.constant 0 : index
    %12 = vector.load %arg13[%c0_12, %c0_13, %c0_14] : memref<8x8x256xf32, #tpu.memory_space<vmem>>, vector<8x8x256xf32>
    tpu.vector_store %arg13[%c0_12, %c0_13, %c0_14], %11 {strides = array<i32>} : memref<8x8x256xf32, #tpu.memory_space<vmem>>, vector<8x8x256xf32>,
    %c0_15 = arith.constant 0 : index
    %c0_16 = arith.constant 0 : index
    %13 = vector.load %arg3[%c0_15, %c0_16] : memref<64x256xf32, #tpu.memory_space<vmem>>, vector<64x256xf32>
    %cst_17 = arith.constant 0.000000e+00 : f32
    %14 = vector.broadcast %cst_17 : f32 to vector<8x64xf32>
    %cst_18 = arith.constant 0.000000e+00 : f32
    %15 = vector.broadcast %cst_18 : f32 to vector<8x64xf32>
    %c0_19 = arith.constant 0 : index
    %c0_20 = arith.constant 0 : index
    %c0_21 = arith.constant 0 : index
    %16 = vector.load %arg12[%c0_19, %c0_20, %c0_21] : memref<8x8x256xf32, #tpu.memory_space<vmem>>, vector<1x8x256xf32>
    %17 = vector.shape_cast %16 : vector<1x8x256xf32> to vector<8x256xf32>
    %c7 = arith.constant 7 : index
    %c0_22 = arith.constant 0 : index
    %c0_23 = arith.constant 0 : index
    %18 = vector.load %arg13[%c7, %c0_22, %c0_23] : memref<8x8x256xf32, #tpu.memory_space<vmem>>, vector<1x8x256xf32>
    %19 = vector.shape_cast %18 : vector<1x8x256xf32> to vector<8x256xf32>
    %20 = arith.addf %17, %19 : vector<8x256xf32>
    %cst_24 = arith.constant dense<0.000000e+00> : vector<8x256xf32>
    %21 = tpu.matmul %14, %13, %cst_24 {dimension_numbers = #tpu.dot_dimension_numbers<[1], [0], [0], [1], [0, 0, 1, 1], [], []>} : vector<8x64xf32>, vector<64x256xf32>, vector<8x256xf32> -> vector<8x256xf32>
    %22 = arith.addf %20, %21 : vector<8x256xf32>
    %23 = arith.negf %22 : vector<8x256xf32>
    %24 = math.exp %23 : vector<8x256xf32>
    %cst_25 = arith.constant 1.000000e+00 : f32
    %25 = vector.broadcast %cst_25 : f32 to vector<8x256xf32>
    %26 = arith.addf %25, %24 : vector<8x256xf32>
    %27 = arith.divf %25, %26 : vector<8x256xf32>
    %28 = vector.extract_strided_slice %27 {offsets = [0, 0], sizes = [8, 64], strides = [1, 1]} : vector<8x256xf32> to vector<8x64xf32>
    %29 = vector.extract_strided_slice %27 {offsets = [0, 64], sizes = [8, 64], strides = [1, 1]} : vector<8x256xf32> to vector<8x64xf32>
    %30 = vector.extract_strided_slice %27 {offsets = [0, 128], sizes = [8, 64], strides = [1, 1]} : vector<8x256xf32> to vector<8x64xf32>
    %cst_26 = arith.constant 2.000000e+00 : f32
    %31 = vector.broadcast %cst_26 : f32 to vector<8x64xf32>
    %32 = arith.mulf %31, %30 : vector<8x64xf32>
    %cst_27 = arith.constant 1.000000e+00 : f32
    %33 = vector.broadcast %cst_27 : f32 to vector<8x64xf32>
    %34 = arith.subf %32, %33 : vector<8x64xf32>
    %35 = vector.extract_strided_slice %27 {offsets = [0, 192], sizes = [8, 64], strides = [1, 1]} : vector<8x256xf32> to vector<8x64xf32>
    %36 = arith.mulf %29, %15 : vector<8x64xf32>
    %37 = arith.mulf %28, %34 : vector<8x64xf32>
    %38 = arith.addf %36, %37 : vector<8x64xf32>
    %39 = math.tanh %38 : vector<8x64xf32>
    %40 = arith.mulf %35, %39 : vector<8x64xf32>
    %c0_28 = arith.constant 0 : index
    %c0_29 = arith.constant 0 : index
    %c0_30 = arith.constant 0 : index
    %41 = vector.load %arg14[%c0_28, %c0_29, %c0_30] : memref<8x8x64xf32, #tpu.memory_space<vmem>>, vector<1x8x64xf32>
    %42 = vector.shape_cast %41 : vector<1x8x64xf32> to vector<8x64xf32>
    %43 = vector.shape_cast %40 : vector<8x64xf32> to vector<1x8x64xf32>
    tpu.vector_store %arg14[%c0_28, %c0_29, %c0_30], %43 {strides = array<i32>} : memref<8x8x64xf32, #tpu.memory_space<vmem>>, vector<1x8x64xf32>,
    %c1 = arith.constant 1 : index
    %c0_31 = arith.constant 0 : index
    %c0_32 = arith.constant 0 : index
    %44 = vector.load %arg12[%c1, %c0_31, %c0_32] : memref<8x8x256xf32, #tpu.memory_space<vmem>>, vector<1x8x256xf32>
    %45 = vector.shape_cast %44 : vector<1x8x256xf32> to vector<8x256xf32>
    %c6 = arith.constant 6 : index
    %c0_33 = arith.constant 0 : index
    %c0_34 = arith.constant 0 : index
    %46 = vector.load %arg13[%c6, %c0_33, %c0_34] : memref<8x8x256xf32, #tpu.memory_space<vmem>>, vector<1x8x256xf32>
    %47 = vector.shape_cast %46 : vector<1x8x256xf32> to vector<8x256xf32>
    %48 = arith.addf %45, %47 : vector<8x256xf32>
    %cst_35 = arith.constant dense<0.000000e+00> : vector<8x256xf32>
    %49 = tpu.matmul %40, %13, %cst_35 {dimension_numbers = #tpu.dot_dimension_numbers<[1], [0], [0], [1], [0, 0, 1, 1], [], []>} : vector<8x64xf32>, vector<64x256xf32>, vector<8x256xf32> -> vector<8x256xf32>
    %50 = arith.addf %48, %49 : vector<8x256xf32>
    %51 = arith.negf %50 : vector<8x256xf32>
    %52 = math.exp %51 : vector<8x256xf32>
    %cst_36 = arith.constant 1.000000e+00 : f32
    %53 = vector.broadcast %cst_36 : f32 to vector<8x256xf32>
    %54 = arith.addf %53, %52 : vector<8x256xf32>
    %55 = arith.divf %53, %54 : vector<8x256xf32>
    %56 = vector.extract_strided_slice %55 {offsets = [0, 0], sizes = [8, 64], strides = [1, 1]} : vector<8x256xf32> to vector<8x64xf32>
    %57 = vector.extract_strided_slice %55 {offsets = [0, 64], sizes = [8, 64], strides = [1, 1]} : vector<8x256xf32> to vector<8x64xf32>
    %58 = vector.extract_strided_slice %55 {offsets = [0, 128], sizes = [8, 64], strides = [1, 1]} : vector<8x256xf32> to vector<8x64xf32>
    %cst_37 = arith.constant 2.000000e+00 : f32
    %59 = vector.broadcast %cst_37 : f32 to vector<8x64xf32>
    %60 = arith.mulf %59, %58 : vector<8x64xf32>
    %cst_38 = arith.constant 1.000000e+00 : f32
    %61 = vector.broadcast %cst_38 : f32 to vector<8x64xf32>
    %62 = arith.subf %60, %61 : vector<8x64xf32>
    %63 = vector.extract_strided_slice %55 {offsets = [0, 192], sizes = [8, 64], strides = [1, 1]} : vector<8x256xf32> to vector<8x64xf32>
    %64 = arith.mulf %57, %38 : vector<8x64xf32>
    %65 = arith.mulf %56, %62 : vector<8x64xf32>
    %66 = arith.addf %64, %65 : vector<8x64xf32>
    %67 = math.tanh %66 : vector<8x64xf32>
    %68 = arith.mulf %63, %67 : vector<8x64xf32>
    %c1_39 = arith.constant 1 : index
    %c0_40 = arith.constant 0 : index
    %c0_41 = arith.constant 0 : index
    %69 = vector.load %arg14[%c1_39, %c0_40, %c0_41] : memref<8x8x64xf32, #tpu.memory_space<vmem>>, vector<1x8x64xf32>
    %70 = vector.shape_cast %69 : vector<1x8x64xf32> to vector<8x64xf32>
    %71 = vector.shape_cast %68 : vector<8x64xf32> to vector<1x8x64xf32>
    tpu.vector_store %arg14[%c1_39, %c0_40, %c0_41], %71 {strides = array<i32>} : memref<8x8x64xf32, #tpu.memory_space<vmem>>, vector<1x8x64xf32>,
    %c2 = arith.constant 2 : index
    %c0_42 = arith.constant 0 : index
    %c0_43 = arith.constant 0 : index
    %72 = vector.load %arg12[%c2, %c0_42, %c0_43] : memref<8x8x256xf32, #tpu.memory_space<vmem>>, vector<1x8x256xf32>
    %73 = vector.shape_cast %72 : vector<1x8x256xf32> to vector<8x256xf32>
    %c5 = arith.constant 5 : index
    %c0_44 = arith.constant 0 : index
    %c0_45 = arith.constant 0 : index
    %74 = vector.load %arg13[%c5, %c0_44, %c0_45] : memref<8x8x256xf32, #tpu.memory_space<vmem>>, vector<1x8x256xf32>
    %75 = vector.shape_cast %74 : vector<1x8x256xf32> to vector<8x256xf32>
    %76 = arith.addf %73, %75 : vector<8x256xf32>
    %cst_46 = arith.constant dense<0.000000e+00> : vector<8x256xf32>
    %77 = tpu.matmul %68, %13, %cst_46 {dimension_numbers = #tpu.dot_dimension_numbers<[1], [0], [0], [1], [0, 0, 1, 1], [], []>} : vector<8x64xf32>, vector<64x256xf32>, vector<8x256xf32> -> vector<8x256xf32>
    %78 = arith.addf %76, %77 : vector<8x256xf32>
    %79 = arith.negf %78 : vector<8x256xf32>
    %80 = math.exp %79 : vector<8x256xf32>
    %cst_47 = arith.constant 1.000000e+00 : f32
    %81 = vector.broadcast %cst_47 : f32 to vector<8x256xf32>
    %82 = arith.addf %81, %80 : vector<8x256xf32>
    %83 = arith.divf %81, %82 : vector<8x256xf32>
    %84 = vector.extract_strided_slice %83 {offsets = [0, 0], sizes = [8, 64], strides = [1, 1]} : vector<8x256xf32> to vector<8x64xf32>
    %85 = vector.extract_strided_slice %83 {offsets = [0, 64], sizes = [8, 64], strides = [1, 1]} : vector<8x256xf32> to vector<8x64xf32>
    %86 = vector.extract_strided_slice %83 {offsets = [0, 128], sizes = [8, 64], strides = [1, 1]} : vector<8x256xf32> to vector<8x64xf32>
    %cst_48 = arith.constant 2.000000e+00 : f32
    %87 = vector.broadcast %cst_48 : f32 to vector<8x64xf32>
    %88 = arith.mulf %87, %86 : vector<8x64xf32>
    %cst_49 = arith.constant 1.000000e+00 : f32
    %89 = vector.broadcast %cst_49 : f32 to vector<8x64xf32>
    %90 = arith.subf %88, %89 : vector<8x64xf32>
    %91 = vector.extract_strided_slice %83 {offsets = [0, 192], sizes = [8, 64], strides = [1, 1]} : vector<8x256xf32> to vector<8x64xf32>
    %92 = arith.mulf %85, %66 : vector<8x64xf32>
    %93 = arith.mulf %84, %90 : vector<8x64xf32>
    %94 = arith.addf %92, %93 : vector<8x64xf32>
    %95 = math.tanh %94 : vector<8x64xf32>
    %96 = arith.mulf %91, %95 : vector<8x64xf32>
    %c2_50 = arith.constant 2 : index
    %c0_51 = arith.constant 0 : index
    %c0_52 = arith.constant 0 : index
    %97 = vector.load %arg14[%c2_50, %c0_51, %c0_52] : memref<8x8x64xf32, #tpu.memory_space<vmem>>, vector<1x8x64xf32>
    %98 = vector.shape_cast %97 : vector<1x8x64xf32> to vector<8x64xf32>
    %99 = vector.shape_cast %96 : vector<8x64xf32> to vector<1x8x64xf32>
    tpu.vector_store %arg14[%c2_50, %c0_51, %c0_52], %99 {strides = array<i32>} : memref<8x8x64xf32, #tpu.memory_space<vmem>>, vector<1x8x64xf32>,
    %c3 = arith.constant 3 : index
    %c0_53 = arith.constant 0 : index
    %c0_54 = arith.constant 0 : index
    %100 = vector.load %arg12[%c3, %c0_53, %c0_54] : memref<8x8x256xf32, #tpu.memory_space<vmem>>, vector<1x8x256xf32>
    %101 = vector.shape_cast %100 : vector<1x8x256xf32> to vector<8x256xf32>
    %c4 = arith.constant 4 : index
    %c0_55 = arith.constant 0 : index
    %c0_56 = arith.constant 0 : index
    %102 = vector.load %arg13[%c4, %c0_55, %c0_56] : memref<8x8x256xf32, #tpu.memory_space<vmem>>, vector<1x8x256xf32>
    %103 = vector.shape_cast %102 : vector<1x8x256xf32> to vector<8x256xf32>
    %104 = arith.addf %101, %103 : vector<8x256xf32>
    %cst_57 = arith.constant dense<0.000000e+00> : vector<8x256xf32>
    %105 = tpu.matmul %96, %13, %cst_57 {dimension_numbers = #tpu.dot_dimension_numbers<[1], [0], [0], [1], [0, 0, 1, 1], [], []>} : vector<8x64xf32>, vector<64x256xf32>, vector<8x256xf32> -> vector<8x256xf32>
    %106 = arith.addf %104, %105 : vector<8x256xf32>
    %107 = arith.negf %106 : vector<8x256xf32>
    %108 = math.exp %107 : vector<8x256xf32>
    %cst_58 = arith.constant 1.000000e+00 : f32
    %109 = vector.broadcast %cst_58 : f32 to vector<8x256xf32>
    %110 = arith.addf %109, %108 : vector<8x256xf32>
    %111 = arith.divf %109, %110 : vector<8x256xf32>
    %112 = vector.extract_strided_slice %111 {offsets = [0, 0], sizes = [8, 64], strides = [1, 1]} : vector<8x256xf32> to vector<8x64xf32>
    %113 = vector.extract_strided_slice %111 {offsets = [0, 64], sizes = [8, 64], strides = [1, 1]} : vector<8x256xf32> to vector<8x64xf32>
    %114 = vector.extract_strided_slice %111 {offsets = [0, 128], sizes = [8, 64], strides = [1, 1]} : vector<8x256xf32> to vector<8x64xf32>
    %cst_59 = arith.constant 2.000000e+00 : f32
    %115 = vector.broadcast %cst_59 : f32 to vector<8x64xf32>
    %116 = arith.mulf %115, %114 : vector<8x64xf32>
    %cst_60 = arith.constant 1.000000e+00 : f32
    %117 = vector.broadcast %cst_60 : f32 to vector<8x64xf32>
    %118 = arith.subf %116, %117 : vector<8x64xf32>
    %119 = vector.extract_strided_slice %111 {offsets = [0, 192], sizes = [8, 64], strides = [1, 1]} : vector<8x256xf32> to vector<8x64xf32>
    %120 = arith.mulf %113, %94 : vector<8x64xf32>
    %121 = arith.mulf %112, %118 : vector<8x64xf32>
    %122 = arith.addf %120, %121 : vector<8x64xf32>
    %123 = math.tanh %122 : vector<8x64xf32>
    %124 = arith.mulf %119, %123 : vector<8x64xf32>
    %c3_61 = arith.constant 3 : index
    %c0_62 = arith.constant 0 : index
    %c0_63 = arith.constant 0 : index
    %125 = vector.load %arg14[%c3_61, %c0_62, %c0_63] : memref<8x8x64xf32, #tpu.memory_space<vmem>>, vector<1x8x64xf32>
    %126 = vector.shape_cast %125 : vector<1x8x64xf32> to vector<8x64xf32>
    %127 = vector.shape_cast %124 : vector<8x64xf32> to vector<1x8x64xf32>
    tpu.vector_store %arg14[%c3_61, %c0_62, %c0_63], %127 {strides = array<i32>} : memref<8x8x64xf32, #tpu.memory_space<vmem>>, vector<1x8x64xf32>,
    %c4_64 = arith.constant 4 : index
    %c0_65 = arith.constant 0 : index
    %c0_66 = arith.constant 0 : index
    %128 = vector.load %arg12[%c4_64, %c0_65, %c0_66] : memref<8x8x256xf32, #tpu.memory_space<vmem>>, vector<1x8x256xf32>
    %129 = vector.shape_cast %128 : vector<1x8x256xf32> to vector<8x256xf32>
    %c3_67 = arith.constant 3 : index
    %c0_68 = arith.constant 0 : index
    %c0_69 = arith.constant 0 : index
    %130 = vector.load %arg13[%c3_67, %c0_68, %c0_69] : memref<8x8x256xf32, #tpu.memory_space<vmem>>, vector<1x8x256xf32>
    %131 = vector.shape_cast %130 : vector<1x8x256xf32> to vector<8x256xf32>
    %132 = arith.addf %129, %131 : vector<8x256xf32>
    %cst_70 = arith.constant dense<0.000000e+00> : vector<8x256xf32>
    %133 = tpu.matmul %124, %13, %cst_70 {dimension_numbers = #tpu.dot_dimension_numbers<[1], [0], [0], [1], [0, 0, 1, 1], [], []>} : vector<8x64xf32>, vector<64x256xf32>, vector<8x256xf32> -> vector<8x256xf32>
    %134 = arith.addf %132, %133 : vector<8x256xf32>
    %135 = arith.negf %134 : vector<8x256xf32>
    %136 = math.exp %135 : vector<8x256xf32>
    %cst_71 = arith.constant 1.000000e+00 : f32
    %137 = vector.broadcast %cst_71 : f32 to vector<8x256xf32>
    %138 = arith.addf %137, %136 : vector<8x256xf32>
    %139 = arith.divf %137, %138 : vector<8x256xf32>
    %140 = vector.extract_strided_slice %139 {offsets = [0, 0], sizes = [8, 64], strides = [1, 1]} : vector<8x256xf32> to vector<8x64xf32>
    %141 = vector.extract_strided_slice %139 {offsets = [0, 64], sizes = [8, 64], strides = [1, 1]} : vector<8x256xf32> to vector<8x64xf32>
    %142 = vector.extract_strided_slice %139 {offsets = [0, 128], sizes = [8, 64], strides = [1, 1]} : vector<8x256xf32> to vector<8x64xf32>
    %cst_72 = arith.constant 2.000000e+00 : f32
    %143 = vector.broadcast %cst_72 : f32 to vector<8x64xf32>
    %144 = arith.mulf %143, %142 : vector<8x64xf32>
    %cst_73 = arith.constant 1.000000e+00 : f32
    %145 = vector.broadcast %cst_73 : f32 to vector<8x64xf32>
    %146 = arith.subf %144, %145 : vector<8x64xf32>
    %147 = vector.extract_strided_slice %139 {offsets = [0, 192], sizes = [8, 64], strides = [1, 1]} : vector<8x256xf32> to vector<8x64xf32>
    %148 = arith.mulf %141, %122 : vector<8x64xf32>
    %149 = arith.mulf %140, %146 : vector<8x64xf32>
    %150 = arith.addf %148, %149 : vector<8x64xf32>
    %151 = math.tanh %150 : vector<8x64xf32>
    %152 = arith.mulf %147, %151 : vector<8x64xf32>
    %c4_74 = arith.constant 4 : index
    %c0_75 = arith.constant 0 : index
    %c0_76 = arith.constant 0 : index
    %153 = vector.load %arg14[%c4_74, %c0_75, %c0_76] : memref<8x8x64xf32, #tpu.memory_space<vmem>>, vector<1x8x64xf32>
    %154 = vector.shape_cast %153 : vector<1x8x64xf32> to vector<8x64xf32>
    %155 = vector.shape_cast %152 : vector<8x64xf32> to vector<1x8x64xf32>
    tpu.vector_store %arg14[%c4_74, %c0_75, %c0_76], %155 {strides = array<i32>} : memref<8x8x64xf32, #tpu.memory_space<vmem>>, vector<1x8x64xf32>,
    %c5_77 = arith.constant 5 : index
    %c0_78 = arith.constant 0 : index
    %c0_79 = arith.constant 0 : index
    %156 = vector.load %arg12[%c5_77, %c0_78, %c0_79] : memref<8x8x256xf32, #tpu.memory_space<vmem>>, vector<1x8x256xf32>
    %157 = vector.shape_cast %156 : vector<1x8x256xf32> to vector<8x256xf32>
    %c2_80 = arith.constant 2 : index
    %c0_81 = arith.constant 0 : index
    %c0_82 = arith.constant 0 : index
    %158 = vector.load %arg13[%c2_80, %c0_81, %c0_82] : memref<8x8x256xf32, #tpu.memory_space<vmem>>, vector<1x8x256xf32>
    %159 = vector.shape_cast %158 : vector<1x8x256xf32> to vector<8x256xf32>
    %160 = arith.addf %157, %159 : vector<8x256xf32>
    %cst_83 = arith.constant dense<0.000000e+00> : vector<8x256xf32>
    %161 = tpu.matmul %152, %13, %cst_83 {dimension_numbers = #tpu.dot_dimension_numbers<[1], [0], [0], [1], [0, 0, 1, 1], [], []>} : vector<8x64xf32>, vector<64x256xf32>, vector<8x256xf32> -> vector<8x256xf32>
    %162 = arith.addf %160, %161 : vector<8x256xf32>
    %163 = arith.negf %162 : vector<8x256xf32>
    %164 = math.exp %163 : vector<8x256xf32>
    %cst_84 = arith.constant 1.000000e+00 : f32
    %165 = vector.broadcast %cst_84 : f32 to vector<8x256xf32>
    %166 = arith.addf %165, %164 : vector<8x256xf32>
    %167 = arith.divf %165, %166 : vector<8x256xf32>
    %168 = vector.extract_strided_slice %167 {offsets = [0, 0], sizes = [8, 64], strides = [1, 1]} : vector<8x256xf32> to vector<8x64xf32>
    %169 = vector.extract_strided_slice %167 {offsets = [0, 64], sizes = [8, 64], strides = [1, 1]} : vector<8x256xf32> to vector<8x64xf32>
    %170 = vector.extract_strided_slice %167 {offsets = [0, 128], sizes = [8, 64], strides = [1, 1]} : vector<8x256xf32> to vector<8x64xf32>
    %cst_85 = arith.constant 2.000000e+00 : f32
    %171 = vector.broadcast %cst_85 : f32 to vector<8x64xf32>
    %172 = arith.mulf %171, %170 : vector<8x64xf32>
    %cst_86 = arith.constant 1.000000e+00 : f32
    %173 = vector.broadcast %cst_86 : f32 to vector<8x64xf32>
    %174 = arith.subf %172, %173 : vector<8x64xf32>
    %175 = vector.extract_strided_slice %167 {offsets = [0, 192], sizes = [8, 64], strides = [1, 1]} : vector<8x256xf32> to vector<8x64xf32>
    %176 = arith.mulf %169, %150 : vector<8x64xf32>
    %177 = arith.mulf %168, %174 : vector<8x64xf32>
    %178 = arith.addf %176, %177 : vector<8x64xf32>
    %179 = math.tanh %178 : vector<8x64xf32>
    %180 = arith.mulf %175, %179 : vector<8x64xf32>
    %c5_87 = arith.constant 5 : index
    %c0_88 = arith.constant 0 : index
    %c0_89 = arith.constant 0 : index
    %181 = vector.load %arg14[%c5_87, %c0_88, %c0_89] : memref<8x8x64xf32, #tpu.memory_space<vmem>>, vector<1x8x64xf32>
    %182 = vector.shape_cast %181 : vector<1x8x64xf32> to vector<8x64xf32>
    %183 = vector.shape_cast %180 : vector<8x64xf32> to vector<1x8x64xf32>
    tpu.vector_store %arg14[%c5_87, %c0_88, %c0_89], %183 {strides = array<i32>} : memref<8x8x64xf32, #tpu.memory_space<vmem>>, vector<1x8x64xf32>,
    %c6_90 = arith.constant 6 : index
    %c0_91 = arith.constant 0 : index
    %c0_92 = arith.constant 0 : index
    %184 = vector.load %arg12[%c6_90, %c0_91, %c0_92] : memref<8x8x256xf32, #tpu.memory_space<vmem>>, vector<1x8x256xf32>
    %185 = vector.shape_cast %184 : vector<1x8x256xf32> to vector<8x256xf32>
    %c1_93 = arith.constant 1 : index
    %c0_94 = arith.constant 0 : index
    %c0_95 = arith.constant 0 : index
    %186 = vector.load %arg13[%c1_93, %c0_94, %c0_95] : memref<8x8x256xf32, #tpu.memory_space<vmem>>, vector<1x8x256xf32>
    %187 = vector.shape_cast %186 : vector<1x8x256xf32> to vector<8x256xf32>
    %188 = arith.addf %185, %187 : vector<8x256xf32>
    %cst_96 = arith.constant dense<0.000000e+00> : vector<8x256xf32>
    %189 = tpu.matmul %180, %13, %cst_96 {dimension_numbers = #tpu.dot_dimension_numbers<[1], [0], [0], [1], [0, 0, 1, 1], [], []>} : vector<8x64xf32>, vector<64x256xf32>, vector<8x256xf32> -> vector<8x256xf32>
    %190 = arith.addf %188, %189 : vector<8x256xf32>
    %191 = arith.negf %190 : vector<8x256xf32>
    %192 = math.exp %191 : vector<8x256xf32>
    %cst_97 = arith.constant 1.000000e+00 : f32
    %193 = vector.broadcast %cst_97 : f32 to vector<8x256xf32>
    %194 = arith.addf %193, %192 : vector<8x256xf32>
    %195 = arith.divf %193, %194 : vector<8x256xf32>
    %196 = vector.extract_strided_slice %195 {offsets = [0, 0], sizes = [8, 64], strides = [1, 1]} : vector<8x256xf32> to vector<8x64xf32>
    %197 = vector.extract_strided_slice %195 {offsets = [0, 64], sizes = [8, 64], strides = [1, 1]} : vector<8x256xf32> to vector<8x64xf32>
    %198 = vector.extract_strided_slice %195 {offsets = [0, 128], sizes = [8, 64], strides = [1, 1]} : vector<8x256xf32> to vector<8x64xf32>
    %cst_98 = arith.constant 2.000000e+00 : f32
    %199 = vector.broadcast %cst_98 : f32 to vector<8x64xf32>
    %200 = arith.mulf %199, %198 : vector<8x64xf32>
    %cst_99 = arith.constant 1.000000e+00 : f32
    %201 = vector.broadcast %cst_99 : f32 to vector<8x64xf32>
    %202 = arith.subf %200, %201 : vector<8x64xf32>
    %203 = vector.extract_strided_slice %195 {offsets = [0, 192], sizes = [8, 64], strides = [1, 1]} : vector<8x256xf32> to vector<8x64xf32>
    %204 = arith.mulf %197, %178 : vector<8x64xf32>
    %205 = arith.mulf %196, %202 : vector<8x64xf32>
    %206 = arith.addf %204, %205 : vector<8x64xf32>
    %207 = math.tanh %206 : vector<8x64xf32>
    %208 = arith.mulf %203, %207 : vector<8x64xf32>
    %c6_100 = arith.constant 6 : index
    %c0_101 = arith.constant 0 : index
    %c0_102 = arith.constant 0 : index
    %209 = vector.load %arg14[%c6_100, %c0_101, %c0_102] : memref<8x8x64xf32, #tpu.memory_space<vmem>>, vector<1x8x64xf32>
    %210 = vector.shape_cast %209 : vector<1x8x64xf32> to vector<8x64xf32>
    %211 = vector.shape_cast %208 : vector<8x64xf32> to vector<1x8x64xf32>
    tpu.vector_store %arg14[%c6_100, %c0_101, %c0_102], %211 {strides = array<i32>} : memref<8x8x64xf32, #tpu.memory_space<vmem>>, vector<1x8x64xf32>,
    %c7_103 = arith.constant 7 : index
    %c0_104 = arith.constant 0 : index
    %c0_105 = arith.constant 0 : index
    %212 = vector.load %arg12[%c7_103, %c0_104, %c0_105] : memref<8x8x256xf32, #tpu.memory_space<vmem>>, vector<1x8x256xf32>
    %213 = vector.shape_cast %212 : vector<1x8x256xf32> to vector<8x256xf32>
    %c0_106 = arith.constant 0 : index
    %c0_107 = arith.constant 0 : index
    %c0_108 = arith.constant 0 : index
    %214 = vector.load %arg13[%c0_106, %c0_107, %c0_108] : memref<8x8x256xf32, #tpu.memory_space<vmem>>, vector<1x8x256xf32>
    %215 = vector.shape_cast %214 : vector<1x8x256xf32> to vector<8x256xf32>
    %216 = arith.addf %213, %215 : vector<8x256xf32>
    %cst_109 = arith.constant dense<0.000000e+00> : vector<8x256xf32>
    %217 = tpu.matmul %208, %13, %cst_109 {dimension_numbers = #tpu.dot_dimension_numbers<[1], [0], [0], [1], [0, 0, 1, 1], [], []>} : vector<8x64xf32>, vector<64x256xf32>, vector<8x256xf32> -> vector<8x256xf32>
    %218 = arith.addf %216, %217 : vector<8x256xf32>
    %219 = arith.negf %218 : vector<8x256xf32>
    %220 = math.exp %219 : vector<8x256xf32>
    %cst_110 = arith.constant 1.000000e+00 : f32
    %221 = vector.broadcast %cst_110 : f32 to vector<8x256xf32>
    %222 = arith.addf %221, %220 : vector<8x256xf32>
    %223 = arith.divf %221, %222 : vector<8x256xf32>
    %224 = vector.extract_strided_slice %223 {offsets = [0, 0], sizes = [8, 64], strides = [1, 1]} : vector<8x256xf32> to vector<8x64xf32>
    %225 = vector.extract_strided_slice %223 {offsets = [0, 64], sizes = [8, 64], strides = [1, 1]} : vector<8x256xf32> to vector<8x64xf32>
    %226 = vector.extract_strided_slice %223 {offsets = [0, 128], sizes = [8, 64], strides = [1, 1]} : vector<8x256xf32> to vector<8x64xf32>
    %cst_111 = arith.constant 2.000000e+00 : f32
    %227 = vector.broadcast %cst_111 : f32 to vector<8x64xf32>
    %228 = arith.mulf %227, %226 : vector<8x64xf32>
    %cst_112 = arith.constant 1.000000e+00 : f32
    %229 = vector.broadcast %cst_112 : f32 to vector<8x64xf32>
    %230 = arith.subf %228, %229 : vector<8x64xf32>
    %231 = vector.extract_strided_slice %223 {offsets = [0, 192], sizes = [8, 64], strides = [1, 1]} : vector<8x256xf32> to vector<8x64xf32>
    %232 = arith.mulf %225, %206 : vector<8x64xf32>
    %233 = arith.mulf %224, %230 : vector<8x64xf32>
    %234 = arith.addf %232, %233 : vector<8x64xf32>
    %235 = math.tanh %234 : vector<8x64xf32>
    %236 = arith.mulf %231, %235 : vector<8x64xf32>
    %c7_113 = arith.constant 7 : index
    %c0_114 = arith.constant 0 : index
    %c0_115 = arith.constant 0 : index
    %237 = vector.load %arg14[%c7_113, %c0_114, %c0_115] : memref<8x8x64xf32, #tpu.memory_space<vmem>>, vector<1x8x64xf32>
    %238 = vector.shape_cast %237 : vector<1x8x64xf32> to vector<8x64xf32>
    %239 = vector.shape_cast %236 : vector<8x64xf32> to vector<1x8x64xf32>
    tpu.vector_store %arg14[%c7_113, %c0_114, %c0_115], %239 {strides = array<i32>} : memref<8x8x64xf32, #tpu.memory_space<vmem>>, vector<1x8x64xf32>,
    %c0_116 = arith.constant 0 : index
    %c0_117 = arith.constant 0 : index
    %c0_118 = arith.constant 0 : index
    %240 = vector.load %arg14[%c0_116, %c0_117, %c0_118] : memref<8x8x64xf32, #tpu.memory_space<vmem>>, vector<8x8x64xf32>
    %241 = vector.shape_cast %240 : vector<8x8x64xf32> to vector<64x64xf32>
    %c0_119 = arith.constant 0 : index
    %c0_120 = arith.constant 0 : index
    %242 = vector.load %arg5[%c0_119, %c0_120] : memref<64x256xf32, #tpu.memory_space<vmem>>, vector<64x256xf32>
    %cst_121 = arith.constant dense<0.000000e+00> : vector<64x256xf32>
    %243 = tpu.matmul %241, %242, %cst_121 {dimension_numbers = #tpu.dot_dimension_numbers<[1], [0], [0], [1], [0, 0, 1, 1], [], []>} : vector<64x64xf32>, vector<64x256xf32>, vector<64x256xf32> -> vector<64x256xf32>
    %c0_122 = arith.constant 0 : index
    %c0_123 = arith.constant 0 : index
    %244 = vector.load %arg8[%c0_122, %c0_123] : memref<1x256xf32, #tpu.memory_space<vmem>>, vector<1x256xf32>
    %245 = vector.broadcast %244 : vector<1x256xf32> to vector<64x256xf32>
    %246 = arith.addf %243, %245 : vector<64x256xf32>
    %247 = vector.shape_cast %246 : vector<64x256xf32> to vector<8x8x256xf32>
    %c0_124 = arith.constant 0 : index
    %c0_125 = arith.constant 0 : index
    %c0_126 = arith.constant 0 : index
    %248 = vector.load %arg12[%c0_124, %c0_125, %c0_126] : memref<8x8x256xf32, #tpu.memory_space<vmem>>, vector<8x8x256xf32>
    tpu.vector_store %arg12[%c0_124, %c0_125, %c0_126], %247 {strides = array<i32>} : memref<8x8x256xf32, #tpu.memory_space<vmem>>, vector<8x8x256xf32>,
    %c0_127 = arith.constant 0 : index
    %c0_128 = arith.constant 0 : index
    %249 = vector.load %arg6[%c0_127, %c0_128] : memref<64x256xf32, #tpu.memory_space<vmem>>, vector<64x256xf32>
    %cst_129 = arith.constant dense<0.000000e+00> : vector<64x256xf32>
    %250 = tpu.matmul %241, %249, %cst_129 {dimension_numbers = #tpu.dot_dimension_numbers<[1], [0], [0], [1], [0, 0, 1, 1], [], []>} : vector<64x64xf32>, vector<64x256xf32>, vector<64x256xf32> -> vector<64x256xf32>
    %251 = vector.shape_cast %250 : vector<64x256xf32> to vector<8x8x256xf32>
    %c0_130 = arith.constant 0 : index
    %c0_131 = arith.constant 0 : index
    %c0_132 = arith.constant 0 : index
    %252 = vector.load %arg13[%c0_130, %c0_131, %c0_132] : memref<8x8x256xf32, #tpu.memory_space<vmem>>, vector<8x8x256xf32>
    tpu.vector_store %arg13[%c0_130, %c0_131, %c0_132], %251 {strides = array<i32>} : memref<8x8x256xf32, #tpu.memory_space<vmem>>, vector<8x8x256xf32>,
    %c0_133 = arith.constant 0 : index
    %c0_134 = arith.constant 0 : index
    %253 = vector.load %arg7[%c0_133, %c0_134] : memref<64x256xf32, #tpu.memory_space<vmem>>, vector<64x256xf32>
    %cst_135 = arith.constant 0.000000e+00 : f32
    %254 = vector.broadcast %cst_135 : f32 to vector<8x64xf32>
    %cst_136 = arith.constant 0.000000e+00 : f32
    %255 = vector.broadcast %cst_136 : f32 to vector<8x64xf32>
    %c0_137 = arith.constant 0 : index
    %c0_138 = arith.constant 0 : index
    %c0_139 = arith.constant 0 : index
    %256 = vector.load %arg12[%c0_137, %c0_138, %c0_139] : memref<8x8x256xf32, #tpu.memory_space<vmem>>, vector<1x8x256xf32>
    %257 = vector.shape_cast %256 : vector<1x8x256xf32> to vector<8x256xf32>
    %c7_140 = arith.constant 7 : index
    %c0_141 = arith.constant 0 : index
    %c0_142 = arith.constant 0 : index
    %258 = vector.load %arg13[%c7_140, %c0_141, %c0_142] : memref<8x8x256xf32, #tpu.memory_space<vmem>>, vector<1x8x256xf32>
    %259 = vector.shape_cast %258 : vector<1x8x256xf32> to vector<8x256xf32>
    %260 = arith.addf %257, %259 : vector<8x256xf32>
    %cst_143 = arith.constant dense<0.000000e+00> : vector<8x256xf32>
    %261 = tpu.matmul %254, %253, %cst_143 {dimension_numbers = #tpu.dot_dimension_numbers<[1], [0], [0], [1], [0, 0, 1, 1], [], []>} : vector<8x64xf32>, vector<64x256xf32>, vector<8x256xf32> -> vector<8x256xf32>
    %262 = arith.addf %260, %261 : vector<8x256xf32>
    %263 = arith.negf %262 : vector<8x256xf32>
    %264 = math.exp %263 : vector<8x256xf32>
    %cst_144 = arith.constant 1.000000e+00 : f32
    %265 = vector.broadcast %cst_144 : f32 to vector<8x256xf32>
    %266 = arith.addf %265, %264 : vector<8x256xf32>
    %267 = arith.divf %265, %266 : vector<8x256xf32>
    %268 = vector.extract_strided_slice %267 {offsets = [0, 0], sizes = [8, 64], strides = [1, 1]} : vector<8x256xf32> to vector<8x64xf32>
    %269 = vector.extract_strided_slice %267 {offsets = [0, 64], sizes = [8, 64], strides = [1, 1]} : vector<8x256xf32> to vector<8x64xf32>
    %270 = vector.extract_strided_slice %267 {offsets = [0, 128], sizes = [8, 64], strides = [1, 1]} : vector<8x256xf32> to vector<8x64xf32>
    %cst_145 = arith.constant 2.000000e+00 : f32
    %271 = vector.broadcast %cst_145 : f32 to vector<8x64xf32>
    %272 = arith.mulf %271, %270 : vector<8x64xf32>
    %cst_146 = arith.constant 1.000000e+00 : f32
    %273 = vector.broadcast %cst_146 : f32 to vector<8x64xf32>
    %274 = arith.subf %272, %273 : vector<8x64xf32>
    %275 = vector.extract_strided_slice %267 {offsets = [0, 192], sizes = [8, 64], strides = [1, 1]} : vector<8x256xf32> to vector<8x64xf32>
    %276 = arith.mulf %269, %255 : vector<8x64xf32>
    %277 = arith.mulf %268, %274 : vector<8x64xf32>
    %278 = arith.addf %276, %277 : vector<8x64xf32>
    %279 = math.tanh %278 : vector<8x64xf32>
    %280 = arith.mulf %275, %279 : vector<8x64xf32>
    %c1_147 = arith.constant 1 : index
    %c0_148 = arith.constant 0 : index
    %c0_149 = arith.constant 0 : index
    %281 = vector.load %arg12[%c1_147, %c0_148, %c0_149] : memref<8x8x256xf32, #tpu.memory_space<vmem>>, vector<1x8x256xf32>
    %282 = vector.shape_cast %281 : vector<1x8x256xf32> to vector<8x256xf32>
    %c6_150 = arith.constant 6 : index
    %c0_151 = arith.constant 0 : index
    %c0_152 = arith.constant 0 : index
    %283 = vector.load %arg13[%c6_150, %c0_151, %c0_152] : memref<8x8x256xf32, #tpu.memory_space<vmem>>, vector<1x8x256xf32>
    %284 = vector.shape_cast %283 : vector<1x8x256xf32> to vector<8x256xf32>
    %285 = arith.addf %282, %284 : vector<8x256xf32>
    %cst_153 = arith.constant dense<0.000000e+00> : vector<8x256xf32>
    %286 = tpu.matmul %280, %253, %cst_153 {dimension_numbers = #tpu.dot_dimension_numbers<[1], [0], [0], [1], [0, 0, 1, 1], [], []>} : vector<8x64xf32>, vector<64x256xf32>, vector<8x256xf32> -> vector<8x256xf32>
    %287 = arith.addf %285, %286 : vector<8x256xf32>
    %288 = arith.negf %287 : vector<8x256xf32>
    %289 = math.exp %288 : vector<8x256xf32>
    %cst_154 = arith.constant 1.000000e+00 : f32
    %290 = vector.broadcast %cst_154 : f32 to vector<8x256xf32>
    %291 = arith.addf %290, %289 : vector<8x256xf32>
    %292 = arith.divf %290, %291 : vector<8x256xf32>
    %293 = vector.extract_strided_slice %292 {offsets = [0, 0], sizes = [8, 64], strides = [1, 1]} : vector<8x256xf32> to vector<8x64xf32>
    %294 = vector.extract_strided_slice %292 {offsets = [0, 64], sizes = [8, 64], strides = [1, 1]} : vector<8x256xf32> to vector<8x64xf32>
    %295 = vector.extract_strided_slice %292 {offsets = [0, 128], sizes = [8, 64], strides = [1, 1]} : vector<8x256xf32> to vector<8x64xf32>
    %cst_155 = arith.constant 2.000000e+00 : f32
    %296 = vector.broadcast %cst_155 : f32 to vector<8x64xf32>
    %297 = arith.mulf %296, %295 : vector<8x64xf32>
    %cst_156 = arith.constant 1.000000e+00 : f32
    %298 = vector.broadcast %cst_156 : f32 to vector<8x64xf32>
    %299 = arith.subf %297, %298 : vector<8x64xf32>
    %300 = vector.extract_strided_slice %292 {offsets = [0, 192], sizes = [8, 64], strides = [1, 1]} : vector<8x256xf32> to vector<8x64xf32>
    %301 = arith.mulf %294, %278 : vector<8x64xf32>
    %302 = arith.mulf %293, %299 : vector<8x64xf32>
    %303 = arith.addf %301, %302 : vector<8x64xf32>
    %304 = math.tanh %303 : vector<8x64xf32>
    %305 = arith.mulf %300, %304 : vector<8x64xf32>
    %c2_157 = arith.constant 2 : index
    %c0_158 = arith.constant 0 : index
    %c0_159 = arith.constant 0 : index
    %306 = vector.load %arg12[%c2_157, %c0_158, %c0_159] : memref<8x8x256xf32, #tpu.memory_space<vmem>>, vector<1x8x256xf32>
    %307 = vector.shape_cast %306 : vector<1x8x256xf32> to vector<8x256xf32>
    %c5_160 = arith.constant 5 : index
    %c0_161 = arith.constant 0 : index
    %c0_162 = arith.constant 0 : index
    %308 = vector.load %arg13[%c5_160, %c0_161, %c0_162] : memref<8x8x256xf32, #tpu.memory_space<vmem>>, vector<1x8x256xf32>
    %309 = vector.shape_cast %308 : vector<1x8x256xf32> to vector<8x256xf32>
    %310 = arith.addf %307, %309 : vector<8x256xf32>
    %cst_163 = arith.constant dense<0.000000e+00> : vector<8x256xf32>
    %311 = tpu.matmul %305, %253, %cst_163 {dimension_numbers = #tpu.dot_dimension_numbers<[1], [0], [0], [1], [0, 0, 1, 1], [], []>} : vector<8x64xf32>, vector<64x256xf32>, vector<8x256xf32> -> vector<8x256xf32>
    %312 = arith.addf %310, %311 : vector<8x256xf32>
    %313 = arith.negf %312 : vector<8x256xf32>
    %314 = math.exp %313 : vector<8x256xf32>
    %cst_164 = arith.constant 1.000000e+00 : f32
    %315 = vector.broadcast %cst_164 : f32 to vector<8x256xf32>
    %316 = arith.addf %315, %314 : vector<8x256xf32>
    %317 = arith.divf %315, %316 : vector<8x256xf32>
    %318 = vector.extract_strided_slice %317 {offsets = [0, 0], sizes = [8, 64], strides = [1, 1]} : vector<8x256xf32> to vector<8x64xf32>
    %319 = vector.extract_strided_slice %317 {offsets = [0, 64], sizes = [8, 64], strides = [1, 1]} : vector<8x256xf32> to vector<8x64xf32>
    %320 = vector.extract_strided_slice %317 {offsets = [0, 128], sizes = [8, 64], strides = [1, 1]} : vector<8x256xf32> to vector<8x64xf32>
    %cst_165 = arith.constant 2.000000e+00 : f32
    %321 = vector.broadcast %cst_165 : f32 to vector<8x64xf32>
    %322 = arith.mulf %321, %320 : vector<8x64xf32>
    %cst_166 = arith.constant 1.000000e+00 : f32
    %323 = vector.broadcast %cst_166 : f32 to vector<8x64xf32>
    %324 = arith.subf %322, %323 : vector<8x64xf32>
    %325 = vector.extract_strided_slice %317 {offsets = [0, 192], sizes = [8, 64], strides = [1, 1]} : vector<8x256xf32> to vector<8x64xf32>
    %326 = arith.mulf %319, %303 : vector<8x64xf32>
    %327 = arith.mulf %318, %324 : vector<8x64xf32>
    %328 = arith.addf %326, %327 : vector<8x64xf32>
    %329 = math.tanh %328 : vector<8x64xf32>
    %330 = arith.mulf %325, %329 : vector<8x64xf32>
    %c3_167 = arith.constant 3 : index
    %c0_168 = arith.constant 0 : index
    %c0_169 = arith.constant 0 : index
    %331 = vector.load %arg12[%c3_167, %c0_168, %c0_169] : memref<8x8x256xf32, #tpu.memory_space<vmem>>, vector<1x8x256xf32>
    %332 = vector.shape_cast %331 : vector<1x8x256xf32> to vector<8x256xf32>
    %c4_170 = arith.constant 4 : index
    %c0_171 = arith.constant 0 : index
    %c0_172 = arith.constant 0 : index
    %333 = vector.load %arg13[%c4_170, %c0_171, %c0_172] : memref<8x8x256xf32, #tpu.memory_space<vmem>>, vector<1x8x256xf32>
    %334 = vector.shape_cast %333 : vector<1x8x256xf32> to vector<8x256xf32>
    %335 = arith.addf %332, %334 : vector<8x256xf32>
    %cst_173 = arith.constant dense<0.000000e+00> : vector<8x256xf32>
    %336 = tpu.matmul %330, %253, %cst_173 {dimension_numbers = #tpu.dot_dimension_numbers<[1], [0], [0], [1], [0, 0, 1, 1], [], []>} : vector<8x64xf32>, vector<64x256xf32>, vector<8x256xf32> -> vector<8x256xf32>
    %337 = arith.addf %335, %336 : vector<8x256xf32>
    %338 = arith.negf %337 : vector<8x256xf32>
    %339 = math.exp %338 : vector<8x256xf32>
    %cst_174 = arith.constant 1.000000e+00 : f32
    %340 = vector.broadcast %cst_174 : f32 to vector<8x256xf32>
    %341 = arith.addf %340, %339 : vector<8x256xf32>
    %342 = arith.divf %340, %341 : vector<8x256xf32>
    %343 = vector.extract_strided_slice %342 {offsets = [0, 0], sizes = [8, 64], strides = [1, 1]} : vector<8x256xf32> to vector<8x64xf32>
    %344 = vector.extract_strided_slice %342 {offsets = [0, 64], sizes = [8, 64], strides = [1, 1]} : vector<8x256xf32> to vector<8x64xf32>
    %345 = vector.extract_strided_slice %342 {offsets = [0, 128], sizes = [8, 64], strides = [1, 1]} : vector<8x256xf32> to vector<8x64xf32>
    %cst_175 = arith.constant 2.000000e+00 : f32
    %346 = vector.broadcast %cst_175 : f32 to vector<8x64xf32>
    %347 = arith.mulf %346, %345 : vector<8x64xf32>
    %cst_176 = arith.constant 1.000000e+00 : f32
    %348 = vector.broadcast %cst_176 : f32 to vector<8x64xf32>
    %349 = arith.subf %347, %348 : vector<8x64xf32>
    %350 = vector.extract_strided_slice %342 {offsets = [0, 192], sizes = [8, 64], strides = [1, 1]} : vector<8x256xf32> to vector<8x64xf32>
    %351 = arith.mulf %344, %328 : vector<8x64xf32>
    %352 = arith.mulf %343, %349 : vector<8x64xf32>
    %353 = arith.addf %351, %352 : vector<8x64xf32>
    %354 = math.tanh %353 : vector<8x64xf32>
    %355 = arith.mulf %350, %354 : vector<8x64xf32>
    %c4_177 = arith.constant 4 : index
    %c0_178 = arith.constant 0 : index
    %c0_179 = arith.constant 0 : index
    %356 = vector.load %arg12[%c4_177, %c0_178, %c0_179] : memref<8x8x256xf32, #tpu.memory_space<vmem>>, vector<1x8x256xf32>
    %357 = vector.shape_cast %356 : vector<1x8x256xf32> to vector<8x256xf32>
    %c3_180 = arith.constant 3 : index
    %c0_181 = arith.constant 0 : index
    %c0_182 = arith.constant 0 : index
    %358 = vector.load %arg13[%c3_180, %c0_181, %c0_182] : memref<8x8x256xf32, #tpu.memory_space<vmem>>, vector<1x8x256xf32>
    %359 = vector.shape_cast %358 : vector<1x8x256xf32> to vector<8x256xf32>
    %360 = arith.addf %357, %359 : vector<8x256xf32>
    %cst_183 = arith.constant dense<0.000000e+00> : vector<8x256xf32>
    %361 = tpu.matmul %355, %253, %cst_183 {dimension_numbers = #tpu.dot_dimension_numbers<[1], [0], [0], [1], [0, 0, 1, 1], [], []>} : vector<8x64xf32>, vector<64x256xf32>, vector<8x256xf32> -> vector<8x256xf32>
    %362 = arith.addf %360, %361 : vector<8x256xf32>
    %363 = arith.negf %362 : vector<8x256xf32>
    %364 = math.exp %363 : vector<8x256xf32>
    %cst_184 = arith.constant 1.000000e+00 : f32
    %365 = vector.broadcast %cst_184 : f32 to vector<8x256xf32>
    %366 = arith.addf %365, %364 : vector<8x256xf32>
    %367 = arith.divf %365, %366 : vector<8x256xf32>
    %368 = vector.extract_strided_slice %367 {offsets = [0, 0], sizes = [8, 64], strides = [1, 1]} : vector<8x256xf32> to vector<8x64xf32>
    %369 = vector.extract_strided_slice %367 {offsets = [0, 64], sizes = [8, 64], strides = [1, 1]} : vector<8x256xf32> to vector<8x64xf32>
    %370 = vector.extract_strided_slice %367 {offsets = [0, 128], sizes = [8, 64], strides = [1, 1]} : vector<8x256xf32> to vector<8x64xf32>
    %cst_185 = arith.constant 2.000000e+00 : f32
    %371 = vector.broadcast %cst_185 : f32 to vector<8x64xf32>
    %372 = arith.mulf %371, %370 : vector<8x64xf32>
    %cst_186 = arith.constant 1.000000e+00 : f32
    %373 = vector.broadcast %cst_186 : f32 to vector<8x64xf32>
    %374 = arith.subf %372, %373 : vector<8x64xf32>
    %375 = vector.extract_strided_slice %367 {offsets = [0, 192], sizes = [8, 64], strides = [1, 1]} : vector<8x256xf32> to vector<8x64xf32>
    %376 = arith.mulf %369, %353 : vector<8x64xf32>
    %377 = arith.mulf %368, %374 : vector<8x64xf32>
    %378 = arith.addf %376, %377 : vector<8x64xf32>
    %379 = math.tanh %378 : vector<8x64xf32>
    %380 = arith.mulf %375, %379 : vector<8x64xf32>
    %c5_187 = arith.constant 5 : index
    %c0_188 = arith.constant 0 : index
    %c0_189 = arith.constant 0 : index
    %381 = vector.load %arg12[%c5_187, %c0_188, %c0_189] : memref<8x8x256xf32, #tpu.memory_space<vmem>>, vector<1x8x256xf32>
    %382 = vector.shape_cast %381 : vector<1x8x256xf32> to vector<8x256xf32>
    %c2_190 = arith.constant 2 : index
    %c0_191 = arith.constant 0 : index
    %c0_192 = arith.constant 0 : index
    %383 = vector.load %arg13[%c2_190, %c0_191, %c0_192] : memref<8x8x256xf32, #tpu.memory_space<vmem>>, vector<1x8x256xf32>
    %384 = vector.shape_cast %383 : vector<1x8x256xf32> to vector<8x256xf32>
    %385 = arith.addf %382, %384 : vector<8x256xf32>
    %cst_193 = arith.constant dense<0.000000e+00> : vector<8x256xf32>
    %386 = tpu.matmul %380, %253, %cst_193 {dimension_numbers = #tpu.dot_dimension_numbers<[1], [0], [0], [1], [0, 0, 1, 1], [], []>} : vector<8x64xf32>, vector<64x256xf32>, vector<8x256xf32> -> vector<8x256xf32>
    %387 = arith.addf %385, %386 : vector<8x256xf32>
    %388 = arith.negf %387 : vector<8x256xf32>
    %389 = math.exp %388 : vector<8x256xf32>
    %cst_194 = arith.constant 1.000000e+00 : f32
    %390 = vector.broadcast %cst_194 : f32 to vector<8x256xf32>
    %391 = arith.addf %390, %389 : vector<8x256xf32>
    %392 = arith.divf %390, %391 : vector<8x256xf32>
    %393 = vector.extract_strided_slice %392 {offsets = [0, 0], sizes = [8, 64], strides = [1, 1]} : vector<8x256xf32> to vector<8x64xf32>
    %394 = vector.extract_strided_slice %392 {offsets = [0, 64], sizes = [8, 64], strides = [1, 1]} : vector<8x256xf32> to vector<8x64xf32>
    %395 = vector.extract_strided_slice %392 {offsets = [0, 128], sizes = [8, 64], strides = [1, 1]} : vector<8x256xf32> to vector<8x64xf32>
    %cst_195 = arith.constant 2.000000e+00 : f32
    %396 = vector.broadcast %cst_195 : f32 to vector<8x64xf32>
    %397 = arith.mulf %396, %395 : vector<8x64xf32>
    %cst_196 = arith.constant 1.000000e+00 : f32
    %398 = vector.broadcast %cst_196 : f32 to vector<8x64xf32>
    %399 = arith.subf %397, %398 : vector<8x64xf32>
    %400 = vector.extract_strided_slice %392 {offsets = [0, 192], sizes = [8, 64], strides = [1, 1]} : vector<8x256xf32> to vector<8x64xf32>
    %401 = arith.mulf %394, %378 : vector<8x64xf32>
    %402 = arith.mulf %393, %399 : vector<8x64xf32>
    %403 = arith.addf %401, %402 : vector<8x64xf32>
    %404 = math.tanh %403 : vector<8x64xf32>
    %405 = arith.mulf %400, %404 : vector<8x64xf32>
    %c6_197 = arith.constant 6 : index
    %c0_198 = arith.constant 0 : index
    %c0_199 = arith.constant 0 : index
    %406 = vector.load %arg12[%c6_197, %c0_198, %c0_199] : memref<8x8x256xf32, #tpu.memory_space<vmem>>, vector<1x8x256xf32>
    %407 = vector.shape_cast %406 : vector<1x8x256xf32> to vector<8x256xf32>
    %c1_200 = arith.constant 1 : index
    %c0_201 = arith.constant 0 : index
    %c0_202 = arith.constant 0 : index
    %408 = vector.load %arg13[%c1_200, %c0_201, %c0_202] : memref<8x8x256xf32, #tpu.memory_space<vmem>>, vector<1x8x256xf32>
    %409 = vector.shape_cast %408 : vector<1x8x256xf32> to vector<8x256xf32>
    %410 = arith.addf %407, %409 : vector<8x256xf32>
    %cst_203 = arith.constant dense<0.000000e+00> : vector<8x256xf32>
    %411 = tpu.matmul %405, %253, %cst_203 {dimension_numbers = #tpu.dot_dimension_numbers<[1], [0], [0], [1], [0, 0, 1, 1], [], []>} : vector<8x64xf32>, vector<64x256xf32>, vector<8x256xf32> -> vector<8x256xf32>
    %412 = arith.addf %410, %411 : vector<8x256xf32>
    %413 = arith.negf %412 : vector<8x256xf32>
    %414 = math.exp %413 : vector<8x256xf32>
    %cst_204 = arith.constant 1.000000e+00 : f32
    %415 = vector.broadcast %cst_204 : f32 to vector<8x256xf32>
    %416 = arith.addf %415, %414 : vector<8x256xf32>
    %417 = arith.divf %415, %416 : vector<8x256xf32>
    %418 = vector.extract_strided_slice %417 {offsets = [0, 0], sizes = [8, 64], strides = [1, 1]} : vector<8x256xf32> to vector<8x64xf32>
    %419 = vector.extract_strided_slice %417 {offsets = [0, 64], sizes = [8, 64], strides = [1, 1]} : vector<8x256xf32> to vector<8x64xf32>
    %420 = vector.extract_strided_slice %417 {offsets = [0, 128], sizes = [8, 64], strides = [1, 1]} : vector<8x256xf32> to vector<8x64xf32>
    %cst_205 = arith.constant 2.000000e+00 : f32
    %421 = vector.broadcast %cst_205 : f32 to vector<8x64xf32>
    %422 = arith.mulf %421, %420 : vector<8x64xf32>
    %cst_206 = arith.constant 1.000000e+00 : f32
    %423 = vector.broadcast %cst_206 : f32 to vector<8x64xf32>
    %424 = arith.subf %422, %423 : vector<8x64xf32>
    %425 = vector.extract_strided_slice %417 {offsets = [0, 192], sizes = [8, 64], strides = [1, 1]} : vector<8x256xf32> to vector<8x64xf32>
    %426 = arith.mulf %419, %403 : vector<8x64xf32>
    %427 = arith.mulf %418, %424 : vector<8x64xf32>
    %428 = arith.addf %426, %427 : vector<8x64xf32>
    %429 = math.tanh %428 : vector<8x64xf32>
    %430 = arith.mulf %425, %429 : vector<8x64xf32>
    %c7_207 = arith.constant 7 : index
    %c0_208 = arith.constant 0 : index
    %c0_209 = arith.constant 0 : index
    %431 = vector.load %arg12[%c7_207, %c0_208, %c0_209] : memref<8x8x256xf32, #tpu.memory_space<vmem>>, vector<1x8x256xf32>
    %432 = vector.shape_cast %431 : vector<1x8x256xf32> to vector<8x256xf32>
    %c0_210 = arith.constant 0 : index
    %c0_211 = arith.constant 0 : index
    %c0_212 = arith.constant 0 : index
    %433 = vector.load %arg13[%c0_210, %c0_211, %c0_212] : memref<8x8x256xf32, #tpu.memory_space<vmem>>, vector<1x8x256xf32>
    %434 = vector.shape_cast %433 : vector<1x8x256xf32> to vector<8x256xf32>
    %435 = arith.addf %432, %434 : vector<8x256xf32>
    %cst_213 = arith.constant dense<0.000000e+00> : vector<8x256xf32>
    %436 = tpu.matmul %430, %253, %cst_213 {dimension_numbers = #tpu.dot_dimension_numbers<[1], [0], [0], [1], [0, 0, 1, 1], [], []>} : vector<8x64xf32>, vector<64x256xf32>, vector<8x256xf32> -> vector<8x256xf32>
    %437 = arith.addf %435, %436 : vector<8x256xf32>
    %438 = arith.negf %437 : vector<8x256xf32>
    %439 = math.exp %438 : vector<8x256xf32>
    %cst_214 = arith.constant 1.000000e+00 : f32
    %440 = vector.broadcast %cst_214 : f32 to vector<8x256xf32>
    %441 = arith.addf %440, %439 : vector<8x256xf32>
    %442 = arith.divf %440, %441 : vector<8x256xf32>
    %443 = vector.extract_strided_slice %442 {offsets = [0, 0], sizes = [8, 64], strides = [1, 1]} : vector<8x256xf32> to vector<8x64xf32>
    %444 = vector.extract_strided_slice %442 {offsets = [0, 64], sizes = [8, 64], strides = [1, 1]} : vector<8x256xf32> to vector<8x64xf32>
    %445 = vector.extract_strided_slice %442 {offsets = [0, 128], sizes = [8, 64], strides = [1, 1]} : vector<8x256xf32> to vector<8x64xf32>
    %cst_215 = arith.constant 2.000000e+00 : f32
    %446 = vector.broadcast %cst_215 : f32 to vector<8x64xf32>
    %447 = arith.mulf %446, %445 : vector<8x64xf32>
    %cst_216 = arith.constant 1.000000e+00 : f32
    %448 = vector.broadcast %cst_216 : f32 to vector<8x64xf32>
    %449 = arith.subf %447, %448 : vector<8x64xf32>
    %450 = vector.extract_strided_slice %442 {offsets = [0, 192], sizes = [8, 64], strides = [1, 1]} : vector<8x256xf32> to vector<8x64xf32>
    %451 = arith.mulf %444, %428 : vector<8x64xf32>
    %452 = arith.mulf %443, %449 : vector<8x64xf32>
    %453 = arith.addf %451, %452 : vector<8x64xf32>
    %454 = math.tanh %453 : vector<8x64xf32>
    %455 = arith.mulf %450, %454 : vector<8x64xf32>
    %c0_217 = arith.constant 0 : index
    %c0_218 = arith.constant 0 : index
    %456 = vector.load %arg9[%c0_217, %c0_218] : memref<64x128xf32, #tpu.memory_space<vmem>>, vector<64x128xf32>
    %cst_219 = arith.constant dense<0.000000e+00> : vector<8x128xf32>
    %457 = tpu.matmul %455, %456, %cst_219 {dimension_numbers = #tpu.dot_dimension_numbers<[1], [0], [0], [1], [0, 0, 1, 1], [], []>} : vector<8x64xf32>, vector<64x128xf32>, vector<8x128xf32> -> vector<8x128xf32>
    %c0_220 = arith.constant 0 : index
    %c0_221 = arith.constant 0 : index
    %458 = vector.load %arg10[%c0_220, %c0_221] : memref<1x128xf32, #tpu.memory_space<vmem>>, vector<1x128xf32>
    %459 = vector.broadcast %458 : vector<1x128xf32> to vector<8x128xf32>
    %460 = arith.addf %457, %459 : vector<8x128xf32>
    %cst_222 = arith.constant dense<0xFF800000> : vector<8xf32>
    %461 = vector.multi_reduction <maximumf>, %460, %cst_222 [1] : vector<8x128xf32> to vector<8xf32>
    %462 = vector.shape_cast %461 : vector<8xf32> to vector<8x1xf32>
    %463 = vector.broadcast %462 : vector<8x1xf32> to vector<8x128xf32>
    %464 = arith.subf %460, %463 : vector<8x128xf32>
    %465 = math.exp %464 : vector<8x128xf32>
    %cst_223 = arith.constant dense<0.000000e+00> : vector<8xf32>
    %466 = vector.multi_reduction <add>, %465, %cst_223 [1] : vector<8x128xf32> to vector<8xf32>
    %467 = vector.shape_cast %466 : vector<8xf32> to vector<8x1xf32>
    %468 = tpu.reciprocal %467 : vector<8x1xf32> -> vector<8x1xf32>
    %469 = vector.broadcast %468 : vector<8x1xf32> to vector<8x128xf32>
    %470 = arith.mulf %465, %469 : vector<8x128xf32>
    %c0_224 = arith.constant 0 : index
    %c0_225 = arith.constant 0 : index
    %471 = vector.load %arg11[%c0_224, %c0_225] : memref<8x128xf32, #tpu.memory_space<vmem>>, vector<8x128xf32>
    tpu.vector_store %arg11[%c0_224, %c0_225], %470 {strides = array<i32>} : memref<8x128xf32, #tpu.memory_space<vmem>>, vector<8x128xf32>,
    return
  }
}

</mosaic_0001>

<llo_original>
// kernel: tpu_custom_call.1
$region0: #{tpu_custom_call.1}
  #allocation0 [shape = 'u32[]', space=smem, size = 0x4, offset = 0x4, fixed_abs, tag = 'smem constant byte address 0x4 - core index']
  #allocation1 [shape = 'u32[144,128]{1,0:T(1,128)}', space=vmem, size = 0x12000, scoped, tag = 'internal scratch']
  #allocation2 [shape = 'f32[8,8,256]{2,1,0:T(8,128)}', space=vmem, size = 0x10000, scoped, tag = 'scratch operand']
  #allocation3 [shape = 'f32[8,8,256]{2,1,0:T(8,128)}', space=vmem, size = 0x10000, scoped, tag = 'scratch operand']
  #allocation4 [shape = 'f32[8,8,64]{2,1,0:T(8,128)}', space=vmem, size = 0x8000, scoped, tag = 'scratch operand']
  %s0 = inlined_call_operand.hbm [shape: f32[8,8,16], index: 0, kind: input, shape index: {}]
  %s1 = inlined_call_operand.hbm [shape: f32[16,256], index: 1, kind: input, shape index: {}]
  %s2 = inlined_call_operand.hbm [shape: f32[16,256], index: 2, kind: input, shape index: {}]
  %s3 = inlined_call_operand.hbm [shape: f32[64,256], index: 3, kind: input, shape index: {}]
  %s4 = inlined_call_operand.vmem [shape: f32[1,256], index: 4, kind: input, shape index: {}]
  %s5 = inlined_call_operand.hbm [shape: f32[64,256], index: 5, kind: input, shape index: {}]
  %s6 = inlined_call_operand.hbm [shape: f32[64,256], index: 6, kind: input, shape index: {}]
  %s7 = inlined_call_operand.hbm [shape: f32[64,256], index: 7, kind: input, shape index: {}]
  %s8 = inlined_call_operand.vmem [shape: f32[1,256], index: 8, kind: input, shape index: {}]
  %s9 = inlined_call_operand.hbm [shape: f32[64,128], index: 9, kind: input, shape index: {}]
  %s10 = inlined_call_operand.vmem [shape: f32[1,128], index: 10, kind: input, shape index: {}]
  %s11 = inlined_call_operand.hbm [shape: f32[8,128], index: 11, kind: output, shape index: {}]
  %s12 = sld [smem:[#allocation0]]
  $region86: #{tpu_custom_call.1} parent=0
    _
  %s14 = ssub.s32 1, %s12
  %s15 = scalar_select 0, %s14, %s12
  $region1: #{tpu_custom_call.1} parent=0
    #allocation5 [shape = 'u8[32768]{0}', space=vmem, size = 0x8000, scoped, tag = 'input window, operand 0, single buffered']
    #allocation6 [shape = 's32[1]{0}', space=sflag, size = 0x4, scoped, tag = 'scoped memory for tpu_custom_call.1']
    #allocation7 [shape = 's32[1]{0}', space=sflag, size = 0x4, scoped, tag = 'scoped memory for tpu_custom_call.1']
    #allocation8 [shape = 'u8[16384]{0}', space=vmem, size = 0x4000, scoped, tag = 'input window, operand 1, single buffered']
    #allocation9 [shape = 's32[1]{0}', space=sflag, size = 0x4, scoped, tag = 'scoped memory for tpu_custom_call.1']
    #allocation10 [shape = 'u8[16384]{0}', space=vmem, size = 0x4000, scoped, tag = 'input window, operand 2, single buffered']
    #allocation11 [shape = 'u8[65536]{0}', space=vmem, size = 0x10000, scoped, tag = 'input window, operand 3, single buffered']
    #allocation12 [shape = 's32[1]{0}', space=sflag, size = 0x4, scoped, tag = 'scoped memory for tpu_custom_call.1']
    #allocation13 [shape = 'u8[65536]{0}', space=vmem, size = 0x10000, scoped, tag = 'input window, operand 5, single buffered']
    #allocation14 [shape = 'u8[65536]{0}', space=vmem, size = 0x10000, scoped, tag = 'input window, operand 6, single buffered']
    #allocation15 [shape = 's32[1]{0}', space=sflag, size = 0x4, scoped, tag = 'scoped memory for tpu_custom_call.1']
    #allocation16 [shape = 'u8[65536]{0}', space=vmem, size = 0x10000, scoped, tag = 'input window, operand 7, single buffered']
    #allocation17 [shape = 'u8[32768]{0}', space=vmem, size = 0x8000, scoped, tag = 'input window, operand 9, single buffered']
    #allocation18 [shape = 's32[1]{0}', space=sflag, size = 0x4, scoped, tag = 'scoped memory for tpu_custom_call.1']
    #allocation19 [shape = 'u8[4096]{0}', space=vmem, size = 0x1000, scoped, tag = 'output window, operand 0, single buffered']
    %16 = vsyncpa [#allocation6], 0
    %17 = vsyncpa [#allocation9], 0
    %18 = vsyncpa [#allocation12], 0
    %19 = vsyncpa [#allocation15], 0
    %20 = vsyncpa [#allocation18], 0
    %21 = vsyncpa [#allocation7], 0
    // Predicated region
    $region2: #{tpu_custom_call.1} parent=1 // pred_check
      _
    $region3: #{tpu_custom_call.1} parent=1 // pred_check_branch
      %23 = sbr.rel (0) target = $region5
    $region4: #{tpu_custom_call.1} parent=1 // pred_region
      %s25 = ssub.s32 1024, 1024
      %26 = vsyncadd [#allocation6], %s25
      %s27 = sshll.u32 [#allocation5], 4
      %s28 = int_to_ptr.vmem [resolvable:$true] %s27
      %33 = dma.hbm_to_vmem [thread:$0]  %s0, 1024, %s28, [#allocation6], 128, 128, 8
    $region5: #{tpu_custom_call.1} parent=1 // pred_fallthru
      _
    // Predicated region
    $region6: #{tpu_custom_call.1} parent=1 // pred_check
      _
    $region7: #{tpu_custom_call.1} parent=1 // pred_check_branch
      %35 = sbr.rel (0) target = $region9
    $region8: #{tpu_custom_call.1} parent=1 // pred_region
      %s37 = ssub.s32 512, 512
      %38 = vsyncadd [#allocation9], %s37
      %s39 = sshll.u32 [#allocation8], 4
      %s40 = int_to_ptr.vmem [resolvable:$true] %s39
      %45 = dma.hbm_to_vmem [thread:$0]  %s1, 512, %s40, [#allocation9], 256, 256, 16
    $region9: #{tpu_custom_call.1} parent=1 // pred_fallthru
      _
    // Predicated region
    $region10: #{tpu_custom_call.1} parent=1 // pred_check
      _
    $region11: #{tpu_custom_call.1} parent=1 // pred_check_branch
      %47 = sbr.rel (0) target = $region13
    $region12: #{tpu_custom_call.1} parent=1 // pred_region
      %s49 = ssub.s32 512, 512
      %50 = vsyncadd [#allocation9], %s49
      %s51 = sshll.u32 [#allocation10], 4
      %s52 = int_to_ptr.vmem [resolvable:$true] %s51
      %57 = dma.hbm_to_vmem [thread:$0]  %s2, 512, %s52, [#allocation9], 256, 256, 16
    $region13: #{tpu_custom_call.1} parent=1 // pred_fallthru
      _
    // Predicated region
    $region14: #{tpu_custom_call.1} parent=1 // pred_check
      _
    $region15: #{tpu_custom_call.1} parent=1 // pred_check_branch
      %59 = sbr.rel (0) target = $region17
    $region16: #{tpu_custom_call.1} parent=1 // pred_region
      %s61 = ssub.s32 2048, 2048
      %62 = vsyncadd [#allocation12], %s61
      %s63 = sshll.u32 [#allocation11], 4
      %s64 = int_to_ptr.vmem [resolvable:$true] %s63
      %69 = dma.hbm_to_vmem [thread:$0]  %s3, 2048, %s64, [#allocation12], 256, 256, 16
    $region17: #{tpu_custom_call.1} parent=1 // pred_fallthru
      _
    // Predicated region
    $region18: #{tpu_custom_call.1} parent=1 // pred_check
      _
    $region19: #{tpu_custom_call.1} parent=1 // pred_check_branch
      %71 = sbr.rel (0) target = $region21
    $region20: #{tpu_custom_call.1} parent=1 // pred_region
      _
    $region21: #{tpu_custom_call.1} parent=1 // pred_fallthru
      _
    // Predicated region
    $region22: #{tpu_custom_call.1} parent=1 // pred_check
      _
    $region23: #{tpu_custom_call.1} parent=1 // pred_check_branch
      %73 = sbr.rel (0) target = $region25
    $region24: #{tpu_custom_call.1} parent=1 // pred_region
      %s75 = ssub.s32 2048, 2048
      %76 = vsyncadd [#allocation12], %s75
      %s77 = sshll.u32 [#allocation13], 4
      %s78 = int_to_ptr.vmem [resolvable:$true] %s77
      %83 = dma.hbm_to_vmem [thread:$0]  %s5, 2048, %s78, [#allocation12], 256, 256, 16
    $region25: #{tpu_custom_call.1} parent=1 // pred_fallthru
      _
    // Predicated region
    $region26: #{tpu_custom_call.1} parent=1 // pred_check
      _
    $region27: #{tpu_custom_call.1} parent=1 // pred_check_branch
      %85 = sbr.rel (0) target = $region29
    $region28: #{tpu_custom_call.1} parent=1 // pred_region
      %s87 = ssub.s32 2048, 2048
      %88 = vsyncadd [#allocation15], %s87
      %s89 = sshll.u32 [#allocation14], 4
      %s90 = int_to_ptr.vmem [resolvable:$true] %s89
      %95 = dma.hbm_to_vmem [thread:$0]  %s6, 2048, %s90, [#allocation15], 256, 256, 16
    $region29: #{tpu_custom_call.1} parent=1 // pred_fallthru
      _
    // Predicated region
    $region30: #{tpu_custom_call.1} parent=1 // pred_check
      _
    $region31: #{tpu_custom_call.1} parent=1 // pred_check_branch
      %97 = sbr.rel (0) target = $region33
    $region32: #{tpu_custom_call.1} parent=1 // pred_region
      %s99 = ssub.s32 2048, 2048
      %100 = vsyncadd [#allocation15], %s99
      %s101 = sshll.u32 [#allocation16], 4
      %s102 = int_to_ptr.vmem [resolvable:$true] %s101
      %107 = dma.hbm_to_vmem [thread:$0]  %s7, 2048, %s102, [#allocation15], 256, 256, 16
    $region33: #{tpu_custom_call.1} parent=1 // pred_fallthru
      _
    // Predicated region
    $region34: #{tpu_custom_call.1} parent=1 // pred_check
      _
    $region35: #{tpu_custom_call.1} parent=1 // pred_check_branch
      %109 = sbr.rel (0) target = $region37
    $region36: #{tpu_custom_call.1} parent=1 // pred_region
      _
    $region37: #{tpu_custom_call.1} parent=1 // pred_fallthru
      _
    // Predicated region
    $region38: #{tpu_custom_call.1} parent=1 // pred_check
      _
    $region39: #{tpu_custom_call.1} parent=1 // pred_check_branch
      %111 = sbr.rel (0) target = $region41
    $region40: #{tpu_custom_call.1} parent=1 // pred_region
      %s113 = ssub.s32 1024, 1024
      %114 = vsyncadd [#allocation18], %s113
      %s115 = sshll.u32 [#allocation17], 4
      %s116 = int_to_ptr.vmem [resolvable:$true] %s115
      %121 = dma.hbm_to_vmem [thread:$0]  %s9, 1024, %s116, [#allocation18], 128, 128, 8
    $region41: #{tpu_custom_call.1} parent=1 // pred_fallthru
      _
    // Predicated region
    $region42: #{tpu_custom_call.1} parent=1 // pred_check
      _
    $region43: #{tpu_custom_call.1} parent=1 // pred_check_branch
      %123 = sbr.rel (0) target = $region45
    $region44: #{tpu_custom_call.1} parent=1 // pred_region
      _
    $region45: #{tpu_custom_call.1} parent=1 // pred_fallthru
      _
    // Predicated region
    $region46: #{tpu_custom_call.1} parent=1 // pred_check
      _
    $region47: #{tpu_custom_call.1} parent=1 // pred_check_branch
      %125 = sbr.rel (0) target = $region49
    $region48: #{tpu_custom_call.1} parent=1 // pred_region
      %126 = dma.done [#allocation6], 1024
    $region49: #{tpu_custom_call.1} parent=1 // pred_fallthru
      _
    // Predicated region
    $region50: #{tpu_custom_call.1} parent=1 // pred_check
      _
    $region51: #{tpu_custom_call.1} parent=1 // pred_check_branch
      %128 = sbr.rel (0) target = $region53
    $region52: #{tpu_custom_call.1} parent=1 // pred_region
      %129 = dma.done [#allocation9], 512
    $region53: #{tpu_custom_call.1} parent=1 // pred_fallthru
      _
    // Predicated region
    $region54: #{tpu_custom_call.1} parent=1 // pred_check
      _
    $region55: #{tpu_custom_call.1} parent=1 // pred_check_branch
      %131 = sbr.rel (0) target = $region57
    $region56: #{tpu_custom_call.1} parent=1 // pred_region
      %132 = dma.done [#allocation9], 512
    $region57: #{tpu_custom_call.1} parent=1 // pred_fallthru
      _
    // Predicated region
    $region58: #{tpu_custom_call.1} parent=1 // pred_check
      _
    $region59: #{tpu_custom_call.1} parent=1 // pred_check_branch
      %134 = sbr.rel (0) target = $region61
    $region60: #{tpu_custom_call.1} parent=1 // pred_region
      %135 = dma.done [#allocation12], 2048
    $region61: #{tpu_custom_call.1} parent=1 // pred_fallthru
      _
    // Predicated region
    $region62: #{tpu_custom_call.1} parent=1 // pred_check
      _
    $region63: #{tpu_custom_call.1} parent=1 // pred_check_branch
      %137 = sbr.rel (0) target = $region65
    $region64: #{tpu_custom_call.1} parent=1 // pred_region
      %138 = dma.done [#allocation12], 2048
    $region65: #{tpu_custom_call.1} parent=1 // pred_fallthru
      _
    // Predicated region
    $region66: #{tpu_custom_call.1} parent=1 // pred_check
      _
    $region67: #{tpu_custom_call.1} parent=1 // pred_check_branch
      %140 = sbr.rel (0) target = $region69
    $region68: #{tpu_custom_call.1} parent=1 // pred_region
      %141 = dma.done [#allocation15], 2048
    $region69: #{tpu_custom_call.1} parent=1 // pred_fallthru
      _
    // Predicated region
    $region70: #{tpu_custom_call.1} parent=1 // pred_check
      _
    $region71: #{tpu_custom_call.1} parent=1 // pred_check_branch
      %143 = sbr.rel (0) target = $region73
    $region72: #{tpu_custom_call.1} parent=1 // pred_region
      %144 = dma.done [#allocation15], 2048
    $region73: #{tpu_custom_call.1} parent=1 // pred_fallthru
      _
    // Predicated region
    $region74: #{tpu_custom_call.1} parent=1 // pred_check
      _
    $region75: #{tpu_custom_call.1} parent=1 // pred_check_branch
      %146 = sbr.rel (0) target = $region77
    $region76: #{tpu_custom_call.1} parent=1 // pred_region
      %147 = dma.done [#allocation18], 1024
    $region77: #{tpu_custom_call.1} parent=1 // pred_fallthru
      _
    %v148 = vld [vmem:[#allocation5] sm:$0xff]
    %v149 = vld [vmem:[#allocation5 + $0x8] sm:$0xff]
    %v150 = vld [vmem:[#allocation5 + $0x10] sm:$0xff]
    %v151 = vld [vmem:[#allocation5 + $0x18] sm:$0xff]
    %v152 = vld [vmem:[#allocation5 + $0x20] sm:$0xff]
    %v153 = vld [vmem:[#allocation5 + $0x28] sm:$0xff]
    %v154 = vld [vmem:[#allocation5 + $0x30] sm:$0xff]
    %v155 = vld [vmem:[#allocation5 + $0x38] sm:$0xff]
    %v156 = vld [vmem:[#allocation8] sm:$0xff]
    %v157 = vld [vmem:[#allocation8 + $0x8] sm:$0xff]
    %v158 = vld [vmem:[#allocation8 + $0x10] sm:$0xff]
    %v159 = vld [vmem:[#allocation8 + $0x18] sm:$0xff]
    %v160 = vld [vmem:[%s4] sm:$0x3]
    %v162 = vlaneseq
    %v163 = vshrl.u32 %v162, 7
    %v164 = vsub.s32 0, %v163
    %v165 = vrot.slane %v160, %v164
    %v166 = vlaneseq
    %v167 = vshrl.u32 %v166, 7
    %v168 = vsub.s32 1, %v167
    %v169 = vrot.slane %v160, %v168
    %vm172 = vcmask 130048
    %v174 = vsel %vm172, %v148, 0
    %v177 = vsel %vm172, %v149, 0
    %v180 = vsel %vm172, %v150, 0
    %v183 = vsel %vm172, %v151, 0
    %v186 = vsel %vm172, %v152, 0
    %v189 = vsel %vm172, %v153, 0
    %v192 = vsel %vm172, %v154, 0
    %v195 = vsel %vm172, %v155, 0
    %197 = vmatprep.subr.mxu0 %v157
    %198 = vmatpush1.msra.mxu0 %v156
    %199 = vmatprep.subr.mxu0 %v159
    %200 = vmatpush1.msra.mxu0 %v158
    %201 = vmatprep.subr.mxu0 0.0
    %202 = vmatpush1.msra.mxu0 0.0
    %203 = vmatprep.subr.mxu0 0.0
    %204 = vmatpush1.msra.mxu0 0.0
    %205 = vmatprep.subr.mxu0 0.0
    %206 = vmatpush1.msra.mxu0 0.0
    %207 = vmatprep.subr.mxu0 0.0
    %208 = vmatpush1.msra.mxu0 0.0
    %209 = vmatprep.subr.mxu0 0.0
    %210 = vmatpush1.msra.mxu0 0.0
    %211 = vmatprep.subr.mxu0 0.0
    %212 = vmatpush1.msra.mxu0 0.0
    %213 = vmatprep.subr.mxu0 0.0
    %214 = vmatpush1.msra.mxu0 0.0
    %215 = vmatprep.subr.mxu0 0.0
    %216 = vmatpush1.msra.mxu0 0.0
    %217 = vmatprep.subr.mxu0 0.0
    %218 = vmatpush1.msra.mxu0 0.0
    %219 = vmatprep.subr.mxu0 0.0
    %220 = vmatpush1.msra.mxu0 0.0
    %221 = vmatprep.subr.mxu0 0.0
    %222 = vmatpush1.msra.mxu0 0.0
    %223 = vmatprep.subr.mxu0 0.0
    %224 = vmatpush1.msra.mxu0 0.0
    %225 = vmatprep.subr.mxu0 0.0
    %226 = vmatpush1.msra.mxu0 0.0
    %227 = vmatprep.subr.mxu0 0.0
    %228 = vmatpush1.msra.mxu0 0.0
    %229 = vmatprep.subr.mxu0 0.0
    %230 = vmatpush1.msra.mxu0 0.0
    %231 = vmatprep.subr.mxu0 0.0
    %232 = vmatpush1.msra.mxu0 0.0
    %233 = vmatprep.subr.mxu0 0.0
    %234 = vmatpush1.msra.mxu0 0.0
    %235 = vmatprep.subr.mxu0 0.0
    %236 = vmatpush1.msra.mxu0 0.0
    %237 = vmatprep.subr.mxu0 0.0
    %238 = vmatpush1.msra.mxu0 0.0
    %239 = vmatprep.subr.mxu0 0.0
    %240 = vmatpush1.msra.mxu0 0.0
    %241 = vmatprep.subr.mxu0 0.0
    %242 = vmatpush1.msra.mxu0 0.0
    %243 = vmatprep.subr.mxu0 0.0
    %244 = vmatpush1.msra.mxu0 0.0
    %245 = vmatprep.subr.mxu0 0.0
    %246 = vmatpush1.msra.mxu0 0.0
    %247 = vmatprep.subr.mxu0 0.0
    %248 = vmatpush1.msra.mxu0 0.0
    %249 = vmatprep.subr.mxu0 0.0
    %250 = vmatpush1.msra.mxu0 0.0
    %251 = vmatprep.subr.mxu0 0.0
    %252 = vmatpush1.msra.mxu0 0.0
    %253 = vmatprep.subr.mxu0 0.0
    %254 = vmatpush1.msra.mxu0 0.0
    %255 = vmatprep.subr.mxu0 0.0
    %256 = vmatpush1.msra.mxu0 0.0
    %257 = vmatprep.subr.mxu0 0.0
    %258 = vmatpush1.msra.mxu0 0.0
    %259 = vmatprep.subr.mxu0 0.0
    %260 = vmatpush1.msra.mxu0 0.0
    %261 = vmatprep.mubr.f32.mxu0 0.0
    %262 = vmatmul.mubr.f32.gmra.mrb[0].mxu0 %v174
    %v263 = vpop.f32.mrb[0].mxu0
    %v264 = vadd.f32 %v165, %v263
    %v265 = vpop.f32.mrb[0].mxu0
    %v266 = vadd.f32 %v169, %v265
    %267 = vmatprep.mubr.f32.mxu0 0.0
    %268 = vmatmul.mubr.f32.gmra.mrb[0].mxu0 %v177
    %v269 = vpop.f32.mrb[0].mxu0
    %v270 = vadd.f32 %v165, %v269
    %v271 = vpop.f32.mrb[0].mxu0
    %v272 = vadd.f32 %v169, %v271
    %273 = vmatprep.mubr.f32.mxu0 0.0
    %274 = vmatmul.mubr.f32.gmra.mrb[0].mxu0 %v180
    %v275 = vpop.f32.mrb[0].mxu0
    %v276 = vadd.f32 %v165, %v275
    %v277 = vpop.f32.mrb[0].mxu0
    %v278 = vadd.f32 %v169, %v277
    %279 = vmatprep.mubr.f32.mxu0 0.0
    %280 = vmatmul.mubr.f32.gmra.mrb[0].mxu0 %v183
    %v281 = vpop.f32.mrb[0].mxu0
    %v282 = vadd.f32 %v165, %v281
    %v283 = vpop.f32.mrb[0].mxu0
    %v284 = vadd.f32 %v169, %v283
    %285 = vmatprep.mubr.f32.mxu0 0.0
    %286 = vmatmul.mubr.f32.gmra.mrb[0].mxu0 %v186
    %v287 = vpop.f32.mrb[0].mxu0
    %v288 = vadd.f32 %v165, %v287
    %v289 = vpop.f32.mrb[0].mxu0
    %v290 = vadd.f32 %v169, %v289
    %291 = vmatprep.mubr.f32.mxu0 0.0
    %292 = vmatmul.mubr.f32.gmra.mrb[0].mxu0 %v189
    %v293 = vpop.f32.mrb[0].mxu0
    %v294 = vadd.f32 %v165, %v293
    %v295 = vpop.f32.mrb[0].mxu0
    %v296 = vadd.f32 %v169, %v295
    %297 = vmatprep.mubr.f32.mxu0 0.0
    %298 = vmatmul.mubr.f32.gmra.mrb[0].mxu0 %v192
    %v299 = vpop.f32.mrb[0].mxu0
    %v300 = vadd.f32 %v165, %v299
    %v301 = vpop.f32.mrb[0].mxu0
    %v302 = vadd.f32 %v169, %v301
    %303 = vmatprep.mubr.f32.mxu0 0.0
    %304 = vmatmul.mubr.f32.gmra.mrb[0].mxu0 %v195
    %v305 = vpop.f32.mrb[0].mxu0
    %v306 = vadd.f32 %v165, %v305
    %v307 = vpop.f32.mrb[0].mxu0
    %v308 = vadd.f32 %v169, %v307
    %309 = vdwg.mxu0
    %310 = vst [vmem:[#allocation2] sm:$0xff] %v264
    %311 = vst [vmem:[#allocation2 + $0x8] sm:$0xff] %v266
    %312 = vst [vmem:[#allocation2 + $0x10] sm:$0xff] %v270
    %313 = vst [vmem:[#allocation2 + $0x18] sm:$0xff] %v272
    %314 = vst [vmem:[#allocation2 + $0x20] sm:$0xff] %v276
    %315 = vst [vmem:[#allocation2 + $0x28] sm:$0xff] %v278
    %316 = vst [vmem:[#allocation2 + $0x30] sm:$0xff] %v282
    %317 = vst [vmem:[#allocation2 + $0x38] sm:$0xff] %v284
    %318 = vst [vmem:[#allocation2 + $0x40] sm:$0xff] %v288
    %319 = vst [vmem:[#allocation2 + $0x48] sm:$0xff] %v290
    %320 = vst [vmem:[#allocation2 + $0x50] sm:$0xff] %v294
    %321 = vst [vmem:[#allocation2 + $0x58] sm:$0xff] %v296
    %322 = vst [vmem:[#allocation2 + $0x60] sm:$0xff] %v300
    %323 = vst [vmem:[#allocation2 + $0x68] sm:$0xff] %v302
    %324 = vst [vmem:[#allocation2 + $0x70] sm:$0xff] %v306
    %325 = vst [vmem:[#allocation2 + $0x78] sm:$0xff] %v308
    %v326 = vld [vmem:[#allocation10] sm:$0xff]
    %v327 = vld [vmem:[#allocation10 + $0x8] sm:$0xff]
    %v328 = vld [vmem:[#allocation10 + $0x10] sm:$0xff]
    %v329 = vld [vmem:[#allocation10 + $0x18] sm:$0xff]
    %330 = vmatprep.subr.mxu0 %v327
    %331 = vmatpush1.msra.mxu0 %v326
    %332 = vmatprep.subr.mxu0 %v329
    %333 = vmatpush1.msra.mxu0 %v328
    %334 = vmatprep.subr.mxu0 0.0
    %335 = vmatpush1.msra.mxu0 0.0
    %336 = vmatprep.subr.mxu0 0.0
    %337 = vmatpush1.msra.mxu0 0.0
    %338 = vmatprep.subr.mxu0 0.0
    %339 = vmatpush1.msra.mxu0 0.0
    %340 = vmatprep.subr.mxu0 0.0
    %341 = vmatpush1.msra.mxu0 0.0
    %342 = vmatprep.subr.mxu0 0.0
    %343 = vmatpush1.msra.mxu0 0.0
    %344 = vmatprep.subr.mxu0 0.0
    %345 = vmatpush1.msra.mxu0 0.0
    %346 = vmatprep.subr.mxu0 0.0
    %347 = vmatpush1.msra.mxu0 0.0
    %348 = vmatprep.subr.mxu0 0.0
    %349 = vmatpush1.msra.mxu0 0.0
    %350 = vmatprep.subr.mxu0 0.0
    %351 = vmatpush1.msra.mxu0 0.0
    %352 = vmatprep.subr.mxu0 0.0
    %353 = vmatpush1.msra.mxu0 0.0
    %354 = vmatprep.subr.mxu0 0.0
    %355 = vmatpush1.msra.mxu0 0.0
    %356 = vmatprep.subr.mxu0 0.0
    %357 = vmatpush1.msra.mxu0 0.0
    %358 = vmatprep.subr.mxu0 0.0
    %359 = vmatpush1.msra.mxu0 0.0
    %360 = vmatprep.subr.mxu0 0.0
    %361 = vmatpush1.msra.mxu0 0.0
    %362 = vmatprep.subr.mxu0 0.0
    %363 = vmatpush1.msra.mxu0 0.0
    %364 = vmatprep.subr.mxu0 0.0
    %365 = vmatpush1.msra.mxu0 0.0
    %366 = vmatprep.subr.mxu0 0.0
    %367 = vmatpush1.msra.mxu0 0.0
    %368 = vmatprep.subr.mxu0 0.0
    %369 = vmatpush1.msra.mxu0 0.0
    %370 = vmatprep.subr.mxu0 0.0
    %371 = vmatpush1.msra.mxu0 0.0
    %372 = vmatprep.subr.mxu0 0.0
    %373 = vmatpush1.msra.mxu0 0.0
    %374 = vmatprep.subr.mxu0 0.0
    %375 = vmatpush1.msra.mxu0 0.0
    %376 = vmatprep.subr.mxu0 0.0
    %377 = vmatpush1.msra.mxu0 0.0
    %378 = vmatprep.subr.mxu0 0.0
    %379 = vmatpush1.msra.mxu0 0.0
    %380 = vmatprep.subr.mxu0 0.0
    %381 = vmatpush1.msra.mxu0 0.0
    %382 = vmatprep.subr.mxu0 0.0
    %383 = vmatpush1.msra.mxu0 0.0
    %384 = vmatprep.subr.mxu0 0.0
    %385 = vmatpush1.msra.mxu0 0.0
    %386 = vmatprep.subr.mxu0 0.0
    %387 = vmatpush1.msra.mxu0 0.0
    %388 = vmatprep.subr.mxu0 0.0
    %389 = vmatpush1.msra.mxu0 0.0
    %390 = vmatprep.subr.mxu0 0.0
    %391 = vmatpush1.msra.mxu0 0.0
    %392 = vmatprep.subr.mxu0 0.0
    %393 = vmatpush1.msra.mxu0 0.0
    %394 = vmatprep.mubr.f32.mxu0 0.0
    %395 = vmatmul.mubr.f32.gmra.mrb[0].mxu0 %v174
    %v396 = vpop.f32.mrb[0].mxu0
    %v397 = vadd.f32 0.0, %v396
    %v398 = vpop.f32.mrb[0].mxu0
    %v399 = vadd.f32 0.0, %v398
    %400 = vmatprep.mubr.f32.mxu0 0.0
    %401 = vmatmul.mubr.f32.gmra.mrb[0].mxu0 %v177
    %v402 = vpop.f32.mrb[0].mxu0
    %v403 = vadd.f32 0.0, %v402
    %v404 = vpop.f32.mrb[0].mxu0
    %v405 = vadd.f32 0.0, %v404
    %406 = vmatprep.mubr.f32.mxu0 0.0
    %407 = vmatmul.mubr.f32.gmra.mrb[0].mxu0 %v180
    %v408 = vpop.f32.mrb[0].mxu0
    %v409 = vadd.f32 0.0, %v408
    %v410 = vpop.f32.mrb[0].mxu0
    %v411 = vadd.f32 0.0, %v410
    %412 = vmatprep.mubr.f32.mxu0 0.0
    %413 = vmatmul.mubr.f32.gmra.mrb[0].mxu0 %v183
    %v414 = vpop.f32.mrb[0].mxu0
    %v415 = vadd.f32 0.0, %v414
    %v416 = vpop.f32.mrb[0].mxu0
    %v417 = vadd.f32 0.0, %v416
    %418 = vmatprep.mubr.f32.mxu0 0.0
    %419 = vmatmul.mubr.f32.gmra.mrb[0].mxu0 %v186
    %v420 = vpop.f32.mrb[0].mxu0
    %v421 = vadd.f32 0.0, %v420
    %v422 = vpop.f32.mrb[0].mxu0
    %v423 = vadd.f32 0.0, %v422
    %424 = vmatprep.mubr.f32.mxu0 0.0
    %425 = vmatmul.mubr.f32.gmra.mrb[0].mxu0 %v189
    %v426 = vpop.f32.mrb[0].mxu0
    %v427 = vadd.f32 0.0, %v426
    %v428 = vpop.f32.mrb[0].mxu0
    %v429 = vadd.f32 0.0, %v428
    %430 = vmatprep.mubr.f32.mxu0 0.0
    %431 = vmatmul.mubr.f32.gmra.mrb[0].mxu0 %v192
    %v432 = vpop.f32.mrb[0].mxu0
    %v433 = vadd.f32 0.0, %v432
    %v434 = vpop.f32.mrb[0].mxu0
    %v435 = vadd.f32 0.0, %v434
    %436 = vmatprep.mubr.f32.mxu0 0.0
    %437 = vmatmul.mubr.f32.gmra.mrb[0].mxu0 %v195
    %v438 = vpop.f32.mrb[0].mxu0
    %v439 = vadd.f32 0.0, %v438
    %v440 = vpop.f32.mrb[0].mxu0
    %v441 = vadd.f32 0.0, %v440
    %442 = vdwg.mxu0
    %443 = vst [vmem:[#allocation3] sm:$0xff] %v397
    %444 = vst [vmem:[#allocation3 + $0x8] sm:$0xff] %v399
    %445 = vst [vmem:[#allocation3 + $0x10] sm:$0xff] %v403
    %446 = vst [vmem:[#allocation3 + $0x18] sm:$0xff] %v405
    %447 = vst [vmem:[#allocation3 + $0x20] sm:$0xff] %v409
    %448 = vst [vmem:[#allocation3 + $0x28] sm:$0xff] %v411
    %449 = vst [vmem:[#allocation3 + $0x30] sm:$0xff] %v415
    %450 = vst [vmem:[#allocation3 + $0x38] sm:$0xff] %v417
    %451 = vst [vmem:[#allocation3 + $0x40] sm:$0xff] %v421
    %452 = vst [vmem:[#allocation3 + $0x48] sm:$0xff] %v423
    %453 = vst [vmem:[#allocation3 + $0x50] sm:$0xff] %v427
    %454 = vst [vmem:[#allocation3 + $0x58] sm:$0xff] %v429
    %455 = vst [vmem:[#allocation3 + $0x60] sm:$0xff] %v433
    %456 = vst [vmem:[#allocation3 + $0x68] sm:$0xff] %v435
    %457 = vst [vmem:[#allocation3 + $0x70] sm:$0xff] %v439
    %458 = vst [vmem:[#allocation3 + $0x78] sm:$0xff] %v441
    %v459 = vld [vmem:[#allocation11] sm:$0xff]
    %v460 = vld [vmem:[#allocation11 + $0x8] sm:$0xff]
    %v461 = vld [vmem:[#allocation11 + $0x10] sm:$0xff]
    %v462 = vld [vmem:[#allocation11 + $0x18] sm:$0xff]
    %v463 = vld [vmem:[#allocation11 + $0x20] sm:$0xff]
    %v464 = vld [vmem:[#allocation11 + $0x28] sm:$0xff]
    %v465 = vld [vmem:[#allocation11 + $0x30] sm:$0xff]
    %v466 = vld [vmem:[#allocation11 + $0x38] sm:$0xff]
    %v467 = vld [vmem:[#allocation11 + $0x40] sm:$0xff]
    %v468 = vld [vmem:[#allocation11 + $0x48] sm:$0xff]
    %v469 = vld [vmem:[#allocation11 + $0x50] sm:$0xff]
    %v470 = vld [vmem:[#allocation11 + $0x58] sm:$0xff]
    %v471 = vld [vmem:[#allocation11 + $0x60] sm:$0xff]
    %v472 = vld [vmem:[#allocation11 + $0x68] sm:$0xff]
    %v473 = vld [vmem:[#allocation11 + $0x70] sm:$0xff]
    %v474 = vld [vmem:[#allocation11 + $0x78] sm:$0xff]
    %v475 = vld [vmem:[#allocation2] sm:$0xff]
    %v476 = vld [vmem:[#allocation2 + $0x8] sm:$0xff]
    %s477 = scalar_lea.vmem [#allocation3], 112
    %v478 = vld [vmem:[%s477] sm:$0xff]
    %v479 = vld [vmem:[%s477 + $0x8] sm:$0xff]
    %v480 = vadd.f32 %v475, %v478
    %v481 = vadd.f32 %v476, %v479
    %vm482 = vcmask 523264
    %v484 = vsel %vm482, 0.0, 0
    %486 = vmatprep.subr.mxu0 %v460
    %487 = vmatpush1.msra.mxu0 %v459
    %488 = vmatprep.subr.mxu0 %v462
    %489 = vmatpush1.msra.mxu0 %v461
    %490 = vmatprep.subr.mxu0 %v464
    %491 = vmatpush1.msra.mxu0 %v463
    %492 = vmatprep.subr.mxu0 %v466
    %493 = vmatpush1.msra.mxu0 %v465
    %494 = vmatprep.subr.mxu0 %v468
    %495 = vmatpush1.msra.mxu0 %v467
    %496 = vmatprep.subr.mxu0 %v470
    %497 = vmatpush1.msra.mxu0 %v469
    %498 = vmatprep.subr.mxu0 %v472
    %499 = vmatpush1.msra.mxu0 %v471
    %500 = vmatprep.subr.mxu0 %v474
    %501 = vmatpush1.msra.mxu0 %v473
    %502 = vmatprep.subr.mxu0 0.0
    %503 = vmatpush1.msra.mxu0 0.0
    %504 = vmatprep.subr.mxu0 0.0
    %505 = vmatpush1.msra.mxu0 0.0
    %506 = vmatprep.subr.mxu0 0.0
    %507 = vmatpush1.msra.mxu0 0.0
    %508 = vmatprep.subr.mxu0 0.0
    %509 = vmatpush1.msra.mxu0 0.0
    %510 = vmatprep.subr.mxu0 0.0
    %511 = vmatpush1.msra.mxu0 0.0
    %512 = vmatprep.subr.mxu0 0.0
    %513 = vmatpush1.msra.mxu0 0.0
    %514 = vmatprep.subr.mxu0 0.0
    %515 = vmatpush1.msra.mxu0 0.0
    %516 = vmatprep.subr.mxu0 0.0
    %517 = vmatpush1.msra.mxu0 0.0
    %518 = vmatprep.subr.mxu0 0.0
    %519 = vmatpush1.msra.mxu0 0.0
    %520 = vmatprep.subr.mxu0 0.0
    %521 = vmatpush1.msra.mxu0 0.0
    %522 = vmatprep.subr.mxu0 0.0
    %523 = vmatpush1.msra.mxu0 0.0
    %524 = vmatprep.subr.mxu0 0.0
    %525 = vmatpush1.msra.mxu0 0.0
    %526 = vmatprep.subr.mxu0 0.0
    %527 = vmatpush1.msra.mxu0 0.0
    %528 = vmatprep.subr.mxu0 0.0
    %529 = vmatpush1.msra.mxu0 0.0
    %530 = vmatprep.subr.mxu0 0.0
    %531 = vmatpush1.msra.mxu0 0.0
    %532 = vmatprep.subr.mxu0 0.0
    %533 = vmatpush1.msra.mxu0 0.0
    %534 = vmatprep.subr.mxu0 0.0
    %535 = vmatpush1.msra.mxu0 0.0
    %536 = vmatprep.subr.mxu0 0.0
    %537 = vmatpush1.msra.mxu0 0.0
    %538 = vmatprep.subr.mxu0 0.0
    %539 = vmatpush1.msra.mxu0 0.0
    %540 = vmatprep.subr.mxu0 0.0
    %541 = vmatpush1.msra.mxu0 0.0
    %542 = vmatprep.subr.mxu0 0.0
    %543 = vmatpush1.msra.mxu0 0.0
    %544 = vmatprep.subr.mxu0 0.0
    %545 = vmatpush1.msra.mxu0 0.0
    %546 = vmatprep.subr.mxu0 0.0
    %547 = vmatpush1.msra.mxu0 0.0
    %548 = vmatprep.subr.mxu0 0.0
    %549 = vmatpush1.msra.mxu0 0.0
    %550 = vmatprep.mubr.f32.mxu0 0.0
    %551 = vmatmul.mubr.f32.gmra.mrb[0].mxu0 %v484
    %v552 = vpop.f32.mrb[0].mxu0
    %v553 = vadd.f32 0.0, %v552
    %v554 = vpop.f32.mrb[0].mxu0
    %v555 = vadd.f32 0.0, %v554
    %556 = vdwg.mxu0
    %v557 = vadd.f32 %v480, %v553
    %v558 = vadd.f32 %v481, %v555
    %v559 = vxor.u32 %v557, 2147483648
    %v560 = vxor.u32 %v558, 2147483648
    %v561 = vmul.f32 %v559, 1.442695
    %v562 = vpow.pop %v561
    %v563 = vmul.f32 %v560, 1.442695
    %v564 = vpow.pop %v563
    %v565 = vadd.f32 %v562, 1.0
    %v566 = vadd.f32 %v564, 1.0
    %v567 = vrcp.pop %v565
    %v568 = vmul.f32 1.0, %v567
    %v569 = vrcp.pop %v566
    %v570 = vmul.f32 1.0, %v569
    %v571 = vmul.f32 %v570, 2.0
    %v572 = vsub.f32 %v571, 1.0
    %v573 = vmul.f32 %v568, 0.0
    %v574 = vmul.f32 %v568, %v572
    %576 = vrot.lane.b32.xlu0 %v574, 64
    %v577 = vpop.permute.xlu0 %576
    %v579 = vadd.f32 %v573, %v577
    %v580 = vtanh.pop %v579
    %v581 = vmul.f32 %v570, %v580
    %583 = vrot.lane.b32.xlu0 %v581, 64
    %v584 = vpop.permute.xlu0 %583
    %586 = vst.msk [vmem:[#allocation4] sm:$0xff] %vm482, %v584
    %s587 = scalar_lea.vmem [#allocation2], 16
    %v588 = vld [vmem:[%s587] sm:$0xff]
    %v589 = vld [vmem:[%s587 + $0x8] sm:$0xff]
    %s590 = scalar_lea.vmem [#allocation3], 96
    %v591 = vld [vmem:[%s590] sm:$0xff]
    %v592 = vld [vmem:[%s590 + $0x8] sm:$0xff]
    %v593 = vadd.f32 %v588, %v591
    %v594 = vadd.f32 %v589, %v592
    %v595 = vsel %vm482, %v584, 0
    %597 = vmatprep.subr.mxu0 %v460
    %598 = vmatpush1.msra.mxu0 %v459
    %599 = vmatprep.subr.mxu0 %v462
    %600 = vmatpush1.msra.mxu0 %v461
    %601 = vmatprep.subr.mxu0 %v464
    %602 = vmatpush1.msra.mxu0 %v463
    %603 = vmatprep.subr.mxu0 %v466
    %604 = vmatpush1.msra.mxu0 %v465
    %605 = vmatprep.subr.mxu0 %v468
    %606 = vmatpush1.msra.mxu0 %v467
    %607 = vmatprep.subr.mxu0 %v470
    %608 = vmatpush1.msra.mxu0 %v469
    %609 = vmatprep.subr.mxu0 %v472
    %610 = vmatpush1.msra.mxu0 %v471
    %611 = vmatprep.subr.mxu0 %v474
    %612 = vmatpush1.msra.mxu0 %v473
    %613 = vmatprep.subr.mxu0 0.0
    %614 = vmatpush1.msra.mxu0 0.0
    %615 = vmatprep.subr.mxu0 0.0
    %616 = vmatpush1.msra.mxu0 0.0
    %617 = vmatprep.subr.mxu0 0.0
    %618 = vmatpush1.msra.mxu0 0.0
    %619 = vmatprep.subr.mxu0 0.0
    %620 = vmatpush1.msra.mxu0 0.0
    %621 = vmatprep.subr.mxu0 0.0
    %622 = vmatpush1.msra.mxu0 0.0
    %623 = vmatprep.subr.mxu0 0.0
    %624 = vmatpush1.msra.mxu0 0.0
    %625 = vmatprep.subr.mxu0 0.0
    %626 = vmatpush1.msra.mxu0 0.0
    %627 = vmatprep.subr.mxu0 0.0
    %628 = vmatpush1.msra.mxu0 0.0
    %629 = vmatprep.subr.mxu0 0.0
    %630 = vmatpush1.msra.mxu0 0.0
    %631 = vmatprep.subr.mxu0 0.0
    %632 = vmatpush1.msra.mxu0 0.0
    %633 = vmatprep.subr.mxu0 0.0
    %634 = vmatpush1.msra.mxu0 0.0
    %635 = vmatprep.subr.mxu0 0.0
    %636 = vmatpush1.msra.mxu0 0.0
    %637 = vmatprep.subr.mxu0 0.0
    %638 = vmatpush1.msra.mxu0 0.0
    %639 = vmatprep.subr.mxu0 0.0
    %640 = vmatpush1.msra.mxu0 0.0
    %641 = vmatprep.subr.mxu0 0.0
    %642 = vmatpush1.msra.mxu0 0.0
    %643 = vmatprep.subr.mxu0 0.0
    %644 = vmatpush1.msra.mxu0 0.0
    %645 = vmatprep.subr.mxu0 0.0
    %646 = vmatpush1.msra.mxu0 0.0
    %647 = vmatprep.subr.mxu0 0.0
    %648 = vmatpush1.msra.mxu0 0.0
    %649 = vmatprep.subr.mxu0 0.0
    %650 = vmatpush1.msra.mxu0 0.0
    %651 = vmatprep.subr.mxu0 0.0
    %652 = vmatpush1.msra.mxu0 0.0
    %653 = vmatprep.subr.mxu0 0.0
    %654 = vmatpush1.msra.mxu0 0.0
    %655 = vmatprep.subr.mxu0 0.0
    %656 = vmatpush1.msra.mxu0 0.0
    %657 = vmatprep.subr.mxu0 0.0
    %658 = vmatpush1.msra.mxu0 0.0
    %659 = vmatprep.subr.mxu0 0.0
    %660 = vmatpush1.msra.mxu0 0.0
    %661 = vmatprep.mubr.f32.mxu0 0.0
    %662 = vmatmul.mubr.f32.gmra.mrb[0].mxu0 %v595
    %v663 = vpop.f32.mrb[0].mxu0
    %v664 = vadd.f32 0.0, %v663
    %v665 = vpop.f32.mrb[0].mxu0
    %v666 = vadd.f32 0.0, %v665
    %667 = vdwg.mxu0
    %v668 = vadd.f32 %v593, %v664
    %v669 = vadd.f32 %v594, %v666
    %v670 = vxor.u32 %v668, 2147483648
    %v671 = vxor.u32 %v669, 2147483648
    %v672 = vmul.f32 %v670, 1.442695
    %v673 = vpow.pop %v672
    %v674 = vmul.f32 %v671, 1.442695
    %v675 = vpow.pop %v674
    %v676 = vadd.f32 %v673, 1.0
    %v677 = vadd.f32 %v675, 1.0
    %v678 = vrcp.pop %v676
    %v679 = vmul.f32 1.0, %v678
    %v680 = vrcp.pop %v677
    %v681 = vmul.f32 1.0, %v680
    %v682 = vmul.f32 %v681, 2.0
    %v683 = vsub.f32 %v682, 1.0
    %v684 = vmul.f32 %v679, %v579
    %v685 = vmul.f32 %v679, %v683
    %687 = vrot.lane.b32.xlu0 %v685, 64
    %v688 = vpop.permute.xlu0 %687
    %v690 = vadd.f32 %v684, %v688
    %v691 = vtanh.pop %v690
    %v692 = vmul.f32 %v681, %v691
    %694 = vrot.lane.b32.xlu0 %v692, 64
    %v695 = vpop.permute.xlu0 %694
    %s697 = scalar_lea.vmem [#allocation4], 8
    %698 = vst.msk [vmem:[%s697] sm:$0xff] %vm482, %v695
    %s699 = scalar_lea.vmem [#allocation2], 32
    %v700 = vld [vmem:[%s699] sm:$0xff]
    %v701 = vld [vmem:[%s699 + $0x8] sm:$0xff]
    %s702 = scalar_lea.vmem [#allocation3], 80
    %v703 = vld [vmem:[%s702] sm:$0xff]
    %v704 = vld [vmem:[%s702 + $0x8] sm:$0xff]
    %v705 = vadd.f32 %v700, %v703
    %v706 = vadd.f32 %v701, %v704
    %v707 = vsel %vm482, %v695, 0
    %709 = vmatprep.subr.mxu0 %v460
    %710 = vmatpush1.msra.mxu0 %v459
    %711 = vmatprep.subr.mxu0 %v462
    %712 = vmatpush1.msra.mxu0 %v461
    %713 = vmatprep.subr.mxu0 %v464
    %714 = vmatpush1.msra.mxu0 %v463
    %715 = vmatprep.subr.mxu0 %v466
    %716 = vmatpush1.msra.mxu0 %v465
    %717 = vmatprep.subr.mxu0 %v468
    %718 = vmatpush1.msra.mxu0 %v467
    %719 = vmatprep.subr.mxu0 %v470
    %720 = vmatpush1.msra.mxu0 %v469
    %721 = vmatprep.subr.mxu0 %v472
    %722 = vmatpush1.msra.mxu0 %v471
    %723 = vmatprep.subr.mxu0 %v474
    %724 = vmatpush1.msra.mxu0 %v473
    %725 = vmatprep.subr.mxu0 0.0
    %726 = vmatpush1.msra.mxu0 0.0
    %727 = vmatprep.subr.mxu0 0.0
    %728 = vmatpush1.msra.mxu0 0.0
    %729 = vmatprep.subr.mxu0 0.0
    %730 = vmatpush1.msra.mxu0 0.0
    %731 = vmatprep.subr.mxu0 0.0
    %732 = vmatpush1.msra.mxu0 0.0
    %733 = vmatprep.subr.mxu0 0.0
    %734 = vmatpush1.msra.mxu0 0.0
    %735 = vmatprep.subr.mxu0 0.0
    %736 = vmatpush1.msra.mxu0 0.0
    %737 = vmatprep.subr.mxu0 0.0
    %738 = vmatpush1.msra.mxu0 0.0
    %739 = vmatprep.subr.mxu0 0.0
    %740 = vmatpush1.msra.mxu0 0.0
    %741 = vmatprep.subr.mxu0 0.0
    %742 = vmatpush1.msra.mxu0 0.0
    %743 = vmatprep.subr.mxu0 0.0
    %744 = vmatpush1.msra.mxu0 0.0
    %745 = vmatprep.subr.mxu0 0.0
    %746 = vmatpush1.msra.mxu0 0.0
    %747 = vmatprep.subr.mxu0 0.0
    %748 = vmatpush1.msra.mxu0 0.0
    %749 = vmatprep.subr.mxu0 0.0
    %750 = vmatpush1.msra.mxu0 0.0
    %751 = vmatprep.subr.mxu0 0.0
    %752 = vmatpush1.msra.mxu0 0.0
    %753 = vmatprep.subr.mxu0 0.0
    %754 = vmatpush1.msra.mxu0 0.0
    %755 = vmatprep.subr.mxu0 0.0
    %756 = vmatpush1.msra.mxu0 0.0
    %757 = vmatprep.subr.mxu0 0.0
    %758 = vmatpush1.msra.mxu0 0.0
    %759 = vmatprep.subr.mxu0 0.0
    %760 = vmatpush1.msra.mxu0 0.0
    %761 = vmatprep.subr.mxu0 0.0
    %762 = vmatpush1.msra.mxu0 0.0
    %763 = vmatprep.subr.mxu0 0.0
    %764 = vmatpush1.msra.mxu0 0.0
    %765 = vmatprep.subr.mxu0 0.0
    %766 = vmatpush1.msra.mxu0 0.0
    %767 = vmatprep.subr.mxu0 0.0
    %768 = vmatpush1.msra.mxu0 0.0
    %769 = vmatprep.subr.mxu0 0.0
    %770 = vmatpush1.msra.mxu0 0.0
    %771 = vmatprep.subr.mxu0 0.0
    %772 = vmatpush1.msra.mxu0 0.0
    %773 = vmatprep.mubr.f32.mxu0 0.0
    %774 = vmatmul.mubr.f32.gmra.mrb[0].mxu0 %v707
    %v775 = vpop.f32.mrb[0].mxu0
    %v776 = vadd.f32 0.0, %v775
    %v777 = vpop.f32.mrb[0].mxu0
    %v778 = vadd.f32 0.0, %v777
    %779 = vdwg.mxu0
    %v780 = vadd.f32 %v705, %v776
    %v781 = vadd.f32 %v706, %v778
    %v782 = vxor.u32 %v780, 2147483648
    %v783 = vxor.u32 %v781, 2147483648
    %v784 = vmul.f32 %v782, 1.442695
    %v785 = vpow.pop %v784
    %v786 = vmul.f32 %v783, 1.442695
    %v787 = vpow.pop %v786
    %v788 = vadd.f32 %v785, 1.0
    %v789 = vadd.f32 %v787, 1.0
    %v790 = vrcp.pop %v788
    %v791 = vmul.f32 1.0, %v790
    %v792 = vrcp.pop %v789
    %v793 = vmul.f32 1.0, %v792
    %v794 = vmul.f32 %v793, 2.0
    %v795 = vsub.f32 %v794, 1.0
    %v796 = vmul.f32 %v791, %v690
    %v797 = vmul.f32 %v791, %v795
    %799 = vrot.lane.b32.xlu0 %v797, 64
    %v800 = vpop.permute.xlu0 %799
    %v802 = vadd.f32 %v796, %v800
    %v803 = vtanh.pop %v802
    %v804 = vmul.f32 %v793, %v803
    %806 = vrot.lane.b32.xlu0 %v804, 64
    %v807 = vpop.permute.xlu0 %806
    %s809 = scalar_lea.vmem [#allocation4], 16
    %810 = vst.msk [vmem:[%s809] sm:$0xff] %vm482, %v807
    %s811 = scalar_lea.vmem [#allocation2], 48
    %v812 = vld [vmem:[%s811] sm:$0xff]
    %v813 = vld [vmem:[%s811 + $0x8] sm:$0xff]
    %s814 = scalar_lea.vmem [#allocation3], 64
    %v815 = vld [vmem:[%s814] sm:$0xff]
    %v816 = vld [vmem:[%s814 + $0x8] sm:$0xff]
    %v817 = vadd.f32 %v812, %v815
    %v818 = vadd.f32 %v813, %v816
    %v819 = vsel %vm482, %v807, 0
    %821 = vmatprep.subr.mxu0 %v460
    %822 = vmatpush1.msra.mxu0 %v459
    %823 = vmatprep.subr.mxu0 %v462
    %824 = vmatpush1.msra.mxu0 %v461
    %825 = vmatprep.subr.mxu0 %v464
    %826 = vmatpush1.msra.mxu0 %v463
    %827 = vmatprep.subr.mxu0 %v466
    %828 = vmatpush1.msra.mxu0 %v465
    %829 = vmatprep.subr.mxu0 %v468
    %830 = vmatpush1.msra.mxu0 %v467
    %831 = vmatprep.subr.mxu0 %v470
    %832 = vmatpush1.msra.mxu0 %v469
    %833 = vmatprep.subr.mxu0 %v472
    %834 = vmatpush1.msra.mxu0 %v471
    %835 = vmatprep.subr.mxu0 %v474
    %836 = vmatpush1.msra.mxu0 %v473
    %837 = vmatprep.subr.mxu0 0.0
    %838 = vmatpush1.msra.mxu0 0.0
    %839 = vmatprep.subr.mxu0 0.0
    %840 = vmatpush1.msra.mxu0 0.0
    %841 = vmatprep.subr.mxu0 0.0
    %842 = vmatpush1.msra.mxu0 0.0
    %843 = vmatprep.subr.mxu0 0.0
    %844 = vmatpush1.msra.mxu0 0.0
    %845 = vmatprep.subr.mxu0 0.0
    %846 = vmatpush1.msra.mxu0 0.0
    %847 = vmatprep.subr.mxu0 0.0
    %848 = vmatpush1.msra.mxu0 0.0
    %849 = vmatprep.subr.mxu0 0.0
    %850 = vmatpush1.msra.mxu0 0.0
    %851 = vmatprep.subr.mxu0 0.0
    %852 = vmatpush1.msra.mxu0 0.0
    %853 = vmatprep.subr.mxu0 0.0
    %854 = vmatpush1.msra.mxu0 0.0
    %855 = vmatprep.subr.mxu0 0.0
    %856 = vmatpush1.msra.mxu0 0.0
    %857 = vmatprep.subr.mxu0 0.0
    %858 = vmatpush1.msra.mxu0 0.0
    %859 = vmatprep.subr.mxu0 0.0
    %860 = vmatpush1.msra.mxu0 0.0
    %861 = vmatprep.subr.mxu0 0.0
    %862 = vmatpush1.msra.mxu0 0.0
    %863 = vmatprep.subr.mxu0 0.0
    %864 = vmatpush1.msra.mxu0 0.0
    %865 = vmatprep.subr.mxu0 0.0
    %866 = vmatpush1.msra.mxu0 0.0
    %867 = vmatprep.subr.mxu0 0.0
    %868 = vmatpush1.msra.mxu0 0.0
    %869 = vmatprep.subr.mxu0 0.0
    %870 = vmatpush1.msra.mxu0 0.0
    %871 = vmatprep.subr.mxu0 0.0
    %872 = vmatpush1.msra.mxu0 0.0
    %873 = vmatprep.subr.mxu0 0.0
    %874 = vmatpush1.msra.mxu0 0.0
    %875 = vmatprep.subr.mxu0 0.0
    %876 = vmatpush1.msra.mxu0 0.0
    %877 = vmatprep.subr.mxu0 0.0
    %878 = vmatpush1.msra.mxu0 0.0
    %879 = vmatprep.subr.mxu0 0.0
    %880 = vmatpush1.msra.mxu0 0.0
    %881 = vmatprep.subr.mxu0 0.0
    %882 = vmatpush1.msra.mxu0 0.0
    %883 = vmatprep.subr.mxu0 0.0
    %884 = vmatpush1.msra.mxu0 0.0
    %885 = vmatprep.mubr.f32.mxu0 0.0
    %886 = vmatmul.mubr.f32.gmra.mrb[0].mxu0 %v819
    %v887 = vpop.f32.mrb[0].mxu0
    %v888 = vadd.f32 0.0, %v887
    %v889 = vpop.f32.mrb[0].mxu0
    %v890 = vadd.f32 0.0, %v889
    %891 = vdwg.mxu0
    %v892 = vadd.f32 %v817, %v888
    %v893 = vadd.f32 %v818, %v890
    %v894 = vxor.u32 %v892, 2147483648
    %v895 = vxor.u32 %v893, 2147483648
    %v896 = vmul.f32 %v894, 1.442695
    %v897 = vpow.pop %v896
    %v898 = vmul.f32 %v895, 1.442695
    %v899 = vpow.pop %v898
    %v900 = vadd.f32 %v897, 1.0
    %v901 = vadd.f32 %v899, 1.0
    %v902 = vrcp.pop %v900
    %v903 = vmul.f32 1.0, %v902
    %v904 = vrcp.pop %v901
    %v905 = vmul.f32 1.0, %v904
    %v906 = vmul.f32 %v905, 2.0
    %v907 = vsub.f32 %v906, 1.0
    %v908 = vmul.f32 %v903, %v802
    %v909 = vmul.f32 %v903, %v907
    %911 = vrot.lane.b32.xlu0 %v909, 64
    %v912 = vpop.permute.xlu0 %911
    %v914 = vadd.f32 %v908, %v912
    %v915 = vtanh.pop %v914
    %v916 = vmul.f32 %v905, %v915
    %918 = vrot.lane.b32.xlu0 %v916, 64
    %v919 = vpop.permute.xlu0 %918
    %s921 = scalar_lea.vmem [#allocation4], 24
    %922 = vst.msk [vmem:[%s921] sm:$0xff] %vm482, %v919
    %s923 = scalar_lea.vmem [#allocation2], 64
    %v924 = vld [vmem:[%s923] sm:$0xff]
    %v925 = vld [vmem:[%s923 + $0x8] sm:$0xff]
    %s926 = scalar_lea.vmem [#allocation3], 48
    %v927 = vld [vmem:[%s926] sm:$0xff]
    %v928 = vld [vmem:[%s926 + $0x8] sm:$0xff]
    %v929 = vadd.f32 %v924, %v927
    %v930 = vadd.f32 %v925, %v928
    %v931 = vsel %vm482, %v919, 0
    %933 = vmatprep.subr.mxu0 %v460
    %934 = vmatpush1.msra.mxu0 %v459
    %935 = vmatprep.subr.mxu0 %v462
    %936 = vmatpush1.msra.mxu0 %v461
    %937 = vmatprep.subr.mxu0 %v464
    %938 = vmatpush1.msra.mxu0 %v463
    %939 = vmatprep.subr.mxu0 %v466
    %940 = vmatpush1.msra.mxu0 %v465
    %941 = vmatprep.subr.mxu0 %v468
    %942 = vmatpush1.msra.mxu0 %v467
    %943 = vmatprep.subr.mxu0 %v470
    %944 = vmatpush1.msra.mxu0 %v469
    %945 = vmatprep.subr.mxu0 %v472
    %946 = vmatpush1.msra.mxu0 %v471
    %947 = vmatprep.subr.mxu0 %v474
    %948 = vmatpush1.msra.mxu0 %v473
    %949 = vmatprep.subr.mxu0 0.0
    %950 = vmatpush1.msra.mxu0 0.0
    %951 = vmatprep.subr.mxu0 0.0
    %952 = vmatpush1.msra.mxu0 0.0
    %953 = vmatprep.subr.mxu0 0.0
    %954 = vmatpush1.msra.mxu0 0.0
    %955 = vmatprep.subr.mxu0 0.0
    %956 = vmatpush1.msra.mxu0 0.0
    %957 = vmatprep.subr.mxu0 0.0
    %958 = vmatpush1.msra.mxu0 0.0
    %959 = vmatprep.subr.mxu0 0.0
    %960 = vmatpush1.msra.mxu0 0.0
    %961 = vmatprep.subr.mxu0 0.0
    %962 = vmatpush1.msra.mxu0 0.0
    %963 = vmatprep.subr.mxu0 0.0
    %964 = vmatpush1.msra.mxu0 0.0
    %965 = vmatprep.subr.mxu0 0.0
    %966 = vmatpush1.msra.mxu0 0.0
    %967 = vmatprep.subr.mxu0 0.0
    %968 = vmatpush1.msra.mxu0 0.0
    %969 = vmatprep.subr.mxu0 0.0
    %970 = vmatpush1.msra.mxu0 0.0
    %971 = vmatprep.subr.mxu0 0.0
    %972 = vmatpush1.msra.mxu0 0.0
    %973 = vmatprep.subr.mxu0 0.0
    %974 = vmatpush1.msra.mxu0 0.0
    %975 = vmatprep.subr.mxu0 0.0
    %976 = vmatpush1.msra.mxu0 0.0
    %977 = vmatprep.subr.mxu0 0.0
    %978 = vmatpush1.msra.mxu0 0.0
    %979 = vmatprep.subr.mxu0 0.0
    %980 = vmatpush1.msra.mxu0 0.0
    %981 = vmatprep.subr.mxu0 0.0
    %982 = vmatpush1.msra.mxu0 0.0
    %983 = vmatprep.subr.mxu0 0.0
    %984 = vmatpush1.msra.mxu0 0.0
    %985 = vmatprep.subr.mxu0 0.0
    %986 = vmatpush1.msra.mxu0 0.0
    %987 = vmatprep.subr.mxu0 0.0
    %988 = vmatpush1.msra.mxu0 0.0
    %989 = vmatprep.subr.mxu0 0.0
    %990 = vmatpush1.msra.mxu0 0.0
    %991 = vmatprep.subr.mxu0 0.0
    %992 = vmatpush1.msra.mxu0 0.0
    %993 = vmatprep.subr.mxu0 0.0
    %994 = vmatpush1.msra.mxu0 0.0
    %995 = vmatprep.subr.mxu0 0.0
    %996 = vmatpush1.msra.mxu0 0.0
    %997 = vmatprep.mubr.f32.mxu0 0.0
    %998 = vmatmul.mubr.f32.gmra.mrb[0].mxu0 %v931
    %v999 = vpop.f32.mrb[0].mxu0
    %v1000 = vadd.f32 0.0, %v999
    %v1001 = vpop.f32.mrb[0].mxu0
    %v1002 = vadd.f32 0.0, %v1001
    %1003 = vdwg.mxu0
    %v1004 = vadd.f32 %v929, %v1000
    %v1005 = vadd.f32 %v930, %v1002
    %v1006 = vxor.u32 %v1004, 2147483648
    %v1007 = vxor.u32 %v1005, 2147483648
    %v1008 = vmul.f32 %v1006, 1.442695
    %v1009 = vpow.pop %v1008
    %v1010 = vmul.f32 %v1007, 1.442695
    %v1011 = vpow.pop %v1010
    %v1012 = vadd.f32 %v1009, 1.0
    %v1013 = vadd.f32 %v1011, 1.0
    %v1014 = vrcp.pop %v1012
    %v1015 = vmul.f32 1.0, %v1014
    %v1016 = vrcp.pop %v1013
    %v1017 = vmul.f32 1.0, %v1016
    %v1018 = vmul.f32 %v1017, 2.0
    %v1019 = vsub.f32 %v1018, 1.0
    %v1020 = vmul.f32 %v1015, %v914
    %v1021 = vmul.f32 %v1015, %v1019
    %1023 = vrot.lane.b32.xlu0 %v1021, 64
    %v1024 = vpop.permute.xlu0 %1023
    %v1026 = vadd.f32 %v1020, %v1024
    %v1027 = vtanh.pop %v1026
    %v1028 = vmul.f32 %v1017, %v1027
    %1030 = vrot.lane.b32.xlu0 %v1028, 64
    %v1031 = vpop.permute.xlu0 %1030
    %s1033 = scalar_lea.vmem [#allocation4], 32
    %1034 = vst.msk [vmem:[%s1033] sm:$0xff] %vm482, %v1031
    %s1035 = scalar_lea.vmem [#allocation2], 80
    %v1036 = vld [vmem:[%s1035] sm:$0xff]
    %v1037 = vld [vmem:[%s1035 + $0x8] sm:$0xff]
    %s1038 = scalar_lea.vmem [#allocation3], 32
    %v1039 = vld [vmem:[%s1038] sm:$0xff]
    %v1040 = vld [vmem:[%s1038 + $0x8] sm:$0xff]
    %v1041 = vadd.f32 %v1036, %v1039
    %v1042 = vadd.f32 %v1037, %v1040
    %v1043 = vsel %vm482, %v1031, 0
    %1045 = vmatprep.subr.mxu0 %v460
    %1046 = vmatpush1.msra.mxu0 %v459
    %1047 = vmatprep.subr.mxu0 %v462
    %1048 = vmatpush1.msra.mxu0 %v461
    %1049 = vmatprep.subr.mxu0 %v464
    %1050 = vmatpush1.msra.mxu0 %v463
    %1051 = vmatprep.subr.mxu0 %v466
    %1052 = vmatpush1.msra.mxu0 %v465
    %1053 = vmatprep.subr.mxu0 %v468
    %1054 = vmatpush1.msra.mxu0 %v467
    %1055 = vmatprep.subr.mxu0 %v470
    %1056 = vmatpush1.msra.mxu0 %v469
    %1057 = vmatprep.subr.mxu0 %v472
    %1058 = vmatpush1.msra.mxu0 %v471
    %1059 = vmatprep.subr.mxu0 %v474
    %1060 = vmatpush1.msra.mxu0 %v473
    %1061 = vmatprep.subr.mxu0 0.0
    %1062 = vmatpush1.msra.mxu0 0.0
    %1063 = vmatprep.subr.mxu0 0.0
    %1064 = vmatpush1.msra.mxu0 0.0
    %1065 = vmatprep.subr.mxu0 0.0
    %1066 = vmatpush1.msra.mxu0 0.0
    %1067 = vmatprep.subr.mxu0 0.0
    %1068 = vmatpush1.msra.mxu0 0.0
    %1069 = vmatprep.subr.mxu0 0.0
    %1070 = vmatpush1.msra.mxu0 0.0
    %1071 = vmatprep.subr.mxu0 0.0
    %1072 = vmatpush1.msra.mxu0 0.0
    %1073 = vmatprep.subr.mxu0 0.0
    %1074 = vmatpush1.msra.mxu0 0.0
    %1075 = vmatprep.subr.mxu0 0.0
    %1076 = vmatpush1.msra.mxu0 0.0
    %1077 = vmatprep.subr.mxu0 0.0
    %1078 = vmatpush1.msra.mxu0 0.0
    %1079 = vmatprep.subr.mxu0 0.0
    %1080 = vmatpush1.msra.mxu0 0.0
    %1081 = vmatprep.subr.mxu0 0.0
    %1082 = vmatpush1.msra.mxu0 0.0
    %1083 = vmatprep.subr.mxu0 0.0
    %1084 = vmatpush1.msra.mxu0 0.0
    %1085 = vmatprep.subr.mxu0 0.0
    %1086 = vmatpush1.msra.mxu0 0.0
    %1087 = vmatprep.subr.mxu0 0.0
    %1088 = vmatpush1.msra.mxu0 0.0
    %1089 = vmatprep.subr.mxu0 0.0
    %1090 = vmatpush1.msra.mxu0 0.0
    %1091 = vmatprep.subr.mxu0 0.0
    %1092 = vmatpush1.msra.mxu0 0.0
    %1093 = vmatprep.subr.mxu0 0.0
    %1094 = vmatpush1.msra.mxu0 0.0
    %1095 = vmatprep.subr.mxu0 0.0
    %1096 = vmatpush1.msra.mxu0 0.0
    %1097 = vmatprep.subr.mxu0 0.0
    %1098 = vmatpush1.msra.mxu0 0.0
    %1099 = vmatprep.subr.mxu0 0.0
    %1100 = vmatpush1.msra.mxu0 0.0
    %1101 = vmatprep.subr.mxu0 0.0
    %1102 = vmatpush1.msra.mxu0 0.0
    %1103 = vmatprep.subr.mxu0 0.0
    %1104 = vmatpush1.msra.mxu0 0.0
    %1105 = vmatprep.subr.mxu0 0.0
    %1106 = vmatpush1.msra.mxu0 0.0
    %1107 = vmatprep.subr.mxu0 0.0
    %1108 = vmatpush1.msra.mxu0 0.0
    %1109 = vmatprep.mubr.f32.mxu0 0.0
    %1110 = vmatmul.mubr.f32.gmra.mrb[0].mxu0 %v1043
    %v1111 = vpop.f32.mrb[0].mxu0
    %v1112 = vadd.f32 0.0, %v1111
    %v1113 = vpop.f32.mrb[0].mxu0
    %v1114 = vadd.f32 0.0, %v1113
    %1115 = vdwg.mxu0
    %v1116 = vadd.f32 %v1041, %v1112
    %v1117 = vadd.f32 %v1042, %v1114
    %v1118 = vxor.u32 %v1116, 2147483648
    %v1119 = vxor.u32 %v1117, 2147483648
    %v1120 = vmul.f32 %v1118, 1.442695
    %v1121 = vpow.pop %v1120
    %v1122 = vmul.f32 %v1119, 1.442695
    %v1123 = vpow.pop %v1122
    %v1124 = vadd.f32 %v1121, 1.0
    %v1125 = vadd.f32 %v1123, 1.0
    %v1126 = vrcp.pop %v1124
    %v1127 = vmul.f32 1.0, %v1126
    %v1128 = vrcp.pop %v1125
    %v1129 = vmul.f32 1.0, %v1128
    %v1130 = vmul.f32 %v1129, 2.0
    %v1131 = vsub.f32 %v1130, 1.0
    %v1132 = vmul.f32 %v1127, %v1026
    %v1133 = vmul.f32 %v1127, %v1131
    %1135 = vrot.lane.b32.xlu0 %v1133, 64
    %v1136 = vpop.permute.xlu0 %1135
    %v1138 = vadd.f32 %v1132, %v1136
    %v1139 = vtanh.pop %v1138
    %v1140 = vmul.f32 %v1129, %v1139
    %1142 = vrot.lane.b32.xlu0 %v1140, 64
    %v1143 = vpop.permute.xlu0 %1142
    %s1145 = scalar_lea.vmem [#allocation4], 40
    %1146 = vst.msk [vmem:[%s1145] sm:$0xff] %vm482, %v1143
    %s1147 = scalar_lea.vmem [#allocation2], 96
    %v1148 = vld [vmem:[%s1147] sm:$0xff]
    %v1149 = vld [vmem:[%s1147 + $0x8] sm:$0xff]
    %s1150 = scalar_lea.vmem [#allocation3], 16
    %v1151 = vld [vmem:[%s1150] sm:$0xff]
    %v1152 = vld [vmem:[%s1150 + $0x8] sm:$0xff]
    %v1153 = vadd.f32 %v1148, %v1151
    %v1154 = vadd.f32 %v1149, %v1152
    %v1155 = vsel %vm482, %v1143, 0
    %1157 = vmatprep.subr.mxu0 %v460
    %1158 = vmatpush1.msra.mxu0 %v459
    %1159 = vmatprep.subr.mxu0 %v462
    %1160 = vmatpush1.msra.mxu0 %v461
    %1161 = vmatprep.subr.mxu0 %v464
    %1162 = vmatpush1.msra.mxu0 %v463
    %1163 = vmatprep.subr.mxu0 %v466
    %1164 = vmatpush1.msra.mxu0 %v465
    %1165 = vmatprep.subr.mxu0 %v468
    %1166 = vmatpush1.msra.mxu0 %v467
    %1167 = vmatprep.subr.mxu0 %v470
    %1168 = vmatpush1.msra.mxu0 %v469
    %1169 = vmatprep.subr.mxu0 %v472
    %1170 = vmatpush1.msra.mxu0 %v471
    %1171 = vmatprep.subr.mxu0 %v474
    %1172 = vmatpush1.msra.mxu0 %v473
    %1173 = vmatprep.subr.mxu0 0.0
    %1174 = vmatpush1.msra.mxu0 0.0
    %1175 = vmatprep.subr.mxu0 0.0
    %1176 = vmatpush1.msra.mxu0 0.0
    %1177 = vmatprep.subr.mxu0 0.0
    %1178 = vmatpush1.msra.mxu0 0.0
    %1179 = vmatprep.subr.mxu0 0.0
    %1180 = vmatpush1.msra.mxu0 0.0
    %1181 = vmatprep.subr.mxu0 0.0
    %1182 = vmatpush1.msra.mxu0 0.0
    %1183 = vmatprep.subr.mxu0 0.0
    %1184 = vmatpush1.msra.mxu0 0.0
    %1185 = vmatprep.subr.mxu0 0.0
    %1186 = vmatpush1.msra.mxu0 0.0
    %1187 = vmatprep.subr.mxu0 0.0
    %1188 = vmatpush1.msra.mxu0 0.0
    %1189 = vmatprep.subr.mxu0 0.0
    %1190 = vmatpush1.msra.mxu0 0.0
    %1191 = vmatprep.subr.mxu0 0.0
    %1192 = vmatpush1.msra.mxu0 0.0
    %1193 = vmatprep.subr.mxu0 0.0
    %1194 = vmatpush1.msra.mxu0 0.0
    %1195 = vmatprep.subr.mxu0 0.0
    %1196 = vmatpush1.msra.mxu0 0.0
    %1197 = vmatprep.subr.mxu0 0.0
    %1198 = vmatpush1.msra.mxu0 0.0
    %1199 = vmatprep.subr.mxu0 0.0
    %1200 = vmatpush1.msra.mxu0 0.0
    %1201 = vmatprep.subr.mxu0 0.0
    %1202 = vmatpush1.msra.mxu0 0.0
    %1203 = vmatprep.subr.mxu0 0.0
    %1204 = vmatpush1.msra.mxu0 0.0
    %1205 = vmatprep.subr.mxu0 0.0
    %1206 = vmatpush1.msra.mxu0 0.0
    %1207 = vmatprep.subr.mxu0 0.0
    %1208 = vmatpush1.msra.mxu0 0.0
    %1209 = vmatprep.subr.mxu0 0.0
    %1210 = vmatpush1.msra.mxu0 0.0
    %1211 = vmatprep.subr.mxu0 0.0
    %1212 = vmatpush1.msra.mxu0 0.0
    %1213 = vmatprep.subr.mxu0 0.0
    %1214 = vmatpush1.msra.mxu0 0.0
    %1215 = vmatprep.subr.mxu0 0.0
    %1216 = vmatpush1.msra.mxu0 0.0
    %1217 = vmatprep.subr.mxu0 0.0
    %1218 = vmatpush1.msra.mxu0 0.0
    %1219 = vmatprep.subr.mxu0 0.0
    %1220 = vmatpush1.msra.mxu0 0.0
    %1221 = vmatprep.mubr.f32.mxu0 0.0
    %1222 = vmatmul.mubr.f32.gmra.mrb[0].mxu0 %v1155
    %v1223 = vpop.f32.mrb[0].mxu0
    %v1224 = vadd.f32 0.0, %v1223
    %v1225 = vpop.f32.mrb[0].mxu0
    %v1226 = vadd.f32 0.0, %v1225
    %1227 = vdwg.mxu0
    %v1228 = vadd.f32 %v1153, %v1224
    %v1229 = vadd.f32 %v1154, %v1226
    %v1230 = vxor.u32 %v1228, 2147483648
    %v1231 = vxor.u32 %v1229, 2147483648
    %v1232 = vmul.f32 %v1230, 1.442695
    %v1233 = vpow.pop %v1232
    %v1234 = vmul.f32 %v1231, 1.442695
    %v1235 = vpow.pop %v1234
    %v1236 = vadd.f32 %v1233, 1.0
    %v1237 = vadd.f32 %v1235, 1.0
    %v1238 = vrcp.pop %v1236
    %v1239 = vmul.f32 1.0, %v1238
    %v1240 = vrcp.pop %v1237
    %v1241 = vmul.f32 1.0, %v1240
    %v1242 = vmul.f32 %v1241, 2.0
    %v1243 = vsub.f32 %v1242, 1.0
    %v1244 = vmul.f32 %v1239, %v1138
    %v1245 = vmul.f32 %v1239, %v1243
    %1247 = vrot.lane.b32.xlu0 %v1245, 64
    %v1248 = vpop.permute.xlu0 %1247
    %v1250 = vadd.f32 %v1244, %v1248
    %v1251 = vtanh.pop %v1250
    %v1252 = vmul.f32 %v1241, %v1251
    %1254 = vrot.lane.b32.xlu0 %v1252, 64
    %v1255 = vpop.permute.xlu0 %1254
    %s1257 = scalar_lea.vmem [#allocation4], 48
    %1258 = vst.msk [vmem:[%s1257] sm:$0xff] %vm482, %v1255
    %s1259 = scalar_lea.vmem [#allocation2], 112
    %v1260 = vld [vmem:[%s1259] sm:$0xff]
    %v1261 = vld [vmem:[%s1259 + $0x8] sm:$0xff]
    %v1262 = vld [vmem:[#allocation3] sm:$0xff]
    %v1263 = vld [vmem:[#allocation3 + $0x8] sm:$0xff]
    %v1264 = vadd.f32 %v1260, %v1262
    %v1265 = vadd.f32 %v1261, %v1263
    %v1266 = vsel %vm482, %v1255, 0
    %1268 = vmatprep.subr.mxu0 %v460
    %1269 = vmatpush1.msra.mxu0 %v459
    %1270 = vmatprep.subr.mxu0 %v462
    %1271 = vmatpush1.msra.mxu0 %v461
    %1272 = vmatprep.subr.mxu0 %v464
    %1273 = vmatpush1.msra.mxu0 %v463
    %1274 = vmatprep.subr.mxu0 %v466
    %1275 = vmatpush1.msra.mxu0 %v465
    %1276 = vmatprep.subr.mxu0 %v468
    %1277 = vmatpush1.msra.mxu0 %v467
    %1278 = vmatprep.subr.mxu0 %v470
    %1279 = vmatpush1.msra.mxu0 %v469
    %1280 = vmatprep.subr.mxu0 %v472
    %1281 = vmatpush1.msra.mxu0 %v471
    %1282 = vmatprep.subr.mxu0 %v474
    %1283 = vmatpush1.msra.mxu0 %v473
    %1284 = vmatprep.subr.mxu0 0.0
    %1285 = vmatpush1.msra.mxu0 0.0
    %1286 = vmatprep.subr.mxu0 0.0
    %1287 = vmatpush1.msra.mxu0 0.0
    %1288 = vmatprep.subr.mxu0 0.0
    %1289 = vmatpush1.msra.mxu0 0.0
    %1290 = vmatprep.subr.mxu0 0.0
    %1291 = vmatpush1.msra.mxu0 0.0
    %1292 = vmatprep.subr.mxu0 0.0
    %1293 = vmatpush1.msra.mxu0 0.0
    %1294 = vmatprep.subr.mxu0 0.0
    %1295 = vmatpush1.msra.mxu0 0.0
    %1296 = vmatprep.subr.mxu0 0.0
    %1297 = vmatpush1.msra.mxu0 0.0
    %1298 = vmatprep.subr.mxu0 0.0
    %1299 = vmatpush1.msra.mxu0 0.0
    %1300 = vmatprep.subr.mxu0 0.0
    %1301 = vmatpush1.msra.mxu0 0.0
    %1302 = vmatprep.subr.mxu0 0.0
    %1303 = vmatpush1.msra.mxu0 0.0
    %1304 = vmatprep.subr.mxu0 0.0
    %1305 = vmatpush1.msra.mxu0 0.0
    %1306 = vmatprep.subr.mxu0 0.0
    %1307 = vmatpush1.msra.mxu0 0.0
    %1308 = vmatprep.subr.mxu0 0.0
    %1309 = vmatpush1.msra.mxu0 0.0
    %1310 = vmatprep.subr.mxu0 0.0
    %1311 = vmatpush1.msra.mxu0 0.0
    %1312 = vmatprep.subr.mxu0 0.0
    %1313 = vmatpush1.msra.mxu0 0.0
    %1314 = vmatprep.subr.mxu0 0.0
    %1315 = vmatpush1.msra.mxu0 0.0
    %1316 = vmatprep.subr.mxu0 0.0
    %1317 = vmatpush1.msra.mxu0 0.0
    %1318 = vmatprep.subr.mxu0 0.0
    %1319 = vmatpush1.msra.mxu0 0.0
    %1320 = vmatprep.subr.mxu0 0.0
    %1321 = vmatpush1.msra.mxu0 0.0
    %1322 = vmatprep.subr.mxu0 0.0
    %1323 = vmatpush1.msra.mxu0 0.0
    %1324 = vmatprep.subr.mxu0 0.0
    %1325 = vmatpush1.msra.mxu0 0.0
    %1326 = vmatprep.subr.mxu0 0.0
    %1327 = vmatpush1.msra.mxu0 0.0
    %1328 = vmatprep.subr.mxu0 0.0
    %1329 = vmatpush1.msra.mxu0 0.0
    %1330 = vmatprep.subr.mxu0 0.0
    %1331 = vmatpush1.msra.mxu0 0.0
    %1332 = vmatprep.mubr.f32.mxu0 0.0
    %1333 = vmatmul.mubr.f32.gmra.mrb[0].mxu0 %v1266
    %v1334 = vpop.f32.mrb[0].mxu0
    %v1335 = vadd.f32 0.0, %v1334
    %v1336 = vpop.f32.mrb[0].mxu0
    %v1337 = vadd.f32 0.0, %v1336
    %1338 = vdwg.mxu0
    %v1339 = vadd.f32 %v1264, %v1335
    %v1340 = vadd.f32 %v1265, %v1337
    %v1341 = vxor.u32 %v1339, 2147483648
    %v1342 = vxor.u32 %v1340, 2147483648
    %v1343 = vmul.f32 %v1341, 1.442695
    %v1344 = vpow.pop %v1343
    %v1345 = vmul.f32 %v1342, 1.442695
    %v1346 = vpow.pop %v1345
    %v1347 = vadd.f32 %v1344, 1.0
    %v1348 = vadd.f32 %v1346, 1.0
    %v1349 = vrcp.pop %v1347
    %v1350 = vmul.f32 1.0, %v1349
    %v1351 = vrcp.pop %v1348
    %v1352 = vmul.f32 1.0, %v1351
    %v1353 = vmul.f32 %v1352, 2.0
    %v1354 = vsub.f32 %v1353, 1.0
    %v1355 = vmul.f32 %v1350, %v1250
    %v1356 = vmul.f32 %v1350, %v1354
    %1358 = vrot.lane.b32.xlu0 %v1356, 64
    %v1359 = vpop.permute.xlu0 %1358
    %v1361 = vadd.f32 %v1355, %v1359
    %v1362 = vtanh.pop %v1361
    %v1363 = vmul.f32 %v1352, %v1362
    %1365 = vrot.lane.b32.xlu0 %v1363, 64
    %v1366 = vpop.permute.xlu0 %1365
    %s1368 = scalar_lea.vmem [#allocation4], 56
    %1369 = vst.msk [vmem:[%s1368] sm:$0xff] %vm482, %v1366
    %v1370 = vld [vmem:[#allocation4] sm:$0xff]
    %v1371 = vld [vmem:[#allocation4 + $0x8] sm:$0xff]
    %v1372 = vld [vmem:[#allocation4 + $0x10] sm:$0xff]
    %v1373 = vld [vmem:[#allocation4 + $0x18] sm:$0xff]
    %v1374 = vld [vmem:[#allocation4 + $0x20] sm:$0xff]
    %v1375 = vld [vmem:[#allocation4 + $0x28] sm:$0xff]
    %v1376 = vld [vmem:[#allocation4 + $0x30] sm:$0xff]
    %v1377 = vld [vmem:[#allocation4 + $0x38] sm:$0xff]
    %v1378 = vld [vmem:[#allocation13] sm:$0xff]
    %v1379 = vld [vmem:[#allocation13 + $0x8] sm:$0xff]
    %v1380 = vld [vmem:[#allocation13 + $0x10] sm:$0xff]
    %v1381 = vld [vmem:[#allocation13 + $0x18] sm:$0xff]
    %v1382 = vld [vmem:[#allocation13 + $0x20] sm:$0xff]
    %v1383 = vld [vmem:[#allocation13 + $0x28] sm:$0xff]
    %v1384 = vld [vmem:[#allocation13 + $0x30] sm:$0xff]
    %v1385 = vld [vmem:[#allocation13 + $0x38] sm:$0xff]
    %v1386 = vld [vmem:[#allocation13 + $0x40] sm:$0xff]
    %v1387 = vld [vmem:[#allocation13 + $0x48] sm:$0xff]
    %v1388 = vld [vmem:[#allocation13 + $0x50] sm:$0xff]
    %v1389 = vld [vmem:[#allocation13 + $0x58] sm:$0xff]
    %v1390 = vld [vmem:[#allocation13 + $0x60] sm:$0xff]
    %v1391 = vld [vmem:[#allocation13 + $0x68] sm:$0xff]
    %v1392 = vld [vmem:[#allocation13 + $0x70] sm:$0xff]
    %v1393 = vld [vmem:[#allocation13 + $0x78] sm:$0xff]
    %v1394 = vld [vmem:[%s8] sm:$0x3]
    %v1396 = vlaneseq
    %v1397 = vshrl.u32 %v1396, 7
    %v1398 = vsub.s32 0, %v1397
    %v1399 = vrot.slane %v1394, %v1398
    %v1400 = vlaneseq
    %v1401 = vshrl.u32 %v1400, 7
    %v1402 = vsub.s32 1, %v1401
    %v1403 = vrot.slane %v1394, %v1402
    %v1407 = vsel %vm482, %v1370, 0
    %v1410 = vsel %vm482, %v1371, 0
    %v1413 = vsel %vm482, %v1372, 0
    %v1416 = vsel %vm482, %v1373, 0
    %v1419 = vsel %vm482, %v1374, 0
    %v1422 = vsel %vm482, %v1375, 0
    %v1425 = vsel %vm482, %v1376, 0
    %v1428 = vsel %vm482, %v1377, 0
    %1430 = vmatprep.subr.mxu0 %v1379
    %1431 = vmatpush1.msra.mxu0 %v1378
    %1432 = vmatprep.subr.mxu0 %v1381
    %1433 = vmatpush1.msra.mxu0 %v1380
    %1434 = vmatprep.subr.mxu0 %v1383
    %1435 = vmatpush1.msra.mxu0 %v1382
    %1436 = vmatprep.subr.mxu0 %v1385
    %1437 = vmatpush1.msra.mxu0 %v1384
    %1438 = vmatprep.subr.mxu0 %v1387
    %1439 = vmatpush1.msra.mxu0 %v1386
    %1440 = vmatprep.subr.mxu0 %v1389
    %1441 = vmatpush1.msra.mxu0 %v1388
    %1442 = vmatprep.subr.mxu0 %v1391
    %1443 = vmatpush1.msra.mxu0 %v1390
    %1444 = vmatprep.subr.mxu0 %v1393
    %1445 = vmatpush1.msra.mxu0 %v1392
    %1446 = vmatprep.subr.mxu0 0.0
    %1447 = vmatpush1.msra.mxu0 0.0
    %1448 = vmatprep.subr.mxu0 0.0
    %1449 = vmatpush1.msra.mxu0 0.0
    %1450 = vmatprep.subr.mxu0 0.0
    %1451 = vmatpush1.msra.mxu0 0.0
    %1452 = vmatprep.subr.mxu0 0.0
    %1453 = vmatpush1.msra.mxu0 0.0
    %1454 = vmatprep.subr.mxu0 0.0
    %1455 = vmatpush1.msra.mxu0 0.0
    %1456 = vmatprep.subr.mxu0 0.0
    %1457 = vmatpush1.msra.mxu0 0.0
    %1458 = vmatprep.subr.mxu0 0.0
    %1459 = vmatpush1.msra.mxu0 0.0
    %1460 = vmatprep.subr.mxu0 0.0
    %1461 = vmatpush1.msra.mxu0 0.0
    %1462 = vmatprep.subr.mxu0 0.0
    %1463 = vmatpush1.msra.mxu0 0.0
    %1464 = vmatprep.subr.mxu0 0.0
    %1465 = vmatpush1.msra.mxu0 0.0
    %1466 = vmatprep.subr.mxu0 0.0
    %1467 = vmatpush1.msra.mxu0 0.0
    %1468 = vmatprep.subr.mxu0 0.0
    %1469 = vmatpush1.msra.mxu0 0.0
    %1470 = vmatprep.subr.mxu0 0.0
    %1471 = vmatpush1.msra.mxu0 0.0
    %1472 = vmatprep.subr.mxu0 0.0
    %1473 = vmatpush1.msra.mxu0 0.0
    %1474 = vmatprep.subr.mxu0 0.0
    %1475 = vmatpush1.msra.mxu0 0.0
    %1476 = vmatprep.subr.mxu0 0.0
    %1477 = vmatpush1.msra.mxu0 0.0
    %1478 = vmatprep.subr.mxu0 0.0
    %1479 = vmatpush1.msra.mxu0 0.0
    %1480 = vmatprep.subr.mxu0 0.0
    %1481 = vmatpush1.msra.mxu0 0.0
    %1482 = vmatprep.subr.mxu0 0.0
    %1483 = vmatpush1.msra.mxu0 0.0
    %1484 = vmatprep.subr.mxu0 0.0
    %1485 = vmatpush1.msra.mxu0 0.0
    %1486 = vmatprep.subr.mxu0 0.0
    %1487 = vmatpush1.msra.mxu0 0.0
    %1488 = vmatprep.subr.mxu0 0.0
    %1489 = vmatpush1.msra.mxu0 0.0
    %1490 = vmatprep.subr.mxu0 0.0
    %1491 = vmatpush1.msra.mxu0 0.0
    %1492 = vmatprep.subr.mxu0 0.0
    %1493 = vmatpush1.msra.mxu0 0.0
    %1494 = vmatprep.mubr.f32.mxu0 0.0
    %1495 = vmatmul.mubr.f32.gmra.mrb[0].mxu0 %v1407
    %v1496 = vpop.f32.mrb[0].mxu0
    %v1497 = vadd.f32 %v1399, %v1496
    %v1498 = vpop.f32.mrb[0].mxu0
    %v1499 = vadd.f32 %v1403, %v1498
    %1500 = vmatprep.mubr.f32.mxu0 0.0
    %1501 = vmatmul.mubr.f32.gmra.mrb[0].mxu0 %v1410
    %v1502 = vpop.f32.mrb[0].mxu0
    %v1503 = vadd.f32 %v1399, %v1502
    %v1504 = vpop.f32.mrb[0].mxu0
    %v1505 = vadd.f32 %v1403, %v1504
    %1506 = vmatprep.mubr.f32.mxu0 0.0
    %1507 = vmatmul.mubr.f32.gmra.mrb[0].mxu0 %v1413
    %v1508 = vpop.f32.mrb[0].mxu0
    %v1509 = vadd.f32 %v1399, %v1508
    %v1510 = vpop.f32.mrb[0].mxu0
    %v1511 = vadd.f32 %v1403, %v1510
    %1512 = vmatprep.mubr.f32.mxu0 0.0
    %1513 = vmatmul.mubr.f32.gmra.mrb[0].mxu0 %v1416
    %v1514 = vpop.f32.mrb[0].mxu0
    %v1515 = vadd.f32 %v1399, %v1514
    %v1516 = vpop.f32.mrb[0].mxu0
    %v1517 = vadd.f32 %v1403, %v1516
    %1518 = vmatprep.mubr.f32.mxu0 0.0
    %1519 = vmatmul.mubr.f32.gmra.mrb[0].mxu0 %v1419
    %v1520 = vpop.f32.mrb[0].mxu0
    %v1521 = vadd.f32 %v1399, %v1520
    %v1522 = vpop.f32.mrb[0].mxu0
    %v1523 = vadd.f32 %v1403, %v1522
    %1524 = vmatprep.mubr.f32.mxu0 0.0
    %1525 = vmatmul.mubr.f32.gmra.mrb[0].mxu0 %v1422
    %v1526 = vpop.f32.mrb[0].mxu0
    %v1527 = vadd.f32 %v1399, %v1526
    %v1528 = vpop.f32.mrb[0].mxu0
    %v1529 = vadd.f32 %v1403, %v1528
    %1530 = vmatprep.mubr.f32.mxu0 0.0
    %1531 = vmatmul.mubr.f32.gmra.mrb[0].mxu0 %v1425
    %v1532 = vpop.f32.mrb[0].mxu0
    %v1533 = vadd.f32 %v1399, %v1532
    %v1534 = vpop.f32.mrb[0].mxu0
    %v1535 = vadd.f32 %v1403, %v1534
    %1536 = vmatprep.mubr.f32.mxu0 0.0
    %1537 = vmatmul.mubr.f32.gmra.mrb[0].mxu0 %v1428
    %v1538 = vpop.f32.mrb[0].mxu0
    %v1539 = vadd.f32 %v1399, %v1538
    %v1540 = vpop.f32.mrb[0].mxu0
    %v1541 = vadd.f32 %v1403, %v1540
    %1542 = vdwg.mxu0
    %1543 = vst [vmem:[#allocation2] sm:$0xff] %v1497
    %1544 = vst [vmem:[#allocation2 + $0x8] sm:$0xff] %v1499
    %1545 = vst [vmem:[#allocation2 + $0x10] sm:$0xff] %v1503
    %1546 = vst [vmem:[#allocation2 + $0x18] sm:$0xff] %v1505
    %1547 = vst [vmem:[#allocation2 + $0x20] sm:$0xff] %v1509
    %1548 = vst [vmem:[#allocation2 + $0x28] sm:$0xff] %v1511
    %1549 = vst [vmem:[#allocation2 + $0x30] sm:$0xff] %v1515
    %1550 = vst [vmem:[#allocation2 + $0x38] sm:$0xff] %v1517
    %1551 = vst [vmem:[#allocation2 + $0x40] sm:$0xff] %v1521
    %1552 = vst [vmem:[#allocation2 + $0x48] sm:$0xff] %v1523
    %1553 = vst [vmem:[#allocation2 + $0x50] sm:$0xff] %v1527
    %1554 = vst [vmem:[#allocation2 + $0x58] sm:$0xff] %v1529
    %1555 = vst [vmem:[#allocation2 + $0x60] sm:$0xff] %v1533
    %1556 = vst [vmem:[#allocation2 + $0x68] sm:$0xff] %v1535
    %1557 = vst [vmem:[#allocation2 + $0x70] sm:$0xff] %v1539
    %1558 = vst [vmem:[#allocation2 + $0x78] sm:$0xff] %v1541
    %v1559 = vld [vmem:[#allocation14] sm:$0xff]
    %v1560 = vld [vmem:[#allocation14 + $0x8] sm:$0xff]
    %v1561 = vld [vmem:[#allocation14 + $0x10] sm:$0xff]
    %v1562 = vld [vmem:[#allocation14 + $0x18] sm:$0xff]
    %v1563 = vld [vmem:[#allocation14 + $0x20] sm:$0xff]
    %v1564 = vld [vmem:[#allocation14 + $0x28] sm:$0xff]
    %v1565 = vld [vmem:[#allocation14 + $0x30] sm:$0xff]
    %v1566 = vld [vmem:[#allocation14 + $0x38] sm:$0xff]
    %v1567 = vld [vmem:[#allocation14 + $0x40] sm:$0xff]
    %v1568 = vld [vmem:[#allocation14 + $0x48] sm:$0xff]
    %v1569 = vld [vmem:[#allocation14 + $0x50] sm:$0xff]
    %v1570 = vld [vmem:[#allocation14 + $0x58] sm:$0xff]
    %v1571 = vld [vmem:[#allocation14 + $0x60] sm:$0xff]
    %v1572 = vld [vmem:[#allocation14 + $0x68] sm:$0xff]
    %v1573 = vld [vmem:[#allocation14 + $0x70] sm:$0xff]
    %v1574 = vld [vmem:[#allocation14 + $0x78] sm:$0xff]
    %1575 = vmatprep.subr.mxu0 %v1560
    %1576 = vmatpush1.msra.mxu0 %v1559
    %1577 = vmatprep.subr.mxu0 %v1562
    %1578 = vmatpush1.msra.mxu0 %v1561
    %1579 = vmatprep.subr.mxu0 %v1564
    %1580 = vmatpush1.msra.mxu0 %v1563
    %1581 = vmatprep.subr.mxu0 %v1566
    %1582 = vmatpush1.msra.mxu0 %v1565
    %1583 = vmatprep.subr.mxu0 %v1568
    %1584 = vmatpush1.msra.mxu0 %v1567
    %1585 = vmatprep.subr.mxu0 %v1570
    %1586 = vmatpush1.msra.mxu0 %v1569
    %1587 = vmatprep.subr.mxu0 %v1572
    %1588 = vmatpush1.msra.mxu0 %v1571
    %1589 = vmatprep.subr.mxu0 %v1574
    %1590 = vmatpush1.msra.mxu0 %v1573
    %1591 = vmatprep.subr.mxu0 0.0
    %1592 = vmatpush1.msra.mxu0 0.0
    %1593 = vmatprep.subr.mxu0 0.0
    %1594 = vmatpush1.msra.mxu0 0.0
    %1595 = vmatprep.subr.mxu0 0.0
    %1596 = vmatpush1.msra.mxu0 0.0
    %1597 = vmatprep.subr.mxu0 0.0
    %1598 = vmatpush1.msra.mxu0 0.0
    %1599 = vmatprep.subr.mxu0 0.0
    %1600 = vmatpush1.msra.mxu0 0.0
    %1601 = vmatprep.subr.mxu0 0.0
    %1602 = vmatpush1.msra.mxu0 0.0
    %1603 = vmatprep.subr.mxu0 0.0
    %1604 = vmatpush1.msra.mxu0 0.0
    %1605 = vmatprep.subr.mxu0 0.0
    %1606 = vmatpush1.msra.mxu0 0.0
    %1607 = vmatprep.subr.mxu0 0.0
    %1608 = vmatpush1.msra.mxu0 0.0
    %1609 = vmatprep.subr.mxu0 0.0
    %1610 = vmatpush1.msra.mxu0 0.0
    %1611 = vmatprep.subr.mxu0 0.0
    %1612 = vmatpush1.msra.mxu0 0.0
    %1613 = vmatprep.subr.mxu0 0.0
    %1614 = vmatpush1.msra.mxu0 0.0
    %1615 = vmatprep.subr.mxu0 0.0
    %1616 = vmatpush1.msra.mxu0 0.0
    %1617 = vmatprep.subr.mxu0 0.0
    %1618 = vmatpush1.msra.mxu0 0.0
    %1619 = vmatprep.subr.mxu0 0.0
    %1620 = vmatpush1.msra.mxu0 0.0
    %1621 = vmatprep.subr.mxu0 0.0
    %1622 = vmatpush1.msra.mxu0 0.0
    %1623 = vmatprep.subr.mxu0 0.0
    %1624 = vmatpush1.msra.mxu0 0.0
    %1625 = vmatprep.subr.mxu0 0.0
    %1626 = vmatpush1.msra.mxu0 0.0
    %1627 = vmatprep.subr.mxu0 0.0
    %1628 = vmatpush1.msra.mxu0 0.0
    %1629 = vmatprep.subr.mxu0 0.0
    %1630 = vmatpush1.msra.mxu0 0.0
    %1631 = vmatprep.subr.mxu0 0.0
    %1632 = vmatpush1.msra.mxu0 0.0
    %1633 = vmatprep.subr.mxu0 0.0
    %1634 = vmatpush1.msra.mxu0 0.0
    %1635 = vmatprep.subr.mxu0 0.0
    %1636 = vmatpush1.msra.mxu0 0.0
    %1637 = vmatprep.subr.mxu0 0.0
    %1638 = vmatpush1.msra.mxu0 0.0
    %1639 = vmatprep.mubr.f32.mxu0 0.0
    %1640 = vmatmul.mubr.f32.gmra.mrb[0].mxu0 %v1407
    %v1641 = vpop.f32.mrb[0].mxu0
    %v1642 = vadd.f32 0.0, %v1641
    %v1643 = vpop.f32.mrb[0].mxu0
    %v1644 = vadd.f32 0.0, %v1643
    %1645 = vmatprep.mubr.f32.mxu0 0.0
    %1646 = vmatmul.mubr.f32.gmra.mrb[0].mxu0 %v1410
    %v1647 = vpop.f32.mrb[0].mxu0
    %v1648 = vadd.f32 0.0, %v1647
    %v1649 = vpop.f32.mrb[0].mxu0
    %v1650 = vadd.f32 0.0, %v1649
    %1651 = vmatprep.mubr.f32.mxu0 0.0
    %1652 = vmatmul.mubr.f32.gmra.mrb[0].mxu0 %v1413
    %v1653 = vpop.f32.mrb[0].mxu0
    %v1654 = vadd.f32 0.0, %v1653
    %v1655 = vpop.f32.mrb[0].mxu0
    %v1656 = vadd.f32 0.0, %v1655
    %1657 = vmatprep.mubr.f32.mxu0 0.0
    %1658 = vmatmul.mubr.f32.gmra.mrb[0].mxu0 %v1416
    %v1659 = vpop.f32.mrb[0].mxu0
    %v1660 = vadd.f32 0.0, %v1659
    %v1661 = vpop.f32.mrb[0].mxu0
    %v1662 = vadd.f32 0.0, %v1661
    %1663 = vmatprep.mubr.f32.mxu0 0.0
    %1664 = vmatmul.mubr.f32.gmra.mrb[0].mxu0 %v1419
    %v1665 = vpop.f32.mrb[0].mxu0
    %v1666 = vadd.f32 0.0, %v1665
    %v1667 = vpop.f32.mrb[0].mxu0
    %v1668 = vadd.f32 0.0, %v1667
    %1669 = vmatprep.mubr.f32.mxu0 0.0
    %1670 = vmatmul.mubr.f32.gmra.mrb[0].mxu0 %v1422
    %v1671 = vpop.f32.mrb[0].mxu0
    %v1672 = vadd.f32 0.0, %v1671
    %v1673 = vpop.f32.mrb[0].mxu0
    %v1674 = vadd.f32 0.0, %v1673
    %1675 = vmatprep.mubr.f32.mxu0 0.0
    %1676 = vmatmul.mubr.f32.gmra.mrb[0].mxu0 %v1425
    %v1677 = vpop.f32.mrb[0].mxu0
    %v1678 = vadd.f32 0.0, %v1677
    %v1679 = vpop.f32.mrb[0].mxu0
    %v1680 = vadd.f32 0.0, %v1679
    %1681 = vmatprep.mubr.f32.mxu0 0.0
    %1682 = vmatmul.mubr.f32.gmra.mrb[0].mxu0 %v1428
    %v1683 = vpop.f32.mrb[0].mxu0
    %v1684 = vadd.f32 0.0, %v1683
    %v1685 = vpop.f32.mrb[0].mxu0
    %v1686 = vadd.f32 0.0, %v1685
    %1687 = vdwg.mxu0
    %1688 = vst [vmem:[#allocation3] sm:$0xff] %v1642
    %1689 = vst [vmem:[#allocation3 + $0x8] sm:$0xff] %v1644
    %1690 = vst [vmem:[#allocation3 + $0x10] sm:$0xff] %v1648
    %1691 = vst [vmem:[#allocation3 + $0x18] sm:$0xff] %v1650
    %1692 = vst [vmem:[#allocation3 + $0x20] sm:$0xff] %v1654
    %1693 = vst [vmem:[#allocation3 + $0x28] sm:$0xff] %v1656
    %1694 = vst [vmem:[#allocation3 + $0x30] sm:$0xff] %v1660
    %1695 = vst [vmem:[#allocation3 + $0x38] sm:$0xff] %v1662
    %1696 = vst [vmem:[#allocation3 + $0x40] sm:$0xff] %v1666
    %1697 = vst [vmem:[#allocation3 + $0x48] sm:$0xff] %v1668
    %1698 = vst [vmem:[#allocation3 + $0x50] sm:$0xff] %v1672
    %1699 = vst [vmem:[#allocation3 + $0x58] sm:$0xff] %v1674
    %1700 = vst [vmem:[#allocation3 + $0x60] sm:$0xff] %v1678
    %1701 = vst [vmem:[#allocation3 + $0x68] sm:$0xff] %v1680
    %1702 = vst [vmem:[#allocation3 + $0x70] sm:$0xff] %v1684
    %1703 = vst [vmem:[#allocation3 + $0x78] sm:$0xff] %v1686
    %v1704 = vld [vmem:[#allocation16] sm:$0xff]
    %v1705 = vld [vmem:[#allocation16 + $0x8] sm:$0xff]
    %v1706 = vld [vmem:[#allocation16 + $0x10] sm:$0xff]
    %v1707 = vld [vmem:[#allocation16 + $0x18] sm:$0xff]
    %v1708 = vld [vmem:[#allocation16 + $0x20] sm:$0xff]
    %v1709 = vld [vmem:[#allocation16 + $0x28] sm:$0xff]
    %v1710 = vld [vmem:[#allocation16 + $0x30] sm:$0xff]
    %v1711 = vld [vmem:[#allocation16 + $0x38] sm:$0xff]
    %v1712 = vld [vmem:[#allocation16 + $0x40] sm:$0xff]
    %v1713 = vld [vmem:[#allocation16 + $0x48] sm:$0xff]
    %v1714 = vld [vmem:[#allocation16 + $0x50] sm:$0xff]
    %v1715 = vld [vmem:[#allocation16 + $0x58] sm:$0xff]
    %v1716 = vld [vmem:[#allocation16 + $0x60] sm:$0xff]
    %v1717 = vld [vmem:[#allocation16 + $0x68] sm:$0xff]
    %v1718 = vld [vmem:[#allocation16 + $0x70] sm:$0xff]
    %v1719 = vld [vmem:[#allocation16 + $0x78] sm:$0xff]
    %v1720 = vld [vmem:[#allocation2] sm:$0xff]
    %v1721 = vld [vmem:[#allocation2 + $0x8] sm:$0xff]
    %v1722 = vld [vmem:[%s477] sm:$0xff]
    %v1723 = vld [vmem:[%s477 + $0x8] sm:$0xff]
    %v1724 = vadd.f32 %v1720, %v1722
    %v1725 = vadd.f32 %v1721, %v1723
    %1726 = vmatprep.subr.mxu0 %v1705
    %1727 = vmatpush1.msra.mxu0 %v1704
    %1728 = vmatprep.subr.mxu0 %v1707
    %1729 = vmatpush1.msra.mxu0 %v1706
    %1730 = vmatprep.subr.mxu0 %v1709
    %1731 = vmatpush1.msra.mxu0 %v1708
    %1732 = vmatprep.subr.mxu0 %v1711
    %1733 = vmatpush1.msra.mxu0 %v1710
    %1734 = vmatprep.subr.mxu0 %v1713
    %1735 = vmatpush1.msra.mxu0 %v1712
    %1736 = vmatprep.subr.mxu0 %v1715
    %1737 = vmatpush1.msra.mxu0 %v1714
    %1738 = vmatprep.subr.mxu0 %v1717
    %1739 = vmatpush1.msra.mxu0 %v1716
    %1740 = vmatprep.subr.mxu0 %v1719
    %1741 = vmatpush1.msra.mxu0 %v1718
    %1742 = vmatprep.subr.mxu0 0.0
    %1743 = vmatpush1.msra.mxu0 0.0
    %1744 = vmatprep.subr.mxu0 0.0
    %1745 = vmatpush1.msra.mxu0 0.0
    %1746 = vmatprep.subr.mxu0 0.0
    %1747 = vmatpush1.msra.mxu0 0.0
    %1748 = vmatprep.subr.mxu0 0.0
    %1749 = vmatpush1.msra.mxu0 0.0
    %1750 = vmatprep.subr.mxu0 0.0
    %1751 = vmatpush1.msra.mxu0 0.0
    %1752 = vmatprep.subr.mxu0 0.0
    %1753 = vmatpush1.msra.mxu0 0.0
    %1754 = vmatprep.subr.mxu0 0.0
    %1755 = vmatpush1.msra.mxu0 0.0
    %1756 = vmatprep.subr.mxu0 0.0
    %1757 = vmatpush1.msra.mxu0 0.0
    %1758 = vmatprep.subr.mxu0 0.0
    %1759 = vmatpush1.msra.mxu0 0.0
    %1760 = vmatprep.subr.mxu0 0.0
    %1761 = vmatpush1.msra.mxu0 0.0
    %1762 = vmatprep.subr.mxu0 0.0
    %1763 = vmatpush1.msra.mxu0 0.0
    %1764 = vmatprep.subr.mxu0 0.0
    %1765 = vmatpush1.msra.mxu0 0.0
    %1766 = vmatprep.subr.mxu0 0.0
    %1767 = vmatpush1.msra.mxu0 0.0
    %1768 = vmatprep.subr.mxu0 0.0
    %1769 = vmatpush1.msra.mxu0 0.0
    %1770 = vmatprep.subr.mxu0 0.0
    %1771 = vmatpush1.msra.mxu0 0.0
    %1772 = vmatprep.subr.mxu0 0.0
    %1773 = vmatpush1.msra.mxu0 0.0
    %1774 = vmatprep.subr.mxu0 0.0
    %1775 = vmatpush1.msra.mxu0 0.0
    %1776 = vmatprep.subr.mxu0 0.0
    %1777 = vmatpush1.msra.mxu0 0.0
    %1778 = vmatprep.subr.mxu0 0.0
    %1779 = vmatpush1.msra.mxu0 0.0
    %1780 = vmatprep.subr.mxu0 0.0
    %1781 = vmatpush1.msra.mxu0 0.0
    %1782 = vmatprep.subr.mxu0 0.0
    %1783 = vmatpush1.msra.mxu0 0.0
    %1784 = vmatprep.subr.mxu0 0.0
    %1785 = vmatpush1.msra.mxu0 0.0
    %1786 = vmatprep.subr.mxu0 0.0
    %1787 = vmatpush1.msra.mxu0 0.0
    %1788 = vmatprep.subr.mxu0 0.0
    %1789 = vmatpush1.msra.mxu0 0.0
    %1790 = vmatprep.mubr.f32.mxu0 0.0
    %1791 = vmatmul.mubr.f32.gmra.mrb[0].mxu0 %v484
    %v1792 = vpop.f32.mrb[0].mxu0
    %v1793 = vadd.f32 0.0, %v1792
    %v1794 = vpop.f32.mrb[0].mxu0
    %v1795 = vadd.f32 0.0, %v1794
    %1796 = vdwg.mxu0
    %v1797 = vadd.f32 %v1724, %v1793
    %v1798 = vadd.f32 %v1725, %v1795
    %v1799 = vxor.u32 %v1797, 2147483648
    %v1800 = vxor.u32 %v1798, 2147483648
    %v1801 = vmul.f32 %v1799, 1.442695
    %v1802 = vpow.pop %v1801
    %v1803 = vmul.f32 %v1800, 1.442695
    %v1804 = vpow.pop %v1803
    %v1805 = vadd.f32 %v1802, 1.0
    %v1806 = vadd.f32 %v1804, 1.0
    %v1807 = vrcp.pop %v1805
    %v1808 = vmul.f32 1.0, %v1807
    %v1809 = vrcp.pop %v1806
    %v1810 = vmul.f32 1.0, %v1809
    %v1811 = vmul.f32 %v1810, 2.0
    %v1812 = vsub.f32 %v1811, 1.0
    %v1813 = vmul.f32 %v1808, 0.0
    %v1814 = vmul.f32 %v1808, %v1812
    %1816 = vrot.lane.b32.xlu0 %v1814, 64
    %v1817 = vpop.permute.xlu0 %1816
    %v1819 = vadd.f32 %v1813, %v1817
    %v1820 = vtanh.pop %v1819
    %v1821 = vmul.f32 %v1810, %v1820
    %v1822 = vld [vmem:[%s587] sm:$0xff]
    %v1823 = vld [vmem:[%s587 + $0x8] sm:$0xff]
    %v1824 = vld [vmem:[%s590] sm:$0xff]
    %v1825 = vld [vmem:[%s590 + $0x8] sm:$0xff]
    %v1826 = vadd.f32 %v1822, %v1824
    %v1827 = vadd.f32 %v1823, %v1825
    %1829 = vrot.lane.b32.xlu0 %v1821, 64
    %v1830 = vpop.permute.xlu0 %1829
    %v1831 = vsel %vm482, %v1830, 0
    %1833 = vmatprep.subr.mxu0 %v1705
    %1834 = vmatpush1.msra.mxu0 %v1704
    %1835 = vmatprep.subr.mxu0 %v1707
    %1836 = vmatpush1.msra.mxu0 %v1706
    %1837 = vmatprep.subr.mxu0 %v1709
    %1838 = vmatpush1.msra.mxu0 %v1708
    %1839 = vmatprep.subr.mxu0 %v1711
    %1840 = vmatpush1.msra.mxu0 %v1710
    %1841 = vmatprep.subr.mxu0 %v1713
    %1842 = vmatpush1.msra.mxu0 %v1712
    %1843 = vmatprep.subr.mxu0 %v1715
    %1844 = vmatpush1.msra.mxu0 %v1714
    %1845 = vmatprep.subr.mxu0 %v1717
    %1846 = vmatpush1.msra.mxu0 %v1716
    %1847 = vmatprep.subr.mxu0 %v1719
    %1848 = vmatpush1.msra.mxu0 %v1718
    %1849 = vmatprep.subr.mxu0 0.0
    %1850 = vmatpush1.msra.mxu0 0.0
    %1851 = vmatprep.subr.mxu0 0.0
    %1852 = vmatpush1.msra.mxu0 0.0
    %1853 = vmatprep.subr.mxu0 0.0
    %1854 = vmatpush1.msra.mxu0 0.0
    %1855 = vmatprep.subr.mxu0 0.0
    %1856 = vmatpush1.msra.mxu0 0.0
    %1857 = vmatprep.subr.mxu0 0.0
    %1858 = vmatpush1.msra.mxu0 0.0
    %1859 = vmatprep.subr.mxu0 0.0
    %1860 = vmatpush1.msra.mxu0 0.0
    %1861 = vmatprep.subr.mxu0 0.0
    %1862 = vmatpush1.msra.mxu0 0.0
    %1863 = vmatprep.subr.mxu0 0.0
    %1864 = vmatpush1.msra.mxu0 0.0
    %1865 = vmatprep.subr.mxu0 0.0
    %1866 = vmatpush1.msra.mxu0 0.0
    %1867 = vmatprep.subr.mxu0 0.0
    %1868 = vmatpush1.msra.mxu0 0.0
    %1869 = vmatprep.subr.mxu0 0.0
    %1870 = vmatpush1.msra.mxu0 0.0
    %1871 = vmatprep.subr.mxu0 0.0
    %1872 = vmatpush1.msra.mxu0 0.0
    %1873 = vmatprep.subr.mxu0 0.0
    %1874 = vmatpush1.msra.mxu0 0.0
    %1875 = vmatprep.subr.mxu0 0.0
    %1876 = vmatpush1.msra.mxu0 0.0
    %1877 = vmatprep.subr.mxu0 0.0
    %1878 = vmatpush1.msra.mxu0 0.0
    %1879 = vmatprep.subr.mxu0 0.0
    %1880 = vmatpush1.msra.mxu0 0.0
    %1881 = vmatprep.subr.mxu0 0.0
    %1882 = vmatpush1.msra.mxu0 0.0
    %1883 = vmatprep.subr.mxu0 0.0
    %1884 = vmatpush1.msra.mxu0 0.0
    %1885 = vmatprep.subr.mxu0 0.0
    %1886 = vmatpush1.msra.mxu0 0.0
    %1887 = vmatprep.subr.mxu0 0.0
    %1888 = vmatpush1.msra.mxu0 0.0
    %1889 = vmatprep.subr.mxu0 0.0
    %1890 = vmatpush1.msra.mxu0 0.0
    %1891 = vmatprep.subr.mxu0 0.0
    %1892 = vmatpush1.msra.mxu0 0.0
    %1893 = vmatprep.subr.mxu0 0.0
    %1894 = vmatpush1.msra.mxu0 0.0
    %1895 = vmatprep.subr.mxu0 0.0
    %1896 = vmatpush1.msra.mxu0 0.0
    %1897 = vmatprep.mubr.f32.mxu0 0.0
    %1898 = vmatmul.mubr.f32.gmra.mrb[0].mxu0 %v1831
    %v1899 = vpop.f32.mrb[0].mxu0
    %v1900 = vadd.f32 0.0, %v1899
    %v1901 = vpop.f32.mrb[0].mxu0
    %v1902 = vadd.f32 0.0, %v1901
    %1903 = vdwg.mxu0
    %v1904 = vadd.f32 %v1826, %v1900
    %v1905 = vadd.f32 %v1827, %v1902
    %v1906 = vxor.u32 %v1904, 2147483648
    %v1907 = vxor.u32 %v1905, 2147483648
    %v1908 = vmul.f32 %v1906, 1.442695
    %v1909 = vpow.pop %v1908
    %v1910 = vmul.f32 %v1907, 1.442695
    %v1911 = vpow.pop %v1910
    %v1912 = vadd.f32 %v1909, 1.0
    %v1913 = vadd.f32 %v1911, 1.0
    %v1914 = vrcp.pop %v1912
    %v1915 = vmul.f32 1.0, %v1914
    %v1916 = vrcp.pop %v1913
    %v1917 = vmul.f32 1.0, %v1916
    %v1918 = vmul.f32 %v1917, 2.0
    %v1919 = vsub.f32 %v1918, 1.0
    %v1920 = vmul.f32 %v1915, %v1819
    %v1921 = vmul.f32 %v1915, %v1919
    %1923 = vrot.lane.b32.xlu0 %v1921, 64
    %v1924 = vpop.permute.xlu0 %1923
    %v1926 = vadd.f32 %v1920, %v1924
    %v1927 = vtanh.pop %v1926
    %v1928 = vmul.f32 %v1917, %v1927
    %v1929 = vld [vmem:[%s699] sm:$0xff]
    %v1930 = vld [vmem:[%s699 + $0x8] sm:$0xff]
    %v1931 = vld [vmem:[%s702] sm:$0xff]
    %v1932 = vld [vmem:[%s702 + $0x8] sm:$0xff]
    %v1933 = vadd.f32 %v1929, %v1931
    %v1934 = vadd.f32 %v1930, %v1932
    %1936 = vrot.lane.b32.xlu0 %v1928, 64
    %v1937 = vpop.permute.xlu0 %1936
    %v1938 = vsel %vm482, %v1937, 0
    %1940 = vmatprep.subr.mxu0 %v1705
    %1941 = vmatpush1.msra.mxu0 %v1704
    %1942 = vmatprep.subr.mxu0 %v1707
    %1943 = vmatpush1.msra.mxu0 %v1706
    %1944 = vmatprep.subr.mxu0 %v1709
    %1945 = vmatpush1.msra.mxu0 %v1708
    %1946 = vmatprep.subr.mxu0 %v1711
    %1947 = vmatpush1.msra.mxu0 %v1710
    %1948 = vmatprep.subr.mxu0 %v1713
    %1949 = vmatpush1.msra.mxu0 %v1712
    %1950 = vmatprep.subr.mxu0 %v1715
    %1951 = vmatpush1.msra.mxu0 %v1714
    %1952 = vmatprep.subr.mxu0 %v1717
    %1953 = vmatpush1.msra.mxu0 %v1716
    %1954 = vmatprep.subr.mxu0 %v1719
    %1955 = vmatpush1.msra.mxu0 %v1718
    %1956 = vmatprep.subr.mxu0 0.0
    %1957 = vmatpush1.msra.mxu0 0.0
    %1958 = vmatprep.subr.mxu0 0.0
    %1959 = vmatpush1.msra.mxu0 0.0
    %1960 = vmatprep.subr.mxu0 0.0
    %1961 = vmatpush1.msra.mxu0 0.0
    %1962 = vmatprep.subr.mxu0 0.0
    %1963 = vmatpush1.msra.mxu0 0.0
    %1964 = vmatprep.subr.mxu0 0.0
    %1965 = vmatpush1.msra.mxu0 0.0
    %1966 = vmatprep.subr.mxu0 0.0
    %1967 = vmatpush1.msra.mxu0 0.0
    %1968 = vmatprep.subr.mxu0 0.0
    %1969 = vmatpush1.msra.mxu0 0.0
    %1970 = vmatprep.subr.mxu0 0.0
    %1971 = vmatpush1.msra.mxu0 0.0
    %1972 = vmatprep.subr.mxu0 0.0
    %1973 = vmatpush1.msra.mxu0 0.0
    %1974 = vmatprep.subr.mxu0 0.0
    %1975 = vmatpush1.msra.mxu0 0.0
    %1976 = vmatprep.subr.mxu0 0.0
    %1977 = vmatpush1.msra.mxu0 0.0
    %1978 = vmatprep.subr.mxu0 0.0
    %1979 = vmatpush1.msra.mxu0 0.0
    %1980 = vmatprep.subr.mxu0 0.0
    %1981 = vmatpush1.msra.mxu0 0.0
    %1982 = vmatprep.subr.mxu0 0.0
    %1983 = vmatpush1.msra.mxu0 0.0
    %1984 = vmatprep.subr.mxu0 0.0
    %1985 = vmatpush1.msra.mxu0 0.0
    %1986 = vmatprep.subr.mxu0 0.0
    %1987 = vmatpush1.msra.mxu0 0.0
    %1988 = vmatprep.subr.mxu0 0.0
    %1989 = vmatpush1.msra.mxu0 0.0
    %1990 = vmatprep.subr.mxu0 0.0
    %1991 = vmatpush1.msra.mxu0 0.0
    %1992 = vmatprep.subr.mxu0 0.0
    %1993 = vmatpush1.msra.mxu0 0.0
    %1994 = vmatprep.subr.mxu0 0.0
    %1995 = vmatpush1.msra.mxu0 0.0
    %1996 = vmatprep.subr.mxu0 0.0
    %1997 = vmatpush1.msra.mxu0 0.0
    %1998 = vmatprep.subr.mxu0 0.0
    %1999 = vmatpush1.msra.mxu0 0.0
    %2000 = vmatprep.subr.mxu0 0.0
    %2001 = vmatpush1.msra.mxu0 0.0
    %2002 = vmatprep.subr.mxu0 0.0
    %2003 = vmatpush1.msra.mxu0 0.0
    %2004 = vmatprep.mubr.f32.mxu0 0.0
    %2005 = vmatmul.mubr.f32.gmra.mrb[0].mxu0 %v1938
    %v2006 = vpop.f32.mrb[0].mxu0
    %v2007 = vadd.f32 0.0, %v2006
    %v2008 = vpop.f32.mrb[0].mxu0
    %v2009 = vadd.f32 0.0, %v2008
    %2010 = vdwg.mxu0
    %v2011 = vadd.f32 %v1933, %v2007
    %v2012 = vadd.f32 %v1934, %v2009
    %v2013 = vxor.u32 %v2011, 2147483648
    %v2014 = vxor.u32 %v2012, 2147483648
    %v2015 = vmul.f32 %v2013, 1.442695
    %v2016 = vpow.pop %v2015
    %v2017 = vmul.f32 %v2014, 1.442695
    %v2018 = vpow.pop %v2017
    %v2019 = vadd.f32 %v2016, 1.0
    %v2020 = vadd.f32 %v2018, 1.0
    %v2021 = vrcp.pop %v2019
    %v2022 = vmul.f32 1.0, %v2021
    %v2023 = vrcp.pop %v2020
    %v2024 = vmul.f32 1.0, %v2023
    %v2025 = vmul.f32 %v2024, 2.0
    %v2026 = vsub.f32 %v2025, 1.0
    %v2027 = vmul.f32 %v2022, %v1926
    %v2028 = vmul.f32 %v2022, %v2026
    %2030 = vrot.lane.b32.xlu0 %v2028, 64
    %v2031 = vpop.permute.xlu0 %2030
    %v2033 = vadd.f32 %v2027, %v2031
    %v2034 = vtanh.pop %v2033
    %v2035 = vmul.f32 %v2024, %v2034
    %v2036 = vld [vmem:[%s811] sm:$0xff]
    %v2037 = vld [vmem:[%s811 + $0x8] sm:$0xff]
    %v2038 = vld [vmem:[%s814] sm:$0xff]
    %v2039 = vld [vmem:[%s814 + $0x8] sm:$0xff]
    %v2040 = vadd.f32 %v2036, %v2038
    %v2041 = vadd.f32 %v2037, %v2039
    %2043 = vrot.lane.b32.xlu0 %v2035, 64
    %v2044 = vpop.permute.xlu0 %2043
    %v2045 = vsel %vm482, %v2044, 0
    %2047 = vmatprep.subr.mxu0 %v1705
    %2048 = vmatpush1.msra.mxu0 %v1704
    %2049 = vmatprep.subr.mxu0 %v1707
    %2050 = vmatpush1.msra.mxu0 %v1706
    %2051 = vmatprep.subr.mxu0 %v1709
    %2052 = vmatpush1.msra.mxu0 %v1708
    %2053 = vmatprep.subr.mxu0 %v1711
    %2054 = vmatpush1.msra.mxu0 %v1710
    %2055 = vmatprep.subr.mxu0 %v1713
    %2056 = vmatpush1.msra.mxu0 %v1712
    %2057 = vmatprep.subr.mxu0 %v1715
    %2058 = vmatpush1.msra.mxu0 %v1714
    %2059 = vmatprep.subr.mxu0 %v1717
    %2060 = vmatpush1.msra.mxu0 %v1716
    %2061 = vmatprep.subr.mxu0 %v1719
    %2062 = vmatpush1.msra.mxu0 %v1718
    %2063 = vmatprep.subr.mxu0 0.0
    %2064 = vmatpush1.msra.mxu0 0.0
    %2065 = vmatprep.subr.mxu0 0.0
    %2066 = vmatpush1.msra.mxu0 0.0
    %2067 = vmatprep.subr.mxu0 0.0
    %2068 = vmatpush1.msra.mxu0 0.0
    %2069 = vmatprep.subr.mxu0 0.0
    %2070 = vmatpush1.msra.mxu0 0.0
    %2071 = vmatprep.subr.mxu0 0.0
    %2072 = vmatpush1.msra.mxu0 0.0
    %2073 = vmatprep.subr.mxu0 0.0
    %2074 = vmatpush1.msra.mxu0 0.0
    %2075 = vmatprep.subr.mxu0 0.0
    %2076 = vmatpush1.msra.mxu0 0.0
    %2077 = vmatprep.subr.mxu0 0.0
    %2078 = vmatpush1.msra.mxu0 0.0
    %2079 = vmatprep.subr.mxu0 0.0
    %2080 = vmatpush1.msra.mxu0 0.0
    %2081 = vmatprep.subr.mxu0 0.0
    %2082 = vmatpush1.msra.mxu0 0.0
    %2083 = vmatprep.subr.mxu0 0.0
    %2084 = vmatpush1.msra.mxu0 0.0
    %2085 = vmatprep.subr.mxu0 0.0
    %2086 = vmatpush1.msra.mxu0 0.0
    %2087 = vmatprep.subr.mxu0 0.0
    %2088 = vmatpush1.msra.mxu0 0.0
    %2089 = vmatprep.subr.mxu0 0.0
    %2090 = vmatpush1.msra.mxu0 0.0
    %2091 = vmatprep.subr.mxu0 0.0
    %2092 = vmatpush1.msra.mxu0 0.0
    %2093 = vmatprep.subr.mxu0 0.0
    %2094 = vmatpush1.msra.mxu0 0.0
    %2095 = vmatprep.subr.mxu0 0.0
    %2096 = vmatpush1.msra.mxu0 0.0
    %2097 = vmatprep.subr.mxu0 0.0
    %2098 = vmatpush1.msra.mxu0 0.0
    %2099 = vmatprep.subr.mxu0 0.0
    %2100 = vmatpush1.msra.mxu0 0.0
    %2101 = vmatprep.subr.mxu0 0.0
    %2102 = vmatpush1.msra.mxu0 0.0
    %2103 = vmatprep.subr.mxu0 0.0
    %2104 = vmatpush1.msra.mxu0 0.0
    %2105 = vmatprep.subr.mxu0 0.0
    %2106 = vmatpush1.msra.mxu0 0.0
    %2107 = vmatprep.subr.mxu0 0.0
    %2108 = vmatpush1.msra.mxu0 0.0
    %2109 = vmatprep.subr.mxu0 0.0
    %2110 = vmatpush1.msra.mxu0 0.0
    %2111 = vmatprep.mubr.f32.mxu0 0.0
    %2112 = vmatmul.mubr.f32.gmra.mrb[0].mxu0 %v2045
    %v2113 = vpop.f32.mrb[0].mxu0
    %v2114 = vadd.f32 0.0, %v2113
    %v2115 = vpop.f32.mrb[0].mxu0
    %v2116 = vadd.f32 0.0, %v2115
    %2117 = vdwg.mxu0
    %v2118 = vadd.f32 %v2040, %v2114
    %v2119 = vadd.f32 %v2041, %v2116
    %v2120 = vxor.u32 %v2118, 2147483648
    %v2121 = vxor.u32 %v2119, 2147483648
    %v2122 = vmul.f32 %v2120, 1.442695
    %v2123 = vpow.pop %v2122
    %v2124 = vmul.f32 %v2121, 1.442695
    %v2125 = vpow.pop %v2124
    %v2126 = vadd.f32 %v2123, 1.0
    %v2127 = vadd.f32 %v2125, 1.0
    %v2128 = vrcp.pop %v2126
    %v2129 = vmul.f32 1.0, %v2128
    %v2130 = vrcp.pop %v2127
    %v2131 = vmul.f32 1.0, %v2130
    %v2132 = vmul.f32 %v2131, 2.0
    %v2133 = vsub.f32 %v2132, 1.0
    %v2134 = vmul.f32 %v2129, %v2033
    %v2135 = vmul.f32 %v2129, %v2133
    %2137 = vrot.lane.b32.xlu0 %v2135, 64
    %v2138 = vpop.permute.xlu0 %2137
    %v2140 = vadd.f32 %v2134, %v2138
    %v2141 = vtanh.pop %v2140
    %v2142 = vmul.f32 %v2131, %v2141
    %v2143 = vld [vmem:[%s923] sm:$0xff]
    %v2144 = vld [vmem:[%s923 + $0x8] sm:$0xff]
    %v2145 = vld [vmem:[%s926] sm:$0xff]
    %v2146 = vld [vmem:[%s926 + $0x8] sm:$0xff]
    %v2147 = vadd.f32 %v2143, %v2145
    %v2148 = vadd.f32 %v2144, %v2146
    %2150 = vrot.lane.b32.xlu0 %v2142, 64
    %v2151 = vpop.permute.xlu0 %2150
    %v2152 = vsel %vm482, %v2151, 0
    %2154 = vmatprep.subr.mxu0 %v1705
    %2155 = vmatpush1.msra.mxu0 %v1704
    %2156 = vmatprep.subr.mxu0 %v1707
    %2157 = vmatpush1.msra.mxu0 %v1706
    %2158 = vmatprep.subr.mxu0 %v1709
    %2159 = vmatpush1.msra.mxu0 %v1708
    %2160 = vmatprep.subr.mxu0 %v1711
    %2161 = vmatpush1.msra.mxu0 %v1710
    %2162 = vmatprep.subr.mxu0 %v1713
    %2163 = vmatpush1.msra.mxu0 %v1712
    %2164 = vmatprep.subr.mxu0 %v1715
    %2165 = vmatpush1.msra.mxu0 %v1714
    %2166 = vmatprep.subr.mxu0 %v1717
    %2167 = vmatpush1.msra.mxu0 %v1716
    %2168 = vmatprep.subr.mxu0 %v1719
    %2169 = vmatpush1.msra.mxu0 %v1718
    %2170 = vmatprep.subr.mxu0 0.0
    %2171 = vmatpush1.msra.mxu0 0.0
    %2172 = vmatprep.subr.mxu0 0.0
    %2173 = vmatpush1.msra.mxu0 0.0
    %2174 = vmatprep.subr.mxu0 0.0
    %2175 = vmatpush1.msra.mxu0 0.0
    %2176 = vmatprep.subr.mxu0 0.0
    %2177 = vmatpush1.msra.mxu0 0.0
    %2178 = vmatprep.subr.mxu0 0.0
    %2179 = vmatpush1.msra.mxu0 0.0
    %2180 = vmatprep.subr.mxu0 0.0
    %2181 = vmatpush1.msra.mxu0 0.0
    %2182 = vmatprep.subr.mxu0 0.0
    %2183 = vmatpush1.msra.mxu0 0.0
    %2184 = vmatprep.subr.mxu0 0.0
    %2185 = vmatpush1.msra.mxu0 0.0
    %2186 = vmatprep.subr.mxu0 0.0
    %2187 = vmatpush1.msra.mxu0 0.0
    %2188 = vmatprep.subr.mxu0 0.0
    %2189 = vmatpush1.msra.mxu0 0.0
    %2190 = vmatprep.subr.mxu0 0.0
    %2191 = vmatpush1.msra.mxu0 0.0
    %2192 = vmatprep.subr.mxu0 0.0
    %2193 = vmatpush1.msra.mxu0 0.0
    %2194 = vmatprep.subr.mxu0 0.0
    %2195 = vmatpush1.msra.mxu0 0.0
    %2196 = vmatprep.subr.mxu0 0.0
    %2197 = vmatpush1.msra.mxu0 0.0
    %2198 = vmatprep.subr.mxu0 0.0
    %2199 = vmatpush1.msra.mxu0 0.0
    %2200 = vmatprep.subr.mxu0 0.0
    %2201 = vmatpush1.msra.mxu0 0.0
    %2202 = vmatprep.subr.mxu0 0.0
    %2203 = vmatpush1.msra.mxu0 0.0
    %2204 = vmatprep.subr.mxu0 0.0
    %2205 = vmatpush1.msra.mxu0 0.0
    %2206 = vmatprep.subr.mxu0 0.0
    %2207 = vmatpush1.msra.mxu0 0.0
    %2208 = vmatprep.subr.mxu0 0.0
    %2209 = vmatpush1.msra.mxu0 0.0
    %2210 = vmatprep.subr.mxu0 0.0
    %2211 = vmatpush1.msra.mxu0 0.0
    %2212 = vmatprep.subr.mxu0 0.0
    %2213 = vmatpush1.msra.mxu0 0.0
    %2214 = vmatprep.subr.mxu0 0.0
    %2215 = vmatpush1.msra.mxu0 0.0
    %2216 = vmatprep.subr.mxu0 0.0
    %2217 = vmatpush1.msra.mxu0 0.0
    %2218 = vmatprep.mubr.f32.mxu0 0.0
    %2219 = vmatmul.mubr.f32.gmra.mrb[0].mxu0 %v2152
    %v2220 = vpop.f32.mrb[0].mxu0
    %v2221 = vadd.f32 0.0, %v2220
    %v2222 = vpop.f32.mrb[0].mxu0
    %v2223 = vadd.f32 0.0, %v2222
    %2224 = vdwg.mxu0
    %v2225 = vadd.f32 %v2147, %v2221
    %v2226 = vadd.f32 %v2148, %v2223
    %v2227 = vxor.u32 %v2225, 2147483648
    %v2228 = vxor.u32 %v2226, 2147483648
    %v2229 = vmul.f32 %v2227, 1.442695
    %v2230 = vpow.pop %v2229
    %v2231 = vmul.f32 %v2228, 1.442695
    %v2232 = vpow.pop %v2231
    %v2233 = vadd.f32 %v2230, 1.0
    %v2234 = vadd.f32 %v2232, 1.0
    %v2235 = vrcp.pop %v2233
    %v2236 = vmul.f32 1.0, %v2235
    %v2237 = vrcp.pop %v2234
    %v2238 = vmul.f32 1.0, %v2237
    %v2239 = vmul.f32 %v2238, 2.0
    %v2240 = vsub.f32 %v2239, 1.0
    %v2241 = vmul.f32 %v2236, %v2140
    %v2242 = vmul.f32 %v2236, %v2240
    %2244 = vrot.lane.b32.xlu0 %v2242, 64
    %v2245 = vpop.permute.xlu0 %2244
    %v2247 = vadd.f32 %v2241, %v2245
    %v2248 = vtanh.pop %v2247
    %v2249 = vmul.f32 %v2238, %v2248
    %v2250 = vld [vmem:[%s1035] sm:$0xff]
    %v2251 = vld [vmem:[%s1035 + $0x8] sm:$0xff]
    %v2252 = vld [vmem:[%s1038] sm:$0xff]
    %v2253 = vld [vmem:[%s1038 + $0x8] sm:$0xff]
    %v2254 = vadd.f32 %v2250, %v2252
    %v2255 = vadd.f32 %v2251, %v2253
    %2257 = vrot.lane.b32.xlu0 %v2249, 64
    %v2258 = vpop.permute.xlu0 %2257
    %v2259 = vsel %vm482, %v2258, 0
    %2261 = vmatprep.subr.mxu0 %v1705
    %2262 = vmatpush1.msra.mxu0 %v1704
    %2263 = vmatprep.subr.mxu0 %v1707
    %2264 = vmatpush1.msra.mxu0 %v1706
    %2265 = vmatprep.subr.mxu0 %v1709
    %2266 = vmatpush1.msra.mxu0 %v1708
    %2267 = vmatprep.subr.mxu0 %v1711
    %2268 = vmatpush1.msra.mxu0 %v1710
    %2269 = vmatprep.subr.mxu0 %v1713
    %2270 = vmatpush1.msra.mxu0 %v1712
    %2271 = vmatprep.subr.mxu0 %v1715
    %2272 = vmatpush1.msra.mxu0 %v1714
    %2273 = vmatprep.subr.mxu0 %v1717
    %2274 = vmatpush1.msra.mxu0 %v1716
    %2275 = vmatprep.subr.mxu0 %v1719
    %2276 = vmatpush1.msra.mxu0 %v1718
    %2277 = vmatprep.subr.mxu0 0.0
    %2278 = vmatpush1.msra.mxu0 0.0
    %2279 = vmatprep.subr.mxu0 0.0
    %2280 = vmatpush1.msra.mxu0 0.0
    %2281 = vmatprep.subr.mxu0 0.0
    %2282 = vmatpush1.msra.mxu0 0.0
    %2283 = vmatprep.subr.mxu0 0.0
    %2284 = vmatpush1.msra.mxu0 0.0
    %2285 = vmatprep.subr.mxu0 0.0
    %2286 = vmatpush1.msra.mxu0 0.0
    %2287 = vmatprep.subr.mxu0 0.0
    %2288 = vmatpush1.msra.mxu0 0.0
    %2289 = vmatprep.subr.mxu0 0.0
    %2290 = vmatpush1.msra.mxu0 0.0
    %2291 = vmatprep.subr.mxu0 0.0
    %2292 = vmatpush1.msra.mxu0 0.0
    %2293 = vmatprep.subr.mxu0 0.0
    %2294 = vmatpush1.msra.mxu0 0.0
    %2295 = vmatprep.subr.mxu0 0.0
    %2296 = vmatpush1.msra.mxu0 0.0
    %2297 = vmatprep.subr.mxu0 0.0
    %2298 = vmatpush1.msra.mxu0 0.0
    %2299 = vmatprep.subr.mxu0 0.0
    %2300 = vmatpush1.msra.mxu0 0.0
    %2301 = vmatprep.subr.mxu0 0.0
    %2302 = vmatpush1.msra.mxu0 0.0
    %2303 = vmatprep.subr.mxu0 0.0
    %2304 = vmatpush1.msra.mxu0 0.0
    %2305 = vmatprep.subr.mxu0 0.0
    %2306 = vmatpush1.msra.mxu0 0.0
    %2307 = vmatprep.subr.mxu0 0.0
    %2308 = vmatpush1.msra.mxu0 0.0
    %2309 = vmatprep.subr.mxu0 0.0
    %2310 = vmatpush1.msra.mxu0 0.0
    %2311 = vmatprep.subr.mxu0 0.0
    %2312 = vmatpush1.msra.mxu0 0.0
    %2313 = vmatprep.subr.mxu0 0.0
    %2314 = vmatpush1.msra.mxu0 0.0
    %2315 = vmatprep.subr.mxu0 0.0
    %2316 = vmatpush1.msra.mxu0 0.0
    %2317 = vmatprep.subr.mxu0 0.0
    %2318 = vmatpush1.msra.mxu0 0.0
    %2319 = vmatprep.subr.mxu0 0.0
    %2320 = vmatpush1.msra.mxu0 0.0
    %2321 = vmatprep.subr.mxu0 0.0
    %2322 = vmatpush1.msra.mxu0 0.0
    %2323 = vmatprep.subr.mxu0 0.0
    %2324 = vmatpush1.msra.mxu0 0.0
    %2325 = vmatprep.mubr.f32.mxu0 0.0
    %2326 = vmatmul.mubr.f32.gmra.mrb[0].mxu0 %v2259
    %v2327 = vpop.f32.mrb[0].mxu0
    %v2328 = vadd.f32 0.0, %v2327
    %v2329 = vpop.f32.mrb[0].mxu0
    %v2330 = vadd.f32 0.0, %v2329
    %2331 = vdwg.mxu0
    %v2332 = vadd.f32 %v2254, %v2328
    %v2333 = vadd.f32 %v2255, %v2330
    %v2334 = vxor.u32 %v2332, 2147483648
    %v2335 = vxor.u32 %v2333, 2147483648
    %v2336 = vmul.f32 %v2334, 1.442695
    %v2337 = vpow.pop %v2336
    %v2338 = vmul.f32 %v2335, 1.442695
    %v2339 = vpow.pop %v2338
    %v2340 = vadd.f32 %v2337, 1.0
    %v2341 = vadd.f32 %v2339, 1.0
    %v2342 = vrcp.pop %v2340
    %v2343 = vmul.f32 1.0, %v2342
    %v2344 = vrcp.pop %v2341
    %v2345 = vmul.f32 1.0, %v2344
    %v2346 = vmul.f32 %v2345, 2.0
    %v2347 = vsub.f32 %v2346, 1.0
    %v2348 = vmul.f32 %v2343, %v2247
    %v2349 = vmul.f32 %v2343, %v2347
    %2351 = vrot.lane.b32.xlu0 %v2349, 64
    %v2352 = vpop.permute.xlu0 %2351
    %v2354 = vadd.f32 %v2348, %v2352
    %v2355 = vtanh.pop %v2354
    %v2356 = vmul.f32 %v2345, %v2355
    %v2357 = vld [vmem:[%s1147] sm:$0xff]
    %v2358 = vld [vmem:[%s1147 + $0x8] sm:$0xff]
    %v2359 = vld [vmem:[%s1150] sm:$0xff]
    %v2360 = vld [vmem:[%s1150 + $0x8] sm:$0xff]
    %v2361 = vadd.f32 %v2357, %v2359
    %v2362 = vadd.f32 %v2358, %v2360
    %2364 = vrot.lane.b32.xlu0 %v2356, 64
    %v2365 = vpop.permute.xlu0 %2364
    %v2366 = vsel %vm482, %v2365, 0
    %2368 = vmatprep.subr.mxu0 %v1705
    %2369 = vmatpush1.msra.mxu0 %v1704
    %2370 = vmatprep.subr.mxu0 %v1707
    %2371 = vmatpush1.msra.mxu0 %v1706
    %2372 = vmatprep.subr.mxu0 %v1709
    %2373 = vmatpush1.msra.mxu0 %v1708
    %2374 = vmatprep.subr.mxu0 %v1711
    %2375 = vmatpush1.msra.mxu0 %v1710
    %2376 = vmatprep.subr.mxu0 %v1713
    %2377 = vmatpush1.msra.mxu0 %v1712
    %2378 = vmatprep.subr.mxu0 %v1715
    %2379 = vmatpush1.msra.mxu0 %v1714
    %2380 = vmatprep.subr.mxu0 %v1717
    %2381 = vmatpush1.msra.mxu0 %v1716
    %2382 = vmatprep.subr.mxu0 %v1719
    %2383 = vmatpush1.msra.mxu0 %v1718
    %2384 = vmatprep.subr.mxu0 0.0
    %2385 = vmatpush1.msra.mxu0 0.0
    %2386 = vmatprep.subr.mxu0 0.0
    %2387 = vmatpush1.msra.mxu0 0.0
    %2388 = vmatprep.subr.mxu0 0.0
    %2389 = vmatpush1.msra.mxu0 0.0
    %2390 = vmatprep.subr.mxu0 0.0
    %2391 = vmatpush1.msra.mxu0 0.0
    %2392 = vmatprep.subr.mxu0 0.0
    %2393 = vmatpush1.msra.mxu0 0.0
    %2394 = vmatprep.subr.mxu0 0.0
    %2395 = vmatpush1.msra.mxu0 0.0
    %2396 = vmatprep.subr.mxu0 0.0
    %2397 = vmatpush1.msra.mxu0 0.0
    %2398 = vmatprep.subr.mxu0 0.0
    %2399 = vmatpush1.msra.mxu0 0.0
    %2400 = vmatprep.subr.mxu0 0.0
    %2401 = vmatpush1.msra.mxu0 0.0
    %2402 = vmatprep.subr.mxu0 0.0
    %2403 = vmatpush1.msra.mxu0 0.0
    %2404 = vmatprep.subr.mxu0 0.0
    %2405 = vmatpush1.msra.mxu0 0.0
    %2406 = vmatprep.subr.mxu0 0.0
    %2407 = vmatpush1.msra.mxu0 0.0
    %2408 = vmatprep.subr.mxu0 0.0
    %2409 = vmatpush1.msra.mxu0 0.0
    %2410 = vmatprep.subr.mxu0 0.0
    %2411 = vmatpush1.msra.mxu0 0.0
    %2412 = vmatprep.subr.mxu0 0.0
    %2413 = vmatpush1.msra.mxu0 0.0
    %2414 = vmatprep.subr.mxu0 0.0
    %2415 = vmatpush1.msra.mxu0 0.0
    %2416 = vmatprep.subr.mxu0 0.0
    %2417 = vmatpush1.msra.mxu0 0.0
    %2418 = vmatprep.subr.mxu0 0.0
    %2419 = vmatpush1.msra.mxu0 0.0
    %2420 = vmatprep.subr.mxu0 0.0
    %2421 = vmatpush1.msra.mxu0 0.0
    %2422 = vmatprep.subr.mxu0 0.0
    %2423 = vmatpush1.msra.mxu0 0.0
    %2424 = vmatprep.subr.mxu0 0.0
    %2425 = vmatpush1.msra.mxu0 0.0
    %2426 = vmatprep.subr.mxu0 0.0
    %2427 = vmatpush1.msra.mxu0 0.0
    %2428 = vmatprep.subr.mxu0 0.0
    %2429 = vmatpush1.msra.mxu0 0.0
    %2430 = vmatprep.subr.mxu0 0.0
    %2431 = vmatpush1.msra.mxu0 0.0
    %2432 = vmatprep.mubr.f32.mxu0 0.0
    %2433 = vmatmul.mubr.f32.gmra.mrb[0].mxu0 %v2366
    %v2434 = vpop.f32.mrb[0].mxu0
    %v2435 = vadd.f32 0.0, %v2434
    %v2436 = vpop.f32.mrb[0].mxu0
    %v2437 = vadd.f32 0.0, %v2436
    %2438 = vdwg.mxu0
    %v2439 = vadd.f32 %v2361, %v2435
    %v2440 = vadd.f32 %v2362, %v2437
    %v2441 = vxor.u32 %v2439, 2147483648
    %v2442 = vxor.u32 %v2440, 2147483648
    %v2443 = vmul.f32 %v2441, 1.442695
    %v2444 = vpow.pop %v2443
    %v2445 = vmul.f32 %v2442, 1.442695
    %v2446 = vpow.pop %v2445
    %v2447 = vadd.f32 %v2444, 1.0
    %v2448 = vadd.f32 %v2446, 1.0
    %v2449 = vrcp.pop %v2447
    %v2450 = vmul.f32 1.0, %v2449
    %v2451 = vrcp.pop %v2448
    %v2452 = vmul.f32 1.0, %v2451
    %v2453 = vmul.f32 %v2452, 2.0
    %v2454 = vsub.f32 %v2453, 1.0
    %v2455 = vmul.f32 %v2450, %v2354
    %v2456 = vmul.f32 %v2450, %v2454
    %2458 = vrot.lane.b32.xlu0 %v2456, 64
    %v2459 = vpop.permute.xlu0 %2458
    %v2461 = vadd.f32 %v2455, %v2459
    %v2462 = vtanh.pop %v2461
    %v2463 = vmul.f32 %v2452, %v2462
    %v2464 = vld [vmem:[%s1259] sm:$0xff]
    %v2465 = vld [vmem:[%s1259 + $0x8] sm:$0xff]
    %v2466 = vld [vmem:[#allocation3] sm:$0xff]
    %v2467 = vld [vmem:[#allocation3 + $0x8] sm:$0xff]
    %v2468 = vadd.f32 %v2464, %v2466
    %v2469 = vadd.f32 %v2465, %v2467
    %2471 = vrot.lane.b32.xlu0 %v2463, 64
    %v2472 = vpop.permute.xlu0 %2471
    %v2473 = vsel %vm482, %v2472, 0
    %2475 = vmatprep.subr.mxu0 %v1705
    %2476 = vmatpush1.msra.mxu0 %v1704
    %2477 = vmatprep.subr.mxu0 %v1707
    %2478 = vmatpush1.msra.mxu0 %v1706
    %2479 = vmatprep.subr.mxu0 %v1709
    %2480 = vmatpush1.msra.mxu0 %v1708
    %2481 = vmatprep.subr.mxu0 %v1711
    %2482 = vmatpush1.msra.mxu0 %v1710
    %2483 = vmatprep.subr.mxu0 %v1713
    %2484 = vmatpush1.msra.mxu0 %v1712
    %2485 = vmatprep.subr.mxu0 %v1715
    %2486 = vmatpush1.msra.mxu0 %v1714
    %2487 = vmatprep.subr.mxu0 %v1717
    %2488 = vmatpush1.msra.mxu0 %v1716
    %2489 = vmatprep.subr.mxu0 %v1719
    %2490 = vmatpush1.msra.mxu0 %v1718
    %2491 = vmatprep.subr.mxu0 0.0
    %2492 = vmatpush1.msra.mxu0 0.0
    %2493 = vmatprep.subr.mxu0 0.0
    %2494 = vmatpush1.msra.mxu0 0.0
    %2495 = vmatprep.subr.mxu0 0.0
    %2496 = vmatpush1.msra.mxu0 0.0
    %2497 = vmatprep.subr.mxu0 0.0
    %2498 = vmatpush1.msra.mxu0 0.0
    %2499 = vmatprep.subr.mxu0 0.0
    %2500 = vmatpush1.msra.mxu0 0.0
    %2501 = vmatprep.subr.mxu0 0.0
    %2502 = vmatpush1.msra.mxu0 0.0
    %2503 = vmatprep.subr.mxu0 0.0
    %2504 = vmatpush1.msra.mxu0 0.0
    %2505 = vmatprep.subr.mxu0 0.0
    %2506 = vmatpush1.msra.mxu0 0.0
    %2507 = vmatprep.subr.mxu0 0.0
    %2508 = vmatpush1.msra.mxu0 0.0
    %2509 = vmatprep.subr.mxu0 0.0
    %2510 = vmatpush1.msra.mxu0 0.0
    %2511 = vmatprep.subr.mxu0 0.0
    %2512 = vmatpush1.msra.mxu0 0.0
    %2513 = vmatprep.subr.mxu0 0.0
    %2514 = vmatpush1.msra.mxu0 0.0
    %2515 = vmatprep.subr.mxu0 0.0
    %2516 = vmatpush1.msra.mxu0 0.0
    %2517 = vmatprep.subr.mxu0 0.0
    %2518 = vmatpush1.msra.mxu0 0.0
    %2519 = vmatprep.subr.mxu0 0.0
    %2520 = vmatpush1.msra.mxu0 0.0
    %2521 = vmatprep.subr.mxu0 0.0
    %2522 = vmatpush1.msra.mxu0 0.0
    %2523 = vmatprep.subr.mxu0 0.0
    %2524 = vmatpush1.msra.mxu0 0.0
    %2525 = vmatprep.subr.mxu0 0.0
    %2526 = vmatpush1.msra.mxu0 0.0
    %2527 = vmatprep.subr.mxu0 0.0
    %2528 = vmatpush1.msra.mxu0 0.0
    %2529 = vmatprep.subr.mxu0 0.0
    %2530 = vmatpush1.msra.mxu0 0.0
    %2531 = vmatprep.subr.mxu0 0.0
    %2532 = vmatpush1.msra.mxu0 0.0
    %2533 = vmatprep.subr.mxu0 0.0
    %2534 = vmatpush1.msra.mxu0 0.0
    %2535 = vmatprep.subr.mxu0 0.0
    %2536 = vmatpush1.msra.mxu0 0.0
    %2537 = vmatprep.subr.mxu0 0.0
    %2538 = vmatpush1.msra.mxu0 0.0
    %2539 = vmatprep.mubr.f32.mxu0 0.0
    %2540 = vmatmul.mubr.f32.gmra.mrb[0].mxu0 %v2473
    %v2541 = vpop.f32.mrb[0].mxu0
    %v2542 = vadd.f32 0.0, %v2541
    %v2543 = vpop.f32.mrb[0].mxu0
    %v2544 = vadd.f32 0.0, %v2543
    %2545 = vdwg.mxu0
    %v2546 = vadd.f32 %v2468, %v2542
    %v2547 = vadd.f32 %v2469, %v2544
    %v2548 = vxor.u32 %v2546, 2147483648
    %v2549 = vxor.u32 %v2547, 2147483648
    %v2550 = vmul.f32 %v2548, 1.442695
    %v2551 = vpow.pop %v2550
    %v2552 = vmul.f32 %v2549, 1.442695
    %v2553 = vpow.pop %v2552
    %v2554 = vadd.f32 %v2551, 1.0
    %v2555 = vadd.f32 %v2553, 1.0
    %v2556 = vrcp.pop %v2554
    %v2557 = vmul.f32 1.0, %v2556
    %v2558 = vrcp.pop %v2555
    %v2559 = vmul.f32 1.0, %v2558
    %v2560 = vmul.f32 %v2559, 2.0
    %v2561 = vsub.f32 %v2560, 1.0
    %v2562 = vmul.f32 %v2557, %v2461
    %v2563 = vmul.f32 %v2557, %v2561
    %2565 = vrot.lane.b32.xlu0 %v2563, 64
    %v2566 = vpop.permute.xlu0 %2565
    %v2568 = vadd.f32 %v2562, %v2566
    %v2569 = vtanh.pop %v2568
    %v2570 = vmul.f32 %v2559, %v2569
    %v2571 = vld [vmem:[#allocation17] sm:$0xff]
    %v2572 = vld [vmem:[#allocation17 + $0x8] sm:$0xff]
    %v2573 = vld [vmem:[#allocation17 + $0x10] sm:$0xff]
    %v2574 = vld [vmem:[#allocation17 + $0x18] sm:$0xff]
    %v2575 = vld [vmem:[#allocation17 + $0x20] sm:$0xff]
    %v2576 = vld [vmem:[#allocation17 + $0x28] sm:$0xff]
    %v2577 = vld [vmem:[#allocation17 + $0x30] sm:$0xff]
    %v2578 = vld [vmem:[#allocation17 + $0x38] sm:$0xff]
    %v2579 = vld [vmem:[%s10] sm:$0x1]
    %v2581 = vlaneseq
    %v2582 = vshrl.u32 %v2581, 7
    %v2583 = vsub.s32 0, %v2582
    %v2584 = vrot.slane %v2579, %v2583
    %2587 = vrot.lane.b32.xlu0 %v2570, 64
    %v2588 = vpop.permute.xlu0 %2587
    %v2589 = vsel %vm482, %v2588, 0
    %2591 = vmatprep.subr.mxu0 0.0
    %2592 = vmatpush1.msra.mxu0 %v2571
    %2593 = vmatprep.subr.mxu0 0.0
    %2594 = vmatpush1.msra.mxu0 %v2572
    %2595 = vmatprep.subr.mxu0 0.0
    %2596 = vmatpush1.msra.mxu0 %v2573
    %2597 = vmatprep.subr.mxu0 0.0
    %2598 = vmatpush1.msra.mxu0 %v2574
    %2599 = vmatprep.subr.mxu0 0.0
    %2600 = vmatpush1.msra.mxu0 %v2575
    %2601 = vmatprep.subr.mxu0 0.0
    %2602 = vmatpush1.msra.mxu0 %v2576
    %2603 = vmatprep.subr.mxu0 0.0
    %2604 = vmatpush1.msra.mxu0 %v2577
    %2605 = vmatprep.subr.mxu0 0.0
    %2606 = vmatpush1.msra.mxu0 %v2578
    %2607 = vmatprep.subr.mxu0 0.0
    %2608 = vmatpush1.msra.mxu0 0.0
    %2609 = vmatprep.subr.mxu0 0.0
    %2610 = vmatpush1.msra.mxu0 0.0
    %2611 = vmatprep.subr.mxu0 0.0
    %2612 = vmatpush1.msra.mxu0 0.0
    %2613 = vmatprep.subr.mxu0 0.0
    %2614 = vmatpush1.msra.mxu0 0.0
    %2615 = vmatprep.subr.mxu0 0.0
    %2616 = vmatpush1.msra.mxu0 0.0
    %2617 = vmatprep.subr.mxu0 0.0
    %2618 = vmatpush1.msra.mxu0 0.0
    %2619 = vmatprep.subr.mxu0 0.0
    %2620 = vmatpush1.msra.mxu0 0.0
    %2621 = vmatprep.subr.mxu0 0.0
    %2622 = vmatpush1.msra.mxu0 0.0
    %2623 = vmatprep.subr.mxu0 0.0
    %2624 = vmatpush1.msra.mxu0 0.0
    %2625 = vmatprep.subr.mxu0 0.0
    %2626 = vmatpush1.msra.mxu0 0.0
    %2627 = vmatprep.subr.mxu0 0.0
    %2628 = vmatpush1.msra.mxu0 0.0
    %2629 = vmatprep.subr.mxu0 0.0
    %2630 = vmatpush1.msra.mxu0 0.0
    %2631 = vmatprep.subr.mxu0 0.0
    %2632 = vmatpush1.msra.mxu0 0.0
    %2633 = vmatprep.subr.mxu0 0.0
    %2634 = vmatpush1.msra.mxu0 0.0
    %2635 = vmatprep.subr.mxu0 0.0
    %2636 = vmatpush1.msra.mxu0 0.0
    %2637 = vmatprep.subr.mxu0 0.0
    %2638 = vmatpush1.msra.mxu0 0.0
    %2639 = vmatprep.subr.mxu0 0.0
    %2640 = vmatpush1.msra.mxu0 0.0
    %2641 = vmatprep.subr.mxu0 0.0
    %2642 = vmatpush1.msra.mxu0 0.0
    %2643 = vmatprep.subr.mxu0 0.0
    %2644 = vmatpush1.msra.mxu0 0.0
    %2645 = vmatprep.subr.mxu0 0.0
    %2646 = vmatpush1.msra.mxu0 0.0
    %2647 = vmatprep.subr.mxu0 0.0
    %2648 = vmatpush1.msra.mxu0 0.0
    %2649 = vmatprep.subr.mxu0 0.0
    %2650 = vmatpush1.msra.mxu0 0.0
    %2651 = vmatprep.subr.mxu0 0.0
    %2652 = vmatpush1.msra.mxu0 0.0
    %2653 = vmatprep.subr.mxu0 0.0
    %2654 = vmatpush1.msra.mxu0 0.0
    %2655 = vmatprep.mubr.f32.mxu0 0.0
    %2656 = vmatmul.mubr.f32.gmra.mrb[0].mxu0 %v2589
    %v2657 = vpop.f32.mrb[0].mxu0
    %v2658 = vadd.f32 %v2584, %v2657
    %v2659 = vpop.f32.mrb[0].mxu0
    %2660 = vdwg.mxu0
    %2661 = vmax.xlane.f32.xlu0 %v2658
    %v2662 = vpop.xlane.xlu0 %2661
    %v2663 = vsub.f32 %v2658, %v2662
    %v2664 = vmul.f32 %v2663, 1.442695
    %v2665 = vpow.pop %v2664
    %2666 = vadd.xlane.f32.xlu0 %v2665
    %v2667 = vpop.xlane.xlu0 %2666
    %v2668 = vrcp.pop %v2667
    %v2669 = vmul.f32 %v2665, %v2668
    %2670 = vst [vmem:[#allocation19] sm:$0xff] %v2669
    // Predicated region
    $region78: #{tpu_custom_call.1} parent=1 // pred_check
      _
    $region79: #{tpu_custom_call.1} parent=1 // pred_check_branch
      %2672 = sbr.rel (0) target = $region81
    $region80: #{tpu_custom_call.1} parent=1 // pred_region
      %s2674 = ssub.s32 128, 128
      %2675 = vsyncadd [#allocation7], %s2674
      %s2677 = sshll.u32 [#allocation19], 4
      %s2678 = int_to_ptr.vmem [resolvable:$true] %s2677
      %2680 = dma.vmem_to_hbm [thread:$0]  %s2678, 128, %s11, [#allocation7]
    $region81: #{tpu_custom_call.1} parent=1 // pred_fallthru
      _
    // Predicated region
    $region82: #{tpu_custom_call.1} parent=1 // pred_check
      _
    $region83: #{tpu_custom_call.1} parent=1 // pred_check_branch
      %2682 = sbr.rel (0) target = $region85
    $region84: #{tpu_custom_call.1} parent=1 // pred_region
      %2683 = dma.done [#allocation7], 128
    $region85: #{tpu_custom_call.1} parent=1 // pred_fallthru
      _
    %2684 = vsyncpa [#allocation6], 1
    %2685 = vsyncpa [#allocation9], 1
    %2686 = vsyncpa [#allocation12], 1
    %2687 = vsyncpa [#allocation15], 1
    %2688 = vsyncpa [#allocation18], 1
    %2689 = vsyncpa [#allocation7], 1

</llo_original>
